<compile_context>
chip_gen: v7x
topology: tpu7x:2x2x1
jax: 0.10.0
libtpu: 0.0.40
codegen_flags: <defaults>
</compile_context>

<pallas_src>
import functools

import jax
import jax.numpy as jnp
from jax.experimental import pallas as pl
from jax.experimental.pallas import tpu as pltpu


def _round_up(x, m):
    return (x + m - 1) // m * m


# --------------------------------------------------------------------------
# Kernel A: M-tiled  (im2col-patches @ W) + bias + ReLU  +  BN partial stats.
# Stores bf16 activations; stats stay f32 (from the MXU accumulator).
# --------------------------------------------------------------------------
def conv_relu_stats_kernel(x_ref, w_ref, b_ref, y_ref, s1_ref, s2_ref):
    acc = jnp.dot(x_ref[...], w_ref[...], preferred_element_type=jnp.float32)
    y = jnp.maximum(acc + b_ref[...], 0.0)                  # relu(conv(x) + b), f32
    y_ref[...] = y.astype(y_ref.dtype)                      # bf16 writeback
    # Unmasked per-tile BN partial sums; padded rows are corrected in JAX.
    s1_ref[...] = jnp.sum(y, axis=0, keepdims=True)[None]   # (1, 1, c_pad)
    s2_ref[...] = jnp.sum(y * y, axis=0, keepdims=True)[None]


# --------------------------------------------------------------------------
# Kernel C: fused FC heads.  Grid = (head, K-tile); head axis is "parallel"
# (one head per TensorCore on v7x).  f32 VMEM accumulator over K; the last K
# step adds bias and applies exp() only for the second head.
# --------------------------------------------------------------------------
def heads_kernel(x_ref, w_ref, b_ref, o_ref, acc_ref):
    h = pl.program_id(0)
    k = pl.program_id(1)

    @pl.when(k == 0)
    def _():
        acc_ref[...] = jnp.zeros_like(acc_ref)

    acc_ref[...] += jnp.dot(x_ref[...], w_ref[...],
                            preferred_element_type=jnp.float32)

    last = pl.num_programs(1) - 1

    @pl.when((k == last) & (h == 0))
    def _():
        o_ref[...] = acc_ref[...] + b_ref[...]               # fc1 head: identity

    @pl.when((k == last) & (h == 1))
    def _():
        o_ref[...] = jnp.exp(acc_ref[...] + b_ref[...])      # fc2 head: exp


# --------------------------------------------------------------------------
# Wrappers (padding glue + pallas_call)
# --------------------------------------------------------------------------
def conv_relu_stats(patches, w_flat, b, tm_max=1024):
    """patches: (M, K) [K ordered (kh,kw,cin)]; w_flat: (K, Cout); b: (Cout,).

    Returns (y (M, Cout) bf16 pre-BN post-ReLU, mean (Cout,), var (Cout,)).
    """
    m, k = patches.shape
    c = w_flat.shape[1]
    k_pad = _round_up(k, 128)
    c_pad = _round_up(c, 128)

    tm = min(tm_max, _round_up(m, 16))        # bf16 sublane packing -> mult of 16
    # Force >=2 M tiles when the layer is big enough, so the "parallel" axis
    # can shard across both v7x TensorCores (harmless on v5e/v6e).
    if _round_up(m, tm) == tm and m > 512:
        tm = _round_up(-(-m // 2), 16)
    m_pad = _round_up(m, tm)
    n_tiles = m_pad // tm

    # TODO(synk): avoid this padded HBM materialization for real (157x157) inputs.
    xp = jnp.zeros((m_pad, k_pad), jnp.bfloat16).at[:m, :k].set(
        patches.astype(jnp.bfloat16))
    wp = jnp.zeros((k_pad, c_pad), jnp.bfloat16).at[:k, :c].set(
        w_flat.astype(jnp.bfloat16))
    bp = jnp.zeros((1, c_pad), jnp.float32).at[:, :c].set(b)

    y, s1, s2 = pl.pallas_call(
        conv_relu_stats_kernel,
        out_shape=(
            jax.ShapeDtypeStruct((m_pad, c_pad), jnp.bfloat16),
            jax.ShapeDtypeStruct((n_tiles, 1, c_pad), jnp.float32),
            jax.ShapeDtypeStruct((n_tiles, 1, c_pad), jnp.float32),
        ),
        grid=(n_tiles,),
        in_specs=[
            pl.BlockSpec((tm, k_pad), lambda i: (i, 0)),
            pl.BlockSpec((k_pad, c_pad), lambda i: (0, 0)),   # weights resident
            pl.BlockSpec((1, c_pad), lambda i: (0, 0)),       # bias resident
        ],
        out_specs=(
            pl.BlockSpec((tm, c_pad), lambda i: (i, 0)),
            pl.BlockSpec((1, 1, c_pad), lambda i: (i, 0, 0)),
            pl.BlockSpec((1, 1, c_pad), lambda i: (i, 0, 0)),
        ),
        compiler_params=pltpu.CompilerParams(dimension_semantics=("parallel",)),
        cost_estimate=pl.CostEstimate(
            flops=int(2 * m_pad * k_pad * c_pad),
            transcendentals=0,
            bytes_accessed=int(xp.size * 2 + wp.size * 2 + m_pad * c_pad * 2),
        ),
    )(xp, wp, bp)

    # Padded rows produced exactly relu(b) per channel (zero patches); correct
    # the totals analytically instead of masking inside the kernel.
    s1 = jnp.sum(s1, axis=0)                                  # (1, c_pad)
    s2 = jnp.sum(s2, axis=0)
    pad_rows = float(m_pad - m)
    relu_b = jnp.maximum(bp, 0.0)
    s1 = s1 - pad_rows * relu_b
    s2 = s2 - pad_rows * relu_b * relu_b
    mean = s1[0, :c] / m
    # NOTE: two-pass E[y^2]-E[y]^2 in f32; clamped at 0 (adequate here).
    var = jnp.maximum(s2[0, :c] / m - mean * mean, 0.0)       # biased variance
    return y[:m, :c], mean, var


def fused_heads(x, w1, b1, w2, b2, tk_max=4096):
    """x: (N, fc_dim); w1/w2: (fc_dim, z); b1/b2: (z,) -> (loc, exp(scale))."""
    n, k = x.shape
    z = w1.shape[1]
    n_pad = _round_up(n, 16)
    z_pad = _round_up(z, 128)
    tk = min(tk_max, _round_up(k, 128))
    k_pad = _round_up(k, tk)
    n_k = k_pad // tk

    xp = jnp.zeros((n_pad, k_pad), jnp.bfloat16).at[:n, :k].set(
        x.astype(jnp.bfloat16))
    wc = jnp.zeros((k_pad, 2 * z_pad), jnp.bfloat16)
    wc = wc.at[:k, :z].set(w1.astype(jnp.bfloat16))
    wc = wc.at[:k, z_pad:z_pad + z].set(w2.astype(jnp.bfloat16))
    bc = jnp.zeros((1, 2 * z_pad), jnp.float32)
    bc = bc.at[:, :z].set(b1).at[:, z_pad:z_pad + z].set(b2)

    out = pl.pallas_call(
        heads_kernel,
        out_shape=jax.ShapeDtypeStruct((n_pad, 2 * z_pad), jnp.float32),
        grid=(2, n_k),
        in_specs=[
            pl.BlockSpec((n_pad, tk), lambda h, kk: (0, kk)),
            pl.BlockSpec((tk, z_pad), lambda h, kk: (kk, h)),
            pl.BlockSpec((1, z_pad), lambda h, kk: (0, h)),
        ],
        out_specs=pl.BlockSpec((n_pad, z_pad), lambda h, kk: (0, h)),
        scratch_shapes=[pltpu.VMEM((n_pad, z_pad), jnp.float32)],
        compiler_params=pltpu.CompilerParams(
            dimension_semantics=("parallel", "arbitrary")),
        cost_estimate=pl.CostEstimate(
            flops=int(2 * n_pad * k_pad * 2 * z_pad),
            transcendentals=int(n_pad * z_pad),
            bytes_accessed=int(2 * xp.size * 2 + wc.size * 2
                               + n_pad * 2 * z_pad * 4),
        ),
    )(xp, wc, bc)
    return out[:n, :z], out[:n, z_pad:z_pad + z]


# --------------------------------------------------------------------------
# Glue: im2col, parameter init, full forward (with BN folding), JAX reference
# --------------------------------------------------------------------------
def im2col(x, kh, kw, stride):
    """x: (N, H, W, C) -> patches (N*Ho*Wo, kh*kw*C), K ordered (kh, kw, cin)."""
    n, h, w, c = x.shape
    ho = (h - kh) // stride + 1
    wo = (w - kw) // stride + 1
    cols = []
    for i in range(kh):
        for j in range(kw):
            cols.append(x[:, i:i + stride * ho:stride, j:j + stride * wo:stride, :])
    patches = jnp.concatenate(cols, axis=-1)          # (n, ho, wo, kh*kw*c)
    return patches.reshape(n * ho * wo, kh * kw * c), ho, wo


def conv_out(h, k, s):
    return (h - k) // s + 1


LAYER_CFG = [(5, 2), (5, 2), (3, 2)]                  # (kernel, stride)
BN_EPS = 1e-5


def init_params(key, z_dim, fc_dim, filters=(32, 64, 128)):
    ks = jax.random.split(key, 16)

    def rnd(k, shape, scale=0.05):
        return scale * jax.random.normal(k, shape, jnp.float32)

    p = {}
    cins = (3,) + tuple(filters[:-1])
    ksizes = (5, 5, 3)
    i = 0
    for li, (cin, cout, ksz) in enumerate(zip(cins, filters, ksizes), start=1):
        w_pt = rnd(ks[i], (cout, cin, ksz, ksz)); i += 1          # PyTorch OIHW
        p[f"conv{li}_w"] = jnp.transpose(w_pt, (2, 3, 1, 0))       # -> (kh,kw,cin,cout)
        p[f"conv{li}_b"] = rnd(ks[i], (cout,)); i += 1
        p[f"bn{li}_g"] = 1.0 + rnd(ks[i], (cout,)); i += 1         # BN gamma
        p[f"bn{li}_b"] = rnd(ks[i], (cout,)); i += 1               # BN beta
    w1_pt = rnd(ks[i], (z_dim, fc_dim)); i += 1                    # PyTorch (out, in)
    p["fc1_w"] = w1_pt.T
    p["fc1_b"] = rnd(ks[i], (z_dim,)); i += 1
    w2_pt = rnd(ks[i], (z_dim, fc_dim)); i += 1
    p["fc2_w"] = w2_pt.T
    p["fc2_b"] = rnd(ks[i], (z_dim,)); i += 1
    return p


def encoder_forward(x_nchw, params):
    """x_nchw: (N, 3, H, W) float32, like the PyTorch module input."""
    x = jnp.transpose(x_nchw, (0, 2, 3, 1)).astype(jnp.float32)    # NCHW -> NHWC
    n = x.shape[0]
    scale_prev = None     # previous layer's BN affine, folded into this layer
    shift_prev = None
    ho = wo = None
    cout = None
    for li, (ksz, stride) in enumerate(LAYER_CFG, start=1):
        patches, ho, wo = im2col(x, ksz, ksz, stride)
        w = params[f"conv{li}_w"]                                  # (kh,kw,cin,cout)
        b = params[f"conv{li}_b"]
        cout = w.shape[-1]
        if scale_prev is not None:
            # Fold BN of the previous layer into this conv (VALID conv, so the
            # constant shift contributes an exact per-cout bias term):
            #   conv(W, y*s + t) = conv(W * s[cin], y) + sum_{kh,kw,cin} W * t[cin]
            b = b + jnp.einsum("hwic,i->c", w, shift_prev)
            w = w * scale_prev[None, None, :, None]
        y, mean, var = conv_relu_stats(patches, w.reshape(-1, cout), b)
        scale_prev = params[f"bn{li}_g"] * jax.lax.rsqrt(var + BN_EPS)
        shift_prev = params[f"bn{li}_b"] - mean * scale_prev
        x = y.reshape(n, ho, wo, cout)                             # bf16, pre-BN
    # nn.Flatten on NCHW flattens in (C, H, W) order -> transpose back first.
    flat = jnp.transpose(x, (0, 3, 1, 2)).reshape(n, -1)           # pre-BN3, bf16
    # Fold bn3 into both FC heads (flatten order = channel-major, hw consecutive).
    hw = ho * wo
    scale_flat = jnp.repeat(scale_prev, hw)                        # (fc_dim,)
    shift_flat = jnp.repeat(shift_prev, hw)
    w1 = params["fc1_w"] * scale_flat[:, None]
    b1 = params["fc1_b"] + shift_flat @ params["fc1_w"]
    w2 = params["fc2_w"] * scale_flat[:, None]
    b2 = params["fc2_b"] + shift_flat @ params["fc2_w"]
    return fused_heads(flat, w1, b1, w2, b2)


def encoder_reference(x_nchw, params, eps=BN_EPS):
    """Pure-JAX f32 reference (training-mode BN, biased variance)."""
    x = jnp.transpose(x_nchw, (0, 2, 3, 1)).astype(jnp.float32)
    n = x.shape[0]
    for li, (ksz, stride) in enumerate(LAYER_CFG, start=1):
        w = params[f"conv{li}_w"]
        y = jax.lax.conv_general_dilated(
            x, w, window_strides=(stride, stride), padding="VALID",
            dimension_numbers=("NHWC", "HWIO", "NHWC"))
        y = jnp.maximum(y + params[f"conv{li}_b"], 0.0)
        mean = jnp.mean(y, axis=(0, 1, 2), keepdims=True)
        var = jnp.mean((y - mean) ** 2, axis=(0, 1, 2), keepdims=True)
        x = (y - mean) * jax.lax.rsqrt(var + eps) * params[f"bn{li}_g"] + params[f"bn{li}_b"]
    flat = jnp.transpose(x, (0, 3, 1, 2)).reshape(n, -1)
    loc = flat @ params["fc1_w"] + params["fc1_b"]
    scale = jnp.exp(flat @ params["fc2_w"] + params["fc2_b"])
    return loc, scale


if __name__ == "__main__":
    key = jax.random.PRNGKey(0)
    k_param, k_x = jax.random.split(key)

    batch, in_ch, hw = 2, 3, 37
    z_dim = 8
    filters = (32, 64, 128)

    # spatial sizes: 37 -> 17 -> 7 -> 3   =>   fc_dim = 128 * 3 * 3 = 1152
    h = hw
    for ksz, stride in LAYER_CFG:
        h = conv_out(h, ksz, stride)
    fc_dim = filters[-1] * h * h

    params = init_params(k_param, z_dim, fc_dim, filters)
    x = jax.random.normal(k_x, (batch, in_ch, hw, hw), jnp.float32)

    fwd = jax.jit(encoder_forward)
    z_loc, z_scale = fwd(x, params)
    jax.block_until_ready((z_loc, z_scale))

    assert z_loc.shape == (batch, z_dim) and z_scale.shape == (batch, z_dim)
    assert bool(jnp.all(jnp.isfinite(z_loc))) and bool(jnp.all(z_scale > 0))

    # Loose tolerance: Pallas path uses bf16 matmul operands / bf16 activations
    # (f32 accumulate); exp(fc2) amplifies last-layer bf16 error slightly.
    ref_loc, ref_scale = encoder_reference(x, params)
    assert bool(jnp.allclose(z_loc, ref_loc, rtol=0.2, atol=0.2))
    assert bool(jnp.allclose(z_scale, ref_scale, rtol=0.2, atol=0.2))

    print("KERNEL_OK")
</pallas_src>

<mosaic_0001>
module attributes {stable_mosaic.version = 11 : i64} {
  func.func @conv_relu_stats_kernel(%arg0: i32, %arg1: memref<304x128xbf16, #tpu.memory_space<vmem>>, %arg2: memref<128x128xbf16, #tpu.memory_space<vmem>>, %arg3: memref<1x128xf32, #tpu.memory_space<vmem>>, %arg4: memref<304x128xbf16, #tpu.memory_space<vmem>>, %arg5: memref<1x1x128xf32, #tpu.memory_space<vmem>>, %arg6: memref<1x1x128xf32, #tpu.memory_space<vmem>>) attributes {dimension_semantics = [#tpu.dimension_semantics<parallel>], iteration_bounds = array<i64: 2>, scalar_prefetch = 0 : i64, scratch_operands = 0 : i64, tpu.core_type = #tpu.core_type<tc>, window_params = [{transform_indices = @transform_0, window_bounds = array<i64: 304, 128>}, {pipeline_mode = #tpu.pipeline_mode<synchronous>, transform_indices = @transform_1, window_bounds = array<i64: 128, 128>}, {pipeline_mode = #tpu.pipeline_mode<synchronous>, transform_indices = @transform_2, window_bounds = array<i64: 1, 128>}, {transform_indices = @transform_3, window_bounds = array<i64: 304, 128>}, {transform_indices = @transform_4, window_bounds = array<i64: 1, 1, 128>}, {transform_indices = @transform_5, window_bounds = array<i64: 1, 1, 128>}]} {
    %c0 = arith.constant 0 : index
    %c0_0 = arith.constant 0 : index
    %0 = vector.load %arg1[%c0, %c0_0] : memref<304x128xbf16, #tpu.memory_space<vmem>>, vector<304x128xbf16>
    %c0_1 = arith.constant 0 : index
    %c0_2 = arith.constant 0 : index
    %1 = vector.load %arg2[%c0_1, %c0_2] : memref<128x128xbf16, #tpu.memory_space<vmem>>, vector<128x128xbf16>
    %cst = arith.constant dense<0.000000e+00> : vector<304x128xf32>
    %2 = tpu.matmul %0, %1, %cst {dimension_numbers = #tpu.dot_dimension_numbers<[1], [0], [0], [1], [0, 0, 1, 1], [], []>} : vector<304x128xbf16>, vector<128x128xbf16>, vector<304x128xf32> -> vector<304x128xf32>
    %c0_3 = arith.constant 0 : index
    %c0_4 = arith.constant 0 : index
    %3 = vector.load %arg3[%c0_3, %c0_4] : memref<1x128xf32, #tpu.memory_space<vmem>>, vector<1x128xf32>
    %4 = vector.broadcast %3 : vector<1x128xf32> to vector<304x128xf32>
    %5 = arith.addf %2, %4 : vector<304x128xf32>
    %cst_5 = arith.constant 0.000000e+00 : f32
    %6 = vector.broadcast %cst_5 : f32 to vector<304x128xf32>
    %7 = arith.maximumf %5, %6 : vector<304x128xf32>
    %8 = arith.truncf %7 : vector<304x128xf32> to vector<304x128xbf16>
    %c0_6 = arith.constant 0 : index
    %c0_7 = arith.constant 0 : index
    %9 = vector.load %arg4[%c0_6, %c0_7] : memref<304x128xbf16, #tpu.memory_space<vmem>>, vector<304x128xbf16>
    tpu.vector_store %arg4[%c0_6, %c0_7], %8 {strides = array<i32>} : memref<304x128xbf16, #tpu.memory_space<vmem>>, vector<304x128xbf16>,
    %cst_8 = arith.constant dense<0.000000e+00> : vector<128xf32>
    %10 = vector.multi_reduction <add>, %7, %cst_8 [0] : vector<304x128xf32> to vector<128xf32>
    %11 = vector.shape_cast %10 : vector<128xf32> to vector<1x128xf32>
    %12 = vector.shape_cast %11 : vector<1x128xf32> to vector<1x1x128xf32>
    %c0_9 = arith.constant 0 : index
    %c0_10 = arith.constant 0 : index
    %c0_11 = arith.constant 0 : index
    %13 = vector.load %arg5[%c0_9, %c0_10, %c0_11] : memref<1x1x128xf32, #tpu.memory_space<vmem>>, vector<1x1x128xf32>
    tpu.vector_store %arg5[%c0_9, %c0_10, %c0_11], %12 {strides = array<i32>} : memref<1x1x128xf32, #tpu.memory_space<vmem>>, vector<1x1x128xf32>,
    %14 = arith.mulf %7, %7 : vector<304x128xf32>
    %cst_12 = arith.constant dense<0.000000e+00> : vector<128xf32>
    %15 = vector.multi_reduction <add>, %14, %cst_12 [0] : vector<304x128xf32> to vector<128xf32>
    %16 = vector.shape_cast %15 : vector<128xf32> to vector<1x128xf32>
    %17 = vector.shape_cast %16 : vector<1x128xf32> to vector<1x1x128xf32>
    %c0_13 = arith.constant 0 : index
    %c0_14 = arith.constant 0 : index
    %c0_15 = arith.constant 0 : index
    %18 = vector.load %arg6[%c0_13, %c0_14, %c0_15] : memref<1x1x128xf32, #tpu.memory_space<vmem>>, vector<1x1x128xf32>
    tpu.vector_store %arg6[%c0_13, %c0_14, %c0_15], %17 {strides = array<i32>} : memref<1x1x128xf32, #tpu.memory_space<vmem>>, vector<1x1x128xf32>,
    return
  }
  func.func @transform_0(%arg0: i32) -> (i32, i32) {
    %c0_i32 = arith.constant 0 : i32
    %c0_i32_0 = arith.constant 0 : i32
    return %arg0, %c0_i32 : i32, i32
  }
  func.func @transform_1(%arg0: i32) -> (i32, i32) {
    %c0_i32 = arith.constant 0 : i32
    %c0_i32_0 = arith.constant 0 : i32
    %c0_i32_1 = arith.constant 0 : i32
    return %c0_i32, %c0_i32_0 : i32, i32
  }
  func.func @transform_2(%arg0: i32) -> (i32, i32) {
    %c0_i32 = arith.constant 0 : i32
    %c0_i32_0 = arith.constant 0 : i32
    %c0_i32_1 = arith.constant 0 : i32
    return %c0_i32, %c0_i32_0 : i32, i32
  }
  func.func @transform_3(%arg0: i32) -> (i32, i32) {
    %c0_i32 = arith.constant 0 : i32
    %c0_i32_0 = arith.constant 0 : i32
    return %arg0, %c0_i32 : i32, i32
  }
  func.func @transform_4(%arg0: i32) -> (i32, i32, i32) {
    %c0_i32 = arith.constant 0 : i32
    %c0_i32_0 = arith.constant 0 : i32
    %c0_i32_1 = arith.constant 0 : i32
    return %arg0, %c0_i32, %c0_i32_0 : i32, i32, i32
  }
  func.func @transform_5(%arg0: i32) -> (i32, i32, i32) {
    %c0_i32 = arith.constant 0 : i32
    %c0_i32_0 = arith.constant 0 : i32
    %c0_i32_1 = arith.constant 0 : i32
    return %arg0, %c0_i32, %c0_i32_0 : i32, i32, i32
  }
}

module attributes {stable_mosaic.version = 11 : i64} {
  func.func @conv_relu_stats_kernel(%arg0: i32, %arg1: memref<112x896xbf16, #tpu.memory_space<vmem>>, %arg2: memref<896x128xbf16, #tpu.memory_space<vmem>>, %arg3: memref<1x128xf32, #tpu.memory_space<vmem>>, %arg4: memref<112x128xbf16, #tpu.memory_space<vmem>>, %arg5: memref<1x1x128xf32, #tpu.memory_space<vmem>>, %arg6: memref<1x1x128xf32, #tpu.memory_space<vmem>>) attributes {dimension_semantics = [#tpu.dimension_semantics<parallel>], iteration_bounds = array<i64: 1>, scalar_prefetch = 0 : i64, scratch_operands = 0 : i64, tpu.core_type = #tpu.core_type<tc>, window_params = [{transform_indices = @transform_0, window_bounds = array<i64: 112, 896>}, {pipeline_mode = #tpu.pipeline_mode<synchronous>, transform_indices = @transform_1, window_bounds = array<i64: 896, 128>}, {pipeline_mode = #tpu.pipeline_mode<synchronous>, transform_indices = @transform_2, window_bounds = array<i64: 1, 128>}, {transform_indices = @transform_3, window_bounds = array<i64: 112, 128>}, {transform_indices = @transform_4, window_bounds = array<i64: 1, 1, 128>}, {transform_indices = @transform_5, window_bounds = array<i64: 1, 1, 128>}]} {
    %c0 = arith.constant 0 : index
    %c0_0 = arith.constant 0 : index
    %0 = vector.load %arg1[%c0, %c0_0] : memref<112x896xbf16, #tpu.memory_space<vmem>>, vector<112x896xbf16>
    %c0_1 = arith.constant 0 : index
    %c0_2 = arith.constant 0 : index
    %1 = vector.load %arg2[%c0_1, %c0_2] : memref<896x128xbf16, #tpu.memory_space<vmem>>, vector<896x128xbf16>
    %cst = arith.constant dense<0.000000e+00> : vector<112x128xf32>
    %2 = tpu.matmul %0, %1, %cst {dimension_numbers = #tpu.dot_dimension_numbers<[1], [0], [0], [1], [0, 0, 1, 1], [], []>} : vector<112x896xbf16>, vector<896x128xbf16>, vector<112x128xf32> -> vector<112x128xf32>
    %c0_3 = arith.constant 0 : index
    %c0_4 = arith.constant 0 : index
    %3 = vector.load %arg3[%c0_3, %c0_4] : memref<1x128xf32, #tpu.memory_space<vmem>>, vector<1x128xf32>
    %4 = vector.broadcast %3 : vector<1x128xf32> to vector<112x128xf32>
    %5 = arith.addf %2, %4 : vector<112x128xf32>
    %cst_5 = arith.constant 0.000000e+00 : f32
    %6 = vector.broadcast %cst_5 : f32 to vector<112x128xf32>
    %7 = arith.maximumf %5, %6 : vector<112x128xf32>
    %8 = arith.truncf %7 : vector<112x128xf32> to vector<112x128xbf16>
    %c0_6 = arith.constant 0 : index
    %c0_7 = arith.constant 0 : index
    %9 = vector.load %arg4[%c0_6, %c0_7] : memref<112x128xbf16, #tpu.memory_space<vmem>>, vector<112x128xbf16>
    tpu.vector_store %arg4[%c0_6, %c0_7], %8 {strides = array<i32>} : memref<112x128xbf16, #tpu.memory_space<vmem>>, vector<112x128xbf16>,
    %cst_8 = arith.constant dense<0.000000e+00> : vector<128xf32>
    %10 = vector.multi_reduction <add>, %7, %cst_8 [0] : vector<112x128xf32> to vector<128xf32>
    %11 = vector.shape_cast %10 : vector<128xf32> to vector<1x128xf32>
    %12 = vector.shape_cast %11 : vector<1x128xf32> to vector<1x1x128xf32>
    %c0_9 = arith.constant 0 : index
    %c0_10 = arith.constant 0 : index
    %c0_11 = arith.constant 0 : index
    %13 = vector.load %arg5[%c0_9, %c0_10, %c0_11] : memref<1x1x128xf32, #tpu.memory_space<vmem>>, vector<1x1x128xf32>
    tpu.vector_store %arg5[%c0_9, %c0_10, %c0_11], %12 {strides = array<i32>} : memref<1x1x128xf32, #tpu.memory_space<vmem>>, vector<1x1x128xf32>,
    %14 = arith.mulf %7, %7 : vector<112x128xf32>
    %cst_12 = arith.constant dense<0.000000e+00> : vector<128xf32>
    %15 = vector.multi_reduction <add>, %14, %cst_12 [0] : vector<112x128xf32> to vector<128xf32>
    %16 = vector.shape_cast %15 : vector<128xf32> to vector<1x128xf32>
    %17 = vector.shape_cast %16 : vector<1x128xf32> to vector<1x1x128xf32>
    %c0_13 = arith.constant 0 : index
    %c0_14 = arith.constant 0 : index
    %c0_15 = arith.constant 0 : index
    %18 = vector.load %arg6[%c0_13, %c0_14, %c0_15] : memref<1x1x128xf32, #tpu.memory_space<vmem>>, vector<1x1x128xf32>
    tpu.vector_store %arg6[%c0_13, %c0_14, %c0_15], %17 {strides = array<i32>} : memref<1x1x128xf32, #tpu.memory_space<vmem>>, vector<1x1x128xf32>,
    return
  }
  func.func @transform_0(%arg0: i32) -> (i32, i32) {
    %c0_i32 = arith.constant 0 : i32
    %c0_i32_0 = arith.constant 0 : i32
    return %arg0, %c0_i32 : i32, i32
  }
  func.func @transform_1(%arg0: i32) -> (i32, i32) {
    %c0_i32 = arith.constant 0 : i32
    %c0_i32_0 = arith.constant 0 : i32
    %c0_i32_1 = arith.constant 0 : i32
    return %c0_i32, %c0_i32_0 : i32, i32
  }
  func.func @transform_2(%arg0: i32) -> (i32, i32) {
    %c0_i32 = arith.constant 0 : i32
    %c0_i32_0 = arith.constant 0 : i32
    %c0_i32_1 = arith.constant 0 : i32
    return %c0_i32, %c0_i32_0 : i32, i32
  }
  func.func @transform_3(%arg0: i32) -> (i32, i32) {
    %c0_i32 = arith.constant 0 : i32
    %c0_i32_0 = arith.constant 0 : i32
    return %arg0, %c0_i32 : i32, i32
  }
  func.func @transform_4(%arg0: i32) -> (i32, i32, i32) {
    %c0_i32 = arith.constant 0 : i32
    %c0_i32_0 = arith.constant 0 : i32
    %c0_i32_1 = arith.constant 0 : i32
    return %arg0, %c0_i32, %c0_i32_0 : i32, i32, i32
  }
  func.func @transform_5(%arg0: i32) -> (i32, i32, i32) {
    %c0_i32 = arith.constant 0 : i32
    %c0_i32_0 = arith.constant 0 : i32
    %c0_i32_1 = arith.constant 0 : i32
    return %arg0, %c0_i32, %c0_i32_0 : i32, i32, i32
  }
}

module attributes {stable_mosaic.version = 11 : i64} {
  func.func @conv_relu_stats_kernel(%arg0: i32, %arg1: memref<32x640xbf16, #tpu.memory_space<vmem>>, %arg2: memref<640x128xbf16, #tpu.memory_space<vmem>>, %arg3: memref<1x128xf32, #tpu.memory_space<vmem>>, %arg4: memref<32x128xbf16, #tpu.memory_space<vmem>>, %arg5: memref<1x1x128xf32, #tpu.memory_space<vmem>>, %arg6: memref<1x1x128xf32, #tpu.memory_space<vmem>>) attributes {dimension_semantics = [#tpu.dimension_semantics<parallel>], iteration_bounds = array<i64: 1>, scalar_prefetch = 0 : i64, scratch_operands = 0 : i64, tpu.core_type = #tpu.core_type<tc>, window_params = [{transform_indices = @transform_0, window_bounds = array<i64: 32, 640>}, {pipeline_mode = #tpu.pipeline_mode<synchronous>, transform_indices = @transform_1, window_bounds = array<i64: 640, 128>}, {pipeline_mode = #tpu.pipeline_mode<synchronous>, transform_indices = @transform_2, window_bounds = array<i64: 1, 128>}, {transform_indices = @transform_3, window_bounds = array<i64: 32, 128>}, {transform_indices = @transform_4, window_bounds = array<i64: 1, 1, 128>}, {transform_indices = @transform_5, window_bounds = array<i64: 1, 1, 128>}]} {
    %c0 = arith.constant 0 : index
    %c0_0 = arith.constant 0 : index
    %0 = vector.load %arg1[%c0, %c0_0] : memref<32x640xbf16, #tpu.memory_space<vmem>>, vector<32x640xbf16>
    %c0_1 = arith.constant 0 : index
    %c0_2 = arith.constant 0 : index
    %1 = vector.load %arg2[%c0_1, %c0_2] : memref<640x128xbf16, #tpu.memory_space<vmem>>, vector<640x128xbf16>
    %cst = arith.constant dense<0.000000e+00> : vector<32x128xf32>
    %2 = tpu.matmul %0, %1, %cst {dimension_numbers = #tpu.dot_dimension_numbers<[1], [0], [0], [1], [0, 0, 1, 1], [], []>} : vector<32x640xbf16>, vector<640x128xbf16>, vector<32x128xf32> -> vector<32x128xf32>
    %c0_3 = arith.constant 0 : index
    %c0_4 = arith.constant 0 : index
    %3 = vector.load %arg3[%c0_3, %c0_4] : memref<1x128xf32, #tpu.memory_space<vmem>>, vector<1x128xf32>
    %4 = vector.broadcast %3 : vector<1x128xf32> to vector<32x128xf32>
    %5 = arith.addf %2, %4 : vector<32x128xf32>
    %cst_5 = arith.constant 0.000000e+00 : f32
    %6 = vector.broadcast %cst_5 : f32 to vector<32x128xf32>
    %7 = arith.maximumf %5, %6 : vector<32x128xf32>
    %8 = arith.truncf %7 : vector<32x128xf32> to vector<32x128xbf16>
    %c0_6 = arith.constant 0 : index
    %c0_7 = arith.constant 0 : index
    %9 = vector.load %arg4[%c0_6, %c0_7] : memref<32x128xbf16, #tpu.memory_space<vmem>>, vector<32x128xbf16>
    tpu.vector_store %arg4[%c0_6, %c0_7], %8 {strides = array<i32>} : memref<32x128xbf16, #tpu.memory_space<vmem>>, vector<32x128xbf16>,
    %cst_8 = arith.constant dense<0.000000e+00> : vector<128xf32>
    %10 = vector.multi_reduction <add>, %7, %cst_8 [0] : vector<32x128xf32> to vector<128xf32>
    %11 = vector.shape_cast %10 : vector<128xf32> to vector<1x128xf32>
    %12 = vector.shape_cast %11 : vector<1x128xf32> to vector<1x1x128xf32>
    %c0_9 = arith.constant 0 : index
    %c0_10 = arith.constant 0 : index
    %c0_11 = arith.constant 0 : index
    %13 = vector.load %arg5[%c0_9, %c0_10, %c0_11] : memref<1x1x128xf32, #tpu.memory_space<vmem>>, vector<1x1x128xf32>
    tpu.vector_store %arg5[%c0_9, %c0_10, %c0_11], %12 {strides = array<i32>} : memref<1x1x128xf32, #tpu.memory_space<vmem>>, vector<1x1x128xf32>,
    %14 = arith.mulf %7, %7 : vector<32x128xf32>
    %cst_12 = arith.constant dense<0.000000e+00> : vector<128xf32>
    %15 = vector.multi_reduction <add>, %14, %cst_12 [0] : vector<32x128xf32> to vector<128xf32>
    %16 = vector.shape_cast %15 : vector<128xf32> to vector<1x128xf32>
    %17 = vector.shape_cast %16 : vector<1x128xf32> to vector<1x1x128xf32>
    %c0_13 = arith.constant 0 : index
    %c0_14 = arith.constant 0 : index
    %c0_15 = arith.constant 0 : index
    %18 = vector.load %arg6[%c0_13, %c0_14, %c0_15] : memref<1x1x128xf32, #tpu.memory_space<vmem>>, vector<1x1x128xf32>
    tpu.vector_store %arg6[%c0_13, %c0_14, %c0_15], %17 {strides = array<i32>} : memref<1x1x128xf32, #tpu.memory_space<vmem>>, vector<1x1x128xf32>,
    return
  }
  func.func @transform_0(%arg0: i32) -> (i32, i32) {
    %c0_i32 = arith.constant 0 : i32
    %c0_i32_0 = arith.constant 0 : i32
    return %arg0, %c0_i32 : i32, i32
  }
  func.func @transform_1(%arg0: i32) -> (i32, i32) {
    %c0_i32 = arith.constant 0 : i32
    %c0_i32_0 = arith.constant 0 : i32
    %c0_i32_1 = arith.constant 0 : i32
    return %c0_i32, %c0_i32_0 : i32, i32
  }
  func.func @transform_2(%arg0: i32) -> (i32, i32) {
    %c0_i32 = arith.constant 0 : i32
    %c0_i32_0 = arith.constant 0 : i32
    %c0_i32_1 = arith.constant 0 : i32
    return %c0_i32, %c0_i32_0 : i32, i32
  }
  func.func @transform_3(%arg0: i32) -> (i32, i32) {
    %c0_i32 = arith.constant 0 : i32
    %c0_i32_0 = arith.constant 0 : i32
    return %arg0, %c0_i32 : i32, i32
  }
  func.func @transform_4(%arg0: i32) -> (i32, i32, i32) {
    %c0_i32 = arith.constant 0 : i32
    %c0_i32_0 = arith.constant 0 : i32
    %c0_i32_1 = arith.constant 0 : i32
    return %arg0, %c0_i32, %c0_i32_0 : i32, i32, i32
  }
  func.func @transform_5(%arg0: i32) -> (i32, i32, i32) {
    %c0_i32 = arith.constant 0 : i32
    %c0_i32_0 = arith.constant 0 : i32
    %c0_i32_1 = arith.constant 0 : i32
    return %arg0, %c0_i32, %c0_i32_0 : i32, i32, i32
  }
}

module attributes {stable_mosaic.version = 11 : i64} {
  func.func @heads_kernel(%arg0: i32, %arg1: i32, %arg2: memref<16x1152xbf16, #tpu.memory_space<vmem>>, %arg3: memref<1152x128xbf16, #tpu.memory_space<vmem>>, %arg4: memref<1x128xf32, #tpu.memory_space<vmem>>, %arg5: memref<16x128xf32, #tpu.memory_space<vmem>>, %arg6: memref<16x128xf32, #tpu.memory_space<vmem>>) attributes {dimension_semantics = [#tpu.dimension_semantics<parallel>, #tpu.dimension_semantics<arbitrary>], iteration_bounds = array<i64: 2, 1>, scalar_prefetch = 0 : i64, scratch_operands = 1 : i64, tpu.core_type = #tpu.core_type<tc>, window_params = [{transform_indices = @transform_0, window_bounds = array<i64: 16, 1152>}, {transform_indices = @transform_1, window_bounds = array<i64: 1152, 128>}, {transform_indices = @transform_2, window_bounds = array<i64: 1, 128>}, {transform_indices = @transform_3, window_bounds = array<i64: 16, 128>}]} {
    %c0_i32 = arith.constant 0 : i32
    %0 = arith.cmpi eq, %arg1, %c0_i32 : i32
    %1 = arith.extui %0 : i1 to i32
    %c0_i32_0 = arith.constant 0 : i32
    %2 = arith.cmpi ne, %1, %c0_i32_0 : i32
    scf.if %2 {
      %cst_13 = arith.constant 0.000000e+00 : f32
      %19 = vector.broadcast %cst_13 : f32 to vector<16x128xf32>
      %c0_14 = arith.constant 0 : index
      %c0_15 = arith.constant 0 : index
      %20 = vector.load %arg6[%c0_14, %c0_15] : memref<16x128xf32, #tpu.memory_space<vmem>>, vector<16x128xf32>
      tpu.vector_store %arg6[%c0_14, %c0_15], %19 {strides = array<i32>} : memref<16x128xf32, #tpu.memory_space<vmem>>, vector<16x128xf32>,
    } else {
    }
    %c0 = arith.constant 0 : index
    %c0_1 = arith.constant 0 : index
    %3 = vector.load %arg6[%c0, %c0_1] : memref<16x128xf32, #tpu.memory_space<vmem>>, vector<16x128xf32>
    %c0_2 = arith.constant 0 : index
    %c0_3 = arith.constant 0 : index
    %4 = vector.load %arg2[%c0_2, %c0_3] : memref<16x1152xbf16, #tpu.memory_space<vmem>>, vector<16x1152xbf16>
    %c0_4 = arith.constant 0 : index
    %c0_5 = arith.constant 0 : index
    %5 = vector.load %arg3[%c0_4, %c0_5] : memref<1152x128xbf16, #tpu.memory_space<vmem>>, vector<1152x128xbf16>
    %cst = arith.constant dense<0.000000e+00> : vector<16x128xf32>
    %6 = tpu.matmul %4, %5, %cst {dimension_numbers = #tpu.dot_dimension_numbers<[1], [0], [0], [1], [0, 0, 1, 1], [], []>} : vector<16x1152xbf16>, vector<1152x128xbf16>, vector<16x128xf32> -> vector<16x128xf32>
    %7 = arith.addf %3, %6 : vector<16x128xf32>
    %c0_6 = arith.constant 0 : index
    %c0_7 = arith.constant 0 : index
    %8 = vector.load %arg6[%c0_6, %c0_7] : memref<16x128xf32, #tpu.memory_space<vmem>>, vector<16x128xf32>
    tpu.vector_store %arg6[%c0_6, %c0_7], %7 {strides = array<i32>} : memref<16x128xf32, #tpu.memory_space<vmem>>, vector<16x128xf32>,
    %c0_i32_8 = arith.constant 0 : i32
    %9 = arith.cmpi eq, %arg1, %c0_i32_8 : i32
    %c0_i32_9 = arith.constant 0 : i32
    %10 = arith.cmpi eq, %arg0, %c0_i32_9 : i32
    %11 = arith.andi %9, %10 : i1
    %12 = arith.extui %11 : i1 to i32
    %c0_i32_10 = arith.constant 0 : i32
    %13 = arith.cmpi ne, %12, %c0_i32_10 : i32
    scf.if %13 {
      %c0_13 = arith.constant 0 : index
      %c0_14 = arith.constant 0 : index
      %19 = vector.load %arg6[%c0_13, %c0_14] : memref<16x128xf32, #tpu.memory_space<vmem>>, vector<16x128xf32>
      %c0_15 = arith.constant 0 : index
      %c0_16 = arith.constant 0 : index
      %20 = vector.load %arg4[%c0_15, %c0_16] : memref<1x128xf32, #tpu.memory_space<vmem>>, vector<1x128xf32>
      %21 = vector.broadcast %20 : vector<1x128xf32> to vector<16x128xf32>
      %22 = arith.addf %19, %21 : vector<16x128xf32>
      %c0_17 = arith.constant 0 : index
      %c0_18 = arith.constant 0 : index
      %23 = vector.load %arg5[%c0_17, %c0_18] : memref<16x128xf32, #tpu.memory_space<vmem>>, vector<16x128xf32>
      tpu.vector_store %arg5[%c0_17, %c0_18], %22 {strides = array<i32>} : memref<16x128xf32, #tpu.memory_space<vmem>>, vector<16x128xf32>,
    } else {
    }
    %c0_i32_11 = arith.constant 0 : i32
    %14 = arith.cmpi eq, %arg1, %c0_i32_11 : i32
    %c1_i32 = arith.constant 1 : i32
    %15 = arith.cmpi eq, %arg0, %c1_i32 : i32
    %16 = arith.andi %14, %15 : i1
    %17 = arith.extui %16 : i1 to i32
    %c0_i32_12 = arith.constant 0 : i32
    %18 = arith.cmpi ne, %17, %c0_i32_12 : i32
    scf.if %18 {
      %c0_13 = arith.constant 0 : index
      %c0_14 = arith.constant 0 : index
      %19 = vector.load %arg6[%c0_13, %c0_14] : memref<16x128xf32, #tpu.memory_space<vmem>>, vector<16x128xf32>
      %c0_15 = arith.constant 0 : index
      %c0_16 = arith.constant 0 : index
      %20 = vector.load %arg4[%c0_15, %c0_16] : memref<1x128xf32, #tpu.memory_space<vmem>>, vector<1x128xf32>
      %21 = vector.broadcast %20 : vector<1x128xf32> to vector<16x128xf32>
      %22 = arith.addf %19, %21 : vector<16x128xf32>
      %23 = math.exp %22 : vector<16x128xf32>
      %c0_17 = arith.constant 0 : index
      %c0_18 = arith.constant 0 : index
      %24 = vector.load %arg5[%c0_17, %c0_18] : memref<16x128xf32, #tpu.memory_space<vmem>>, vector<16x128xf32>
      tpu.vector_store %arg5[%c0_17, %c0_18], %23 {strides = array<i32>} : memref<16x128xf32, #tpu.memory_space<vmem>>, vector<16x128xf32>,
    } else {
    }
    return
  }
  func.func @transform_0(%arg0: i32, %arg1: i32) -> (i32, i32) {
    %c0_i32 = arith.constant 0 : i32
    %c0_i32_0 = arith.constant 0 : i32
    return %c0_i32, %arg1 : i32, i32
  }
  func.func @transform_1(%arg0: i32, %arg1: i32) -> (i32, i32) {
    %c0_i32 = arith.constant 0 : i32
    return %arg1, %arg0 : i32, i32
  }
  func.func @transform_2(%arg0: i32, %arg1: i32) -> (i32, i32) {
    %c0_i32 = arith.constant 0 : i32
    %c0_i32_0 = arith.constant 0 : i32
    return %c0_i32, %arg0 : i32, i32
  }
  func.func @transform_3(%arg0: i32, %arg1: i32) -> (i32, i32) {
    %c0_i32 = arith.constant 0 : i32
    %c0_i32_0 = arith.constant 0 : i32
    return %c0_i32, %arg0 : i32, i32
  }
}

</mosaic_0001>

<llo_original>
// kernel: encoder_forward.4
$region0: #{encoder_forward.4}
  #allocation0 [shape = 'u32[]', space=smem, size = 0x4, offset = 0x4, fixed_abs, tag = 'smem constant byte address 0x4 - core index']
  #allocation1 [shape = 'u32[144,128]{1,0:T(1,128)}', space=vmem, size = 0x12000, scoped, tag = 'internal scratch']
  %s0 = inlined_call_operand.vmem [shape: bf16[608,128], index: 0, kind: input, shape index: {}]
  %s1 = inlined_call_operand.vmem [shape: bf16[128,128], index: 1, kind: input, shape index: {}]
  %s2 = inlined_call_operand.vmem [shape: f32[1,128], index: 2, kind: input, shape index: {}]
  %s3 = inlined_call_operand.vmem [shape: bf16[608,128], index: 3, kind: output, shape index: {0}]
  %s4 = inlined_call_operand.vmem [shape: f32[2,1,128], index: 4, kind: output, shape index: {1}]
  %s5 = inlined_call_operand.vmem [shape: f32[2,1,128], index: 5, kind: output, shape index: {2}]
  %6 = xla_tuple %s3, %s4, %s5
  %s7 = sld [smem:[#allocation0]]
  $region61: #{encoder_forward.4} parent=0
    _
  %s9 = ssub.s32 1, %s7
  %s10 = scalar_select 0, %s9, %s7
  loop: start=0, step=1, limit=4
  $region2: #{encoder_forward.4} parent=0 // loop_pre_header
    _
  $region3: #{encoder_forward.4} parent=0 // loop_header
    %s12 = sphi 0, %s16
    %p13 = scmp.ge.s32.totalorder %s12, 4
    %s22 = sphi 0, %s24
    %s25 = sphi 0, %s22
    %s26 = sphi 0, %s25
    %s42 = sphi 0, %s26
    %s46 = sphi 0, %s46
    %s48 = sphi 0, %s46
    %s49 = sphi 0, %s48
    %s63 = sphi 0, %s49
    %s67 = sphi 0, %s67
    %s69 = sphi 0, %s67
    %s70 = sphi 0, %s69
    %s84 = sphi 0, %s70
    %s90 = sphi 0, %s92
    %s93 = sphi 0, %s90
    %s94 = sphi 0, %s93
    %s110 = sphi 0, %s94
    %s116 = sphi 0, %s118
    %s119 = sphi 0, %s116
    %s120 = sphi 0, %s119
    %s136 = sphi 0, %s120
    %s142 = sphi 0, %s144
    %s145 = sphi 0, %s142
    %s146 = sphi 0, %s145
    %s162 = sphi 0, %s146
  $region4: #{encoder_forward.4} parent=0 // loop_header_branch
    %15 = sbr.rel (%p13) target = $region8
  $region5: #{encoder_forward.4} parent=0 // loop_body
    %s17 = ssub.s32 %s12, 1
    %s18 = ssub.s32 %s12, 2
    %s19 = sadd.s32 %s12, 1
    %s20 = ssub.s32 %s12, %s19
    %p21 = scmp.eq.s32.totalorder %s20, 0
    %s23 = sadd.s32 %s22, 1
    %s24 = scalar_select %p21, %s22, %s23
    %p27 = pneg %p21
    %p28 = scmp.eq.s32.totalorder %s12, 1
    %p29 = por %p27, %p28
    %p30 = scmp.ne.s32.totalorder %s22, %s25
    %p31 = scmp.eq.s32.totalorder %s12, 0
    %p32 = por %p30, %p31
    %p33 = scmp.ne.s32.totalorder %s22, %s25
    %p34 = scmp.eq.s32.totalorder %s17, 1
    %p35 = por %p33, %p34
    %p36 = scmp.ne.s32.totalorder %s25, %s26
    %p37 = scmp.eq.s32.totalorder %s17, 0
    %p38 = por %p36, %p37
    %p39 = scmp.ne.s32.totalorder %s25, %s26
    %p40 = scmp.eq.s32.totalorder %s18, 1
    %p41 = por %p39, %p40
    %p43 = scmp.ne.s32.totalorder %s26, %s42
    %p44 = scmp.eq.s32.totalorder %s18, 0
    %p45 = por %p43, %p44
    %s47 = sadd.s32 %s46, 1
    %p50 = scmp.eq.s32.totalorder %s12, 1
    %p51 = scmp.ne.s32.totalorder %s46, %s48
    %p52 = scmp.eq.s32.totalorder %s12, 0
    %p53 = por %p51, %p52
    %p54 = scmp.ne.s32.totalorder %s46, %s48
    %p55 = scmp.eq.s32.totalorder %s17, 1
    %p56 = por %p54, %p55
    %p57 = scmp.ne.s32.totalorder %s48, %s49
    %p58 = scmp.eq.s32.totalorder %s17, 0
    %p59 = por %p57, %p58
    %p60 = scmp.ne.s32.totalorder %s48, %s49
    %p61 = scmp.eq.s32.totalorder %s18, 1
    %p62 = por %p60, %p61
    %p64 = scmp.ne.s32.totalorder %s49, %s63
    %p65 = scmp.eq.s32.totalorder %s18, 0
    %p66 = por %p64, %p65
    %s68 = sadd.s32 %s67, 1
    %p71 = scmp.eq.s32.totalorder %s12, 1
    %p72 = scmp.ne.s32.totalorder %s67, %s69
    %p73 = scmp.eq.s32.totalorder %s12, 0
    %p74 = por %p72, %p73
    %p75 = scmp.ne.s32.totalorder %s67, %s69
    %p76 = scmp.eq.s32.totalorder %s17, 1
    %p77 = por %p75, %p76
    %p78 = scmp.ne.s32.totalorder %s69, %s70
    %p79 = scmp.eq.s32.totalorder %s17, 0
    %p80 = por %p78, %p79
    %p81 = scmp.ne.s32.totalorder %s69, %s70
    %p82 = scmp.eq.s32.totalorder %s18, 1
    %p83 = por %p81, %p82
    %p85 = scmp.ne.s32.totalorder %s70, %s84
    %p86 = scmp.eq.s32.totalorder %s18, 0
    %p87 = por %p85, %p86
    %s88 = ssub.s32 %s12, %s19
    %p89 = scmp.eq.s32.totalorder %s88, 0
    %s91 = sadd.s32 %s90, 1
    %s92 = scalar_select %p89, %s90, %s91
    %p95 = pneg %p89
    %p96 = scmp.eq.s32.totalorder %s12, 1
    %p97 = por %p95, %p96
    %p98 = scmp.ne.s32.totalorder %s90, %s93
    %p99 = scmp.eq.s32.totalorder %s12, 0
    %p100 = por %p98, %p99
    %p101 = scmp.ne.s32.totalorder %s90, %s93
    %p102 = scmp.eq.s32.totalorder %s17, 1
    %p103 = por %p101, %p102
    %p104 = scmp.ne.s32.totalorder %s93, %s94
    %p105 = scmp.eq.s32.totalorder %s17, 0
    %p106 = por %p104, %p105
    %p107 = scmp.ne.s32.totalorder %s93, %s94
    %p108 = scmp.eq.s32.totalorder %s18, 1
    %p109 = por %p107, %p108
    %p111 = scmp.ne.s32.totalorder %s94, %s110
    %p112 = scmp.eq.s32.totalorder %s18, 0
    %p113 = por %p111, %p112
    %s114 = ssub.s32 %s12, %s19
    %p115 = scmp.eq.s32.totalorder %s114, 0
    %s117 = sadd.s32 %s116, 1
    %s118 = scalar_select %p115, %s116, %s117
    %p121 = pneg %p115
    %p122 = scmp.eq.s32.totalorder %s12, 1
    %p123 = por %p121, %p122
    %p124 = scmp.ne.s32.totalorder %s116, %s119
    %p125 = scmp.eq.s32.totalorder %s12, 0
    %p126 = por %p124, %p125
    %p127 = scmp.ne.s32.totalorder %s116, %s119
    %p128 = scmp.eq.s32.totalorder %s17, 1
    %p129 = por %p127, %p128
    %p130 = scmp.ne.s32.totalorder %s119, %s120
    %p131 = scmp.eq.s32.totalorder %s17, 0
    %p132 = por %p130, %p131
    %p133 = scmp.ne.s32.totalorder %s119, %s120
    %p134 = scmp.eq.s32.totalorder %s18, 1
    %p135 = por %p133, %p134
    %p137 = scmp.ne.s32.totalorder %s120, %s136
    %p138 = scmp.eq.s32.totalorder %s18, 0
    %p139 = por %p137, %p138
    %s140 = ssub.s32 %s12, %s19
    %p141 = scmp.eq.s32.totalorder %s140, 0
    %s143 = sadd.s32 %s142, 1
    %s144 = scalar_select %p141, %s142, %s143
    %p147 = pneg %p141
    %p148 = scmp.eq.s32.totalorder %s12, 1
    %p149 = por %p147, %p148
    %p150 = scmp.ne.s32.totalorder %s142, %s145
    %p151 = scmp.eq.s32.totalorder %s12, 0
    %p152 = por %p150, %p151
    %p153 = scmp.ne.s32.totalorder %s142, %s145
    %p154 = scmp.eq.s32.totalorder %s17, 1
    %p155 = por %p153, %p154
    %p156 = scmp.ne.s32.totalorder %s145, %s146
    %p157 = scmp.eq.s32.totalorder %s17, 0
    %p158 = por %p156, %p157
    %p159 = scmp.ne.s32.totalorder %s145, %s146
    %p160 = scmp.eq.s32.totalorder %s18, 1
    %p161 = por %p159, %p160
    %p163 = scmp.ne.s32.totalorder %s146, %s162
    %p164 = scmp.eq.s32.totalorder %s18, 0
    %p165 = por %p163, %p164
    %p166 = scmp.le.s32.totalorder 1, %s12
    %p167 = scmp.lt.s32.totalorder %s12, 3
    %p168 = pnand %p166, %p167
    %p169 = pneg %p168
    // Predicated region
    $region9: #{encoder_forward.4} parent=5 // pred_check
      _
    $region10: #{encoder_forward.4} parent=5 // pred_check_branch
      %171 = sbr.rel (%p168) target = $region12
    $region11: #{encoder_forward.4} parent=5 // pred_region
      %s172 = ssub.s32 %s12, 1
      // Predicated region
      $region13: #{encoder_forward.4} parent=11 // pred_check
        %p173 = pneg %p59
      $region14: #{encoder_forward.4} parent=11 // pred_check_branch
        %175 = sbr.rel (%p173) target = $region16
      $region15: #{encoder_forward.4} parent=11 // pred_region
        _
      $region16: #{encoder_forward.4} parent=11 // pred_fallthru
        _
      // Predicated region
      $region17: #{encoder_forward.4} parent=11 // pred_check
        %p176 = pneg %p80
      $region18: #{encoder_forward.4} parent=11 // pred_check_branch
        %178 = sbr.rel (%p176) target = $region20
      $region19: #{encoder_forward.4} parent=11 // pred_region
        _
      $region20: #{encoder_forward.4} parent=11 // pred_fallthru
        _
    $region12: #{encoder_forward.4} parent=5 // pred_fallthru
      _
    %p179 = scmp.lt.s32.totalorder %s12, 2
    // Predicated region
    $region21: #{encoder_forward.4} parent=5 // pred_check
      %p180 = pneg %p179
    $region22: #{encoder_forward.4} parent=5 // pred_check_branch
      %182 = sbr.rel (%p180) target = $region24
    $region23: #{encoder_forward.4} parent=5 // pred_region
      // Predicated region
      $region25: #{encoder_forward.4} parent=23 // pred_check
        %p183 = pneg %p32
      $region26: #{encoder_forward.4} parent=23 // pred_check_branch
        %185 = sbr.rel (%p183) target = $region28
      $region27: #{encoder_forward.4} parent=23 // pred_region
        %s186 = smul.u32 38, %s12
        %p187 = scmp.lt.s32.totalorder %s186, 75
        %s188 = scalar_select %p187, %s186, 75
        %s189 = smul.addr %s188, 4
        %s190 = scalar_lea.vmem %s0, %s189
        %s191 = smul.u32 38, %s12
      $region28: #{encoder_forward.4} parent=23 // pred_fallthru
        _
    $region24: #{encoder_forward.4} parent=5 // pred_fallthru
      _
    %p192 = scmp.le.s32.totalorder 1, %s12
    %p193 = scmp.lt.s32.totalorder %s12, 3
    %p194 = pnand %p192, %p193
    %p195 = pneg %p194
    // Predicated region
    $region29: #{encoder_forward.4} parent=5 // pred_check
      _
    $region30: #{encoder_forward.4} parent=5 // pred_check_branch
      %197 = sbr.rel (%p194) target = $region32
    $region31: #{encoder_forward.4} parent=5 // pred_region
      %s198 = ssub.s32 %s12, 1
      %s199 = smul.u32 38, %s17
      %p200 = scmp.lt.s32.totalorder %s199, 75
      %s201 = scalar_select %p200, %s199, 75
      %s202 = smul.addr %s201, 4
      %s203 = scalar_lea.vmem %s0, %s202
      %p204 = pneg %p38
      %p205 = pneg %p35
      %p206 = pneg %p59
      %p207 = pneg %p56
      %p208 = pneg %p80
      %p209 = pneg %p77
      %p210 = pneg %p106
      %p211 = pneg %p103
      %s212 = smul.u32 38, %s17
      %p213 = scmp.lt.s32.totalorder %s212, 75
      %s214 = scalar_select %p213, %s212, 75
      %s215 = smul.addr %s214, 4
      %s216 = scalar_lea.vmem %s3, %s215
      %p217 = pneg %p132
      %p218 = pneg %p129
      %p219 = scmp.lt.s32.totalorder %s17, 1
      %s220 = scalar_select %p219, %s17, 1
      %s221 = scalar_lea.vmem %s4, %s220
      %p222 = pneg %p158
      %p223 = pneg %p155
      %p224 = scmp.lt.s32.totalorder %s17, 1
      %s225 = scalar_select %p224, %s17, 1
      %s226 = scalar_lea.vmem %s5, %s225
      %s227 = smul.u32 38, %s17
      %p228 = scmp.lt.s32.totalorder %s227, 75
      %s229 = scalar_select %p228, %s227, 75
      %s230 = smul.addr %s229, 4
      %s231 = scalar_lea.vmem %s0, %s230
      %s232 = smul.u32 38, %s17
      %s233 = smul.u32 38, %s17
      %p234 = scmp.lt.s32.totalorder %s233, 75
      %s235 = scalar_select %p234, %s233, 75
      %s236 = smul.addr %s235, 4
      %s237 = scalar_lea.vmem %s3, %s236
      %s238 = smul.u32 38, %s17
      %p239 = scmp.lt.s32.totalorder %s17, 1
      %s240 = scalar_select %p239, %s17, 1
      %s241 = scalar_lea.vmem %s4, %s240
      %p242 = scmp.lt.s32.totalorder %s17, 1
      %s243 = scalar_select %p242, %s17, 1
      %s244 = scalar_lea.vmem %s5, %s243
      %v246 = vld [vmem:[%s231] sm:$0xf]
      %v247 = vld [vmem:[%s231 + $0x4] sm:$0xf]
      %v248 = vld [vmem:[%s231 + $0x8] sm:$0xf]
      %v249 = vld [vmem:[%s231 + $0xc] sm:$0xf]
      %v250 = vld [vmem:[%s231 + $0x10] sm:$0xf]
      %v251 = vld [vmem:[%s231 + $0x14] sm:$0xf]
      %v252 = vld [vmem:[%s231 + $0x18] sm:$0xf]
      %v253 = vld [vmem:[%s231 + $0x1c] sm:$0xf]
      %v254 = vld [vmem:[%s231 + $0x20] sm:$0xf]
      %v255 = vld [vmem:[%s231 + $0x24] sm:$0xf]
      %v256 = vld [vmem:[%s231 + $0x28] sm:$0xf]
      %v257 = vld [vmem:[%s231 + $0x2c] sm:$0xf]
      %v258 = vld [vmem:[%s231 + $0x30] sm:$0xf]
      %v259 = vld [vmem:[%s231 + $0x34] sm:$0xf]
      %v260 = vld [vmem:[%s231 + $0x38] sm:$0xf]
      %v261 = vld [vmem:[%s231 + $0x3c] sm:$0xf]
      %v262 = vld [vmem:[%s231 + $0x40] sm:$0xf]
      %v263 = vld [vmem:[%s231 + $0x44] sm:$0xf]
      %v264 = vld [vmem:[%s231 + $0x48] sm:$0xf]
      %v265 = vld [vmem:[%s231 + $0x4c] sm:$0xf]
      %v266 = vld [vmem:[%s231 + $0x50] sm:$0xf]
      %v267 = vld [vmem:[%s231 + $0x54] sm:$0xf]
      %v268 = vld [vmem:[%s231 + $0x58] sm:$0xf]
      %v269 = vld [vmem:[%s231 + $0x5c] sm:$0xf]
      %v270 = vld [vmem:[%s231 + $0x60] sm:$0xf]
      %v271 = vld [vmem:[%s231 + $0x64] sm:$0xf]
      %v272 = vld [vmem:[%s231 + $0x68] sm:$0xf]
      %v273 = vld [vmem:[%s231 + $0x6c] sm:$0xf]
      %v274 = vld [vmem:[%s231 + $0x70] sm:$0xf]
      %v275 = vld [vmem:[%s231 + $0x74] sm:$0xf]
      %v276 = vld [vmem:[%s231 + $0x78] sm:$0xf]
      %v277 = vld [vmem:[%s231 + $0x7c] sm:$0xf]
      %v278 = vld [vmem:[%s231 + $0x80] sm:$0xf]
      %v279 = vld [vmem:[%s231 + $0x84] sm:$0xf]
      %v280 = vld [vmem:[%s231 + $0x88] sm:$0xf]
      %v281 = vld [vmem:[%s231 + $0x8c] sm:$0xf]
      %v282 = vld [vmem:[%s231 + $0x90] sm:$0xf]
      %v283 = vld [vmem:[%s231 + $0x94] sm:$0xf]
      %v284 = vld [vmem:[%s1] sm:$0xf]
      %v285 = vld [vmem:[%s1 + $0x4] sm:$0xf]
      %v286 = vld [vmem:[%s1 + $0x8] sm:$0xf]
      %v287 = vld [vmem:[%s1 + $0xc] sm:$0xf]
      %v288 = vld [vmem:[%s1 + $0x10] sm:$0xf]
      %v289 = vld [vmem:[%s1 + $0x14] sm:$0xf]
      %v290 = vld [vmem:[%s1 + $0x18] sm:$0xf]
      %v291 = vld [vmem:[%s1 + $0x1c] sm:$0xf]
      %v292 = vld [vmem:[%s1 + $0x20] sm:$0xf]
      %v293 = vld [vmem:[%s1 + $0x24] sm:$0xf]
      %v294 = vld [vmem:[%s1 + $0x28] sm:$0xf]
      %v295 = vld [vmem:[%s1 + $0x2c] sm:$0xf]
      %v296 = vld [vmem:[%s1 + $0x30] sm:$0xf]
      %v297 = vld [vmem:[%s1 + $0x34] sm:$0xf]
      %v298 = vld [vmem:[%s1 + $0x38] sm:$0xf]
      %v299 = vld [vmem:[%s1 + $0x3c] sm:$0xf]
      %v300 = vld [vmem:[%s2] sm:$0x1]
      %v302 = vlaneseq
      %v303 = vshrl.u32 %v302, 7
      %v304 = vsub.s32 0, %v303
      %v305 = vrot.slane %v300, %v304
      %v345 = vunpack.c.l.b16 %v246
      %v346 = vunpack.c.l.b16 %v247
      %v347 = vunpack.c.l.b16 %v248
      %v348 = vunpack.c.l.b16 %v249
      %v349 = vunpack.c.l.b16 %v250
      %v350 = vunpack.c.l.b16 %v251
      %v351 = vunpack.c.l.b16 %v252
      %v352 = vunpack.c.l.b16 %v253
      %v353 = vunpack.c.l.b16 %v254
      %v354 = vunpack.c.l.b16 %v255
      %v355 = vunpack.c.l.b16 %v256
      %v356 = vunpack.c.l.b16 %v257
      %v357 = vunpack.c.l.b16 %v258
      %v358 = vunpack.c.l.b16 %v259
      %v359 = vunpack.c.l.b16 %v260
      %v360 = vunpack.c.l.b16 %v261
      %v361 = vunpack.c.l.b16 %v262
      %v362 = vunpack.c.l.b16 %v263
      %v363 = vunpack.c.l.b16 %v264
      %v364 = vunpack.c.l.b16 %v265
      %v365 = vunpack.c.l.b16 %v266
      %v366 = vunpack.c.l.b16 %v267
      %v367 = vunpack.c.l.b16 %v268
      %v368 = vunpack.c.l.b16 %v269
      %v369 = vunpack.c.l.b16 %v270
      %v370 = vunpack.c.l.b16 %v271
      %v371 = vunpack.c.l.b16 %v272
      %v372 = vunpack.c.l.b16 %v273
      %v373 = vunpack.c.l.b16 %v274
      %v374 = vunpack.c.l.b16 %v275
      %v375 = vunpack.c.l.b16 %v276
      %v376 = vunpack.c.l.b16 %v277
      %v377 = vunpack.c.l.b16 %v278
      %v378 = vunpack.c.l.b16 %v279
      %v379 = vunpack.c.l.b16 %v280
      %v380 = vunpack.c.l.b16 %v281
      %v381 = vunpack.c.l.b16 %v282
      %v382 = vunpack.c.l.b16 %v283
      %v383 = vpack.c.b16 %v346, %v345
      %v384 = vpack.c.b16 %v348, %v347
      %v385 = vpack.c.b16 %v350, %v349
      %v386 = vpack.c.b16 %v352, %v351
      %v387 = vpack.c.b16 %v354, %v353
      %v388 = vpack.c.b16 %v356, %v355
      %v389 = vpack.c.b16 %v358, %v357
      %v390 = vpack.c.b16 %v360, %v359
      %v391 = vpack.c.b16 %v362, %v361
      %v392 = vpack.c.b16 %v364, %v363
      %v393 = vpack.c.b16 %v366, %v365
      %v394 = vpack.c.b16 %v368, %v367
      %v395 = vpack.c.b16 %v370, %v369
      %v396 = vpack.c.b16 %v372, %v371
      %v397 = vpack.c.b16 %v374, %v373
      %v398 = vpack.c.b16 %v376, %v375
      %v399 = vpack.c.b16 %v378, %v377
      %v400 = vpack.c.b16 %v380, %v379
      %v401 = vpack.c.b16 %v382, %v381
      %v437 = vunpack.c.l.b16 %v284
      %v438 = vunpack.c.l.b16 %v285
      %v439 = vunpack.c.l.b16 %v286
      %v440 = vunpack.c.l.b16 %v287
      %v441 = vunpack.c.l.b16 %v288
      %v442 = vunpack.c.l.b16 %v289
      %v443 = vunpack.c.l.b16 %v290
      %v444 = vunpack.c.l.b16 %v291
      %v445 = vunpack.c.l.b16 %v292
      %v446 = vunpack.c.l.b16 %v293
      %v447 = vunpack.c.l.b16 %v294
      %v448 = vunpack.c.l.b16 %v295
      %v449 = vunpack.c.l.b16 %v296
      %v450 = vunpack.c.l.b16 %v297
      %v451 = vunpack.c.l.b16 %v298
      %v452 = vunpack.c.l.b16 %v299
      %v453 = vpack.c.b16 %v438, %v437
      %v454 = vpack.c.b16 %v440, %v439
      %v455 = vpack.c.b16 %v442, %v441
      %v456 = vpack.c.b16 %v444, %v443
      %v457 = vpack.c.b16 %v446, %v445
      %v458 = vpack.c.b16 %v448, %v447
      %v459 = vpack.c.b16 %v450, %v449
      %v460 = vpack.c.b16 %v452, %v451
      %469 = vmatprep.subr.bf16.mxu0 0
      %470 = vmatpush1.bf16.msra.mxu0 %v453
      %471 = vmatprep.subr.bf16.mxu0 0
      %472 = vmatpush1.bf16.msra.mxu0 %v454
      %473 = vmatprep.subr.bf16.mxu0 0
      %474 = vmatpush1.bf16.msra.mxu0 %v455
      %475 = vmatprep.subr.bf16.mxu0 0
      %476 = vmatpush1.bf16.msra.mxu0 %v456
      %477 = vmatprep.subr.bf16.mxu0 0
      %478 = vmatpush1.bf16.msra.mxu0 %v457
      %479 = vmatprep.subr.bf16.mxu0 0
      %480 = vmatpush1.bf16.msra.mxu0 %v458
      %481 = vmatprep.subr.bf16.mxu0 0
      %482 = vmatpush1.bf16.msra.mxu0 %v459
      %483 = vmatprep.subr.bf16.mxu0 0
      %484 = vmatpush1.bf16.msra.mxu0 %v460
      %485 = vmatprep.subr.bf16.mxu0 0
      %486 = vmatpush1.bf16.msra.mxu0 0
      %487 = vmatprep.subr.bf16.mxu0 0
      %488 = vmatpush1.bf16.msra.mxu0 0
      %489 = vmatprep.subr.bf16.mxu0 0
      %490 = vmatpush1.bf16.msra.mxu0 0
      %491 = vmatprep.subr.bf16.mxu0 0
      %492 = vmatpush1.bf16.msra.mxu0 0
      %493 = vmatprep.subr.bf16.mxu0 0
      %494 = vmatpush1.bf16.msra.mxu0 0
      %495 = vmatprep.subr.bf16.mxu0 0
      %496 = vmatpush1.bf16.msra.mxu0 0
      %497 = vmatprep.subr.bf16.mxu0 0
      %498 = vmatpush1.bf16.msra.mxu0 0
      %499 = vmatprep.subr.bf16.mxu0 0
      %500 = vmatpush1.bf16.msra.mxu0 0
      %501 = vmatprep.mubr.bf16.mxu0 0
      %502 = vmatmul.mubr.bf16.gmra.mrb[0].mxu0 %v383
      %v503 = vpop.f32.mrb[0].mxu0
      %v504 = vadd.f32 %v305, %v503
      %v505 = vpop.f32.mrb[0].mxu0
      %v506 = vpop.f32.mrb[0].mxu0
      %v507 = vadd.f32 %v305, %v506
      %v508 = vpop.f32.mrb[0].mxu0
      %509 = vmatprep.mubr.bf16.mxu0 0
      %510 = vmatmul.mubr.bf16.gmra.mrb[0].mxu0 %v384
      %v511 = vpop.f32.mrb[0].mxu0
      %v512 = vadd.f32 %v305, %v511
      %v513 = vpop.f32.mrb[0].mxu0
      %v514 = vpop.f32.mrb[0].mxu0
      %v515 = vadd.f32 %v305, %v514
      %v516 = vpop.f32.mrb[0].mxu0
      %517 = vmatprep.mubr.bf16.mxu0 0
      %518 = vmatmul.mubr.bf16.gmra.mrb[0].mxu0 %v385
      %v519 = vpop.f32.mrb[0].mxu0
      %v520 = vadd.f32 %v305, %v519
      %v521 = vpop.f32.mrb[0].mxu0
      %v522 = vpop.f32.mrb[0].mxu0
      %v523 = vadd.f32 %v305, %v522
      %v524 = vpop.f32.mrb[0].mxu0
      %525 = vmatprep.mubr.bf16.mxu0 0
      %526 = vmatmul.mubr.bf16.gmra.mrb[0].mxu0 %v386
      %v527 = vpop.f32.mrb[0].mxu0
      %v528 = vadd.f32 %v305, %v527
      %v529 = vpop.f32.mrb[0].mxu0
      %v530 = vpop.f32.mrb[0].mxu0
      %v531 = vadd.f32 %v305, %v530
      %v532 = vpop.f32.mrb[0].mxu0
      %533 = vmatprep.mubr.bf16.mxu0 0
      %534 = vmatmul.mubr.bf16.gmra.mrb[0].mxu0 %v387
      %v535 = vpop.f32.mrb[0].mxu0
      %v536 = vadd.f32 %v305, %v535
      %v537 = vpop.f32.mrb[0].mxu0
      %v538 = vpop.f32.mrb[0].mxu0
      %v539 = vadd.f32 %v305, %v538
      %v540 = vpop.f32.mrb[0].mxu0
      %541 = vmatprep.mubr.bf16.mxu0 0
      %542 = vmatmul.mubr.bf16.gmra.mrb[0].mxu0 %v388
      %v543 = vpop.f32.mrb[0].mxu0
      %v544 = vadd.f32 %v305, %v543
      %v545 = vpop.f32.mrb[0].mxu0
      %v546 = vpop.f32.mrb[0].mxu0
      %v547 = vadd.f32 %v305, %v546
      %v548 = vpop.f32.mrb[0].mxu0
      %549 = vmatprep.mubr.bf16.mxu0 0
      %550 = vmatmul.mubr.bf16.gmra.mrb[0].mxu0 %v389
      %v551 = vpop.f32.mrb[0].mxu0
      %v552 = vadd.f32 %v305, %v551
      %v553 = vpop.f32.mrb[0].mxu0
      %v554 = vpop.f32.mrb[0].mxu0
      %v555 = vadd.f32 %v305, %v554
      %v556 = vpop.f32.mrb[0].mxu0
      %557 = vmatprep.mubr.bf16.mxu0 0
      %558 = vmatmul.mubr.bf16.gmra.mrb[0].mxu0 %v390
      %v559 = vpop.f32.mrb[0].mxu0
      %v560 = vadd.f32 %v305, %v559
      %v561 = vpop.f32.mrb[0].mxu0
      %v562 = vpop.f32.mrb[0].mxu0
      %v563 = vadd.f32 %v305, %v562
      %v564 = vpop.f32.mrb[0].mxu0
      %565 = vmatprep.mubr.bf16.mxu0 0
      %566 = vmatmul.mubr.bf16.gmra.mrb[0].mxu0 %v391
      %v567 = vpop.f32.mrb[0].mxu0
      %v568 = vadd.f32 %v305, %v567
      %v569 = vpop.f32.mrb[0].mxu0
      %v570 = vpop.f32.mrb[0].mxu0
      %v571 = vadd.f32 %v305, %v570
      %v572 = vpop.f32.mrb[0].mxu0
      %573 = vmatprep.mubr.bf16.mxu0 0
      %574 = vmatmul.mubr.bf16.gmra.mrb[0].mxu0 %v392
      %v575 = vpop.f32.mrb[0].mxu0
      %v576 = vadd.f32 %v305, %v575
      %v577 = vpop.f32.mrb[0].mxu0
      %v578 = vpop.f32.mrb[0].mxu0
      %v579 = vadd.f32 %v305, %v578
      %v580 = vpop.f32.mrb[0].mxu0
      %581 = vmatprep.mubr.bf16.mxu0 0
      %582 = vmatmul.mubr.bf16.gmra.mrb[0].mxu0 %v393
      %v583 = vpop.f32.mrb[0].mxu0
      %v584 = vadd.f32 %v305, %v583
      %v585 = vpop.f32.mrb[0].mxu0
      %v586 = vpop.f32.mrb[0].mxu0
      %v587 = vadd.f32 %v305, %v586
      %v588 = vpop.f32.mrb[0].mxu0
      %589 = vmatprep.mubr.bf16.mxu0 0
      %590 = vmatmul.mubr.bf16.gmra.mrb[0].mxu0 %v394
      %v591 = vpop.f32.mrb[0].mxu0
      %v592 = vadd.f32 %v305, %v591
      %v593 = vpop.f32.mrb[0].mxu0
      %v594 = vpop.f32.mrb[0].mxu0
      %v595 = vadd.f32 %v305, %v594
      %v596 = vpop.f32.mrb[0].mxu0
      %597 = vmatprep.mubr.bf16.mxu0 0
      %598 = vmatmul.mubr.bf16.gmra.mrb[0].mxu0 %v395
      %v599 = vpop.f32.mrb[0].mxu0
      %v600 = vadd.f32 %v305, %v599
      %v601 = vpop.f32.mrb[0].mxu0
      %v602 = vpop.f32.mrb[0].mxu0
      %v603 = vadd.f32 %v305, %v602
      %v604 = vpop.f32.mrb[0].mxu0
      %605 = vmatprep.mubr.bf16.mxu0 0
      %606 = vmatmul.mubr.bf16.gmra.mrb[0].mxu0 %v396
      %v607 = vpop.f32.mrb[0].mxu0
      %v608 = vadd.f32 %v305, %v607
      %v609 = vpop.f32.mrb[0].mxu0
      %v610 = vpop.f32.mrb[0].mxu0
      %v611 = vadd.f32 %v305, %v610
      %v612 = vpop.f32.mrb[0].mxu0
      %613 = vmatprep.mubr.bf16.mxu0 0
      %614 = vmatmul.mubr.bf16.gmra.mrb[0].mxu0 %v397
      %v615 = vpop.f32.mrb[0].mxu0
      %v616 = vadd.f32 %v305, %v615
      %v617 = vpop.f32.mrb[0].mxu0
      %v618 = vpop.f32.mrb[0].mxu0
      %v619 = vadd.f32 %v305, %v618
      %v620 = vpop.f32.mrb[0].mxu0
      %621 = vmatprep.mubr.bf16.mxu0 0
      %622 = vmatmul.mubr.bf16.gmra.mrb[0].mxu0 %v398
      %v623 = vpop.f32.mrb[0].mxu0
      %v624 = vadd.f32 %v305, %v623
      %v625 = vpop.f32.mrb[0].mxu0
      %v626 = vpop.f32.mrb[0].mxu0
      %v627 = vadd.f32 %v305, %v626
      %v628 = vpop.f32.mrb[0].mxu0
      %629 = vmatprep.mubr.bf16.mxu0 0
      %630 = vmatmul.mubr.bf16.gmra.mrb[0].mxu0 %v399
      %v631 = vpop.f32.mrb[0].mxu0
      %v632 = vadd.f32 %v305, %v631
      %v633 = vpop.f32.mrb[0].mxu0
      %v634 = vpop.f32.mrb[0].mxu0
      %v635 = vadd.f32 %v305, %v634
      %v636 = vpop.f32.mrb[0].mxu0
      %637 = vmatprep.mubr.bf16.mxu0 0
      %638 = vmatmul.mubr.bf16.gmra.mrb[0].mxu0 %v400
      %v639 = vpop.f32.mrb[0].mxu0
      %v640 = vadd.f32 %v305, %v639
      %v641 = vpop.f32.mrb[0].mxu0
      %v642 = vpop.f32.mrb[0].mxu0
      %v643 = vadd.f32 %v305, %v642
      %v644 = vpop.f32.mrb[0].mxu0
      %645 = vmatprep.mubr.bf16.mxu0 0
      %646 = vmatmul.mubr.bf16.gmra.mrb[0].mxu0 %v401
      %v647 = vpop.f32.mrb[0].mxu0
      %v648 = vadd.f32 %v305, %v647
      %v649 = vpop.f32.mrb[0].mxu0
      %v650 = vpop.f32.mrb[0].mxu0
      %v651 = vadd.f32 %v305, %v650
      %v652 = vpop.f32.mrb[0].mxu0
      %653 = vdwg.mxu0
      %v654 = vmax.f32 %v504, 0.0
      %v655 = vmax.f32 %v507, 0.0
      %v656 = vmax.f32 %v512, 0.0
      %v657 = vmax.f32 %v515, 0.0
      %v658 = vmax.f32 %v520, 0.0
      %v659 = vmax.f32 %v523, 0.0
      %v660 = vmax.f32 %v528, 0.0
      %v661 = vmax.f32 %v531, 0.0
      %v662 = vmax.f32 %v536, 0.0
      %v663 = vmax.f32 %v539, 0.0
      %v664 = vmax.f32 %v544, 0.0
      %v665 = vmax.f32 %v547, 0.0
      %v666 = vmax.f32 %v552, 0.0
      %v667 = vmax.f32 %v555, 0.0
      %v668 = vmax.f32 %v560, 0.0
      %v669 = vmax.f32 %v563, 0.0
      %v670 = vmax.f32 %v568, 0.0
      %v671 = vmax.f32 %v571, 0.0
      %v672 = vmax.f32 %v576, 0.0
      %v673 = vmax.f32 %v579, 0.0
      %v674 = vmax.f32 %v584, 0.0
      %v675 = vmax.f32 %v587, 0.0
      %v676 = vmax.f32 %v592, 0.0
      %v677 = vmax.f32 %v595, 0.0
      %v678 = vmax.f32 %v600, 0.0
      %v679 = vmax.f32 %v603, 0.0
      %v680 = vmax.f32 %v608, 0.0
      %v681 = vmax.f32 %v611, 0.0
      %v682 = vmax.f32 %v616, 0.0
      %v683 = vmax.f32 %v619, 0.0
      %v684 = vmax.f32 %v624, 0.0
      %v685 = vmax.f32 %v627, 0.0
      %v686 = vmax.f32 %v632, 0.0
      %v687 = vmax.f32 %v635, 0.0
      %v688 = vmax.f32 %v640, 0.0
      %v689 = vmax.f32 %v643, 0.0
      %v690 = vmax.f32 %v648, 0.0
      %v691 = vmax.f32 %v651, 0.0
      %v692 = vpack.c.bf16 %v655, %v654
      %v693 = vpack.c.bf16 %v657, %v656
      %v694 = vpack.c.bf16 %v659, %v658
      %v695 = vpack.c.bf16 %v661, %v660
      %v696 = vpack.c.bf16 %v663, %v662
      %v697 = vpack.c.bf16 %v665, %v664
      %v698 = vpack.c.bf16 %v667, %v666
      %v699 = vpack.c.bf16 %v669, %v668
      %v700 = vpack.c.bf16 %v671, %v670
      %v701 = vpack.c.bf16 %v673, %v672
      %v702 = vpack.c.bf16 %v675, %v674
      %v703 = vpack.c.bf16 %v677, %v676
      %v704 = vpack.c.bf16 %v679, %v678
      %v705 = vpack.c.bf16 %v681, %v680
      %v706 = vpack.c.bf16 %v683, %v682
      %v707 = vpack.c.bf16 %v685, %v684
      %v708 = vpack.c.bf16 %v687, %v686
      %v709 = vpack.c.bf16 %v689, %v688
      %v710 = vpack.c.bf16 %v691, %v690
      %v730 = vunpack.c.l.b16 %v692
      %v731 = vunpack.c.h.b16 %v692
      %v732 = vunpack.c.l.b16 %v693
      %v733 = vunpack.c.h.b16 %v693
      %v734 = vunpack.c.l.b16 %v694
      %v735 = vunpack.c.h.b16 %v694
      %v736 = vunpack.c.l.b16 %v695
      %v737 = vunpack.c.h.b16 %v695
      %v738 = vunpack.c.l.b16 %v696
      %v739 = vunpack.c.h.b16 %v696
      %v740 = vunpack.c.l.b16 %v697
      %v741 = vunpack.c.h.b16 %v697
      %v742 = vunpack.c.l.b16 %v698
      %v743 = vunpack.c.h.b16 %v698
      %v744 = vunpack.c.l.b16 %v699
      %v745 = vunpack.c.h.b16 %v699
      %v746 = vunpack.c.l.b16 %v700
      %v747 = vunpack.c.h.b16 %v700
      %v748 = vunpack.c.l.b16 %v701
      %v749 = vunpack.c.h.b16 %v701
      %v750 = vunpack.c.l.b16 %v702
      %v751 = vunpack.c.h.b16 %v702
      %v752 = vunpack.c.l.b16 %v703
      %v753 = vunpack.c.h.b16 %v703
      %v754 = vunpack.c.l.b16 %v704
      %v755 = vunpack.c.h.b16 %v704
      %v756 = vunpack.c.l.b16 %v705
      %v757 = vunpack.c.h.b16 %v705
      %v758 = vunpack.c.l.b16 %v706
      %v759 = vunpack.c.h.b16 %v706
      %v760 = vunpack.c.l.b16 %v707
      %v761 = vunpack.c.h.b16 %v707
      %v762 = vunpack.c.l.b16 %v708
      %v763 = vunpack.c.h.b16 %v708
      %v764 = vunpack.c.l.b16 %v709
      %v765 = vunpack.c.h.b16 %v709
      %v766 = vunpack.c.l.b16 %v710
      %v767 = vunpack.c.h.b16 %v710
      %v768 = vpack.c.b16 %v730, %v730
      %v769 = vpack.c.b16 %v731, %v731
      %v770 = vpack.c.b16 %v732, %v732
      %v771 = vpack.c.b16 %v733, %v733
      %v772 = vpack.c.b16 %v734, %v734
      %v773 = vpack.c.b16 %v735, %v735
      %v774 = vpack.c.b16 %v736, %v736
      %v775 = vpack.c.b16 %v737, %v737
      %v776 = vpack.c.b16 %v738, %v738
      %v777 = vpack.c.b16 %v739, %v739
      %v778 = vpack.c.b16 %v740, %v740
      %v779 = vpack.c.b16 %v741, %v741
      %v780 = vpack.c.b16 %v742, %v742
      %v781 = vpack.c.b16 %v743, %v743
      %v782 = vpack.c.b16 %v744, %v744
      %v783 = vpack.c.b16 %v745, %v745
      %v784 = vpack.c.b16 %v746, %v746
      %v785 = vpack.c.b16 %v747, %v747
      %v786 = vpack.c.b16 %v748, %v748
      %v787 = vpack.c.b16 %v749, %v749
      %v788 = vpack.c.b16 %v750, %v750
      %v789 = vpack.c.b16 %v751, %v751
      %v790 = vpack.c.b16 %v752, %v752
      %v791 = vpack.c.b16 %v753, %v753
      %v792 = vpack.c.b16 %v754, %v754
      %v793 = vpack.c.b16 %v755, %v755
      %v794 = vpack.c.b16 %v756, %v756
      %v795 = vpack.c.b16 %v757, %v757
      %v796 = vpack.c.b16 %v758, %v758
      %v797 = vpack.c.b16 %v759, %v759
      %v798 = vpack.c.b16 %v760, %v760
      %v799 = vpack.c.b16 %v761, %v761
      %v800 = vpack.c.b16 %v762, %v762
      %v801 = vpack.c.b16 %v763, %v763
      %v802 = vpack.c.b16 %v764, %v764
      %v803 = vpack.c.b16 %v765, %v765
      %v804 = vpack.c.b16 %v766, %v766
      %v805 = vpack.c.b16 %v767, %v767
      %844 = vst [vmem:[%s237] sm:$0xf] %v768
      %845 = vst [vmem:[%s237 + $0x4] sm:$0xf] %v769
      %846 = vst [vmem:[%s237 + $0x8] sm:$0xf] %v770
      %847 = vst [vmem:[%s237 + $0xc] sm:$0xf] %v771
      %848 = vst [vmem:[%s237 + $0x10] sm:$0xf] %v772
      %849 = vst [vmem:[%s237 + $0x14] sm:$0xf] %v773
      %850 = vst [vmem:[%s237 + $0x18] sm:$0xf] %v774
      %851 = vst [vmem:[%s237 + $0x1c] sm:$0xf] %v775
      %852 = vst [vmem:[%s237 + $0x20] sm:$0xf] %v776
      %853 = vst [vmem:[%s237 + $0x24] sm:$0xf] %v777
      %854 = vst [vmem:[%s237 + $0x28] sm:$0xf] %v778
      %855 = vst [vmem:[%s237 + $0x2c] sm:$0xf] %v779
      %856 = vst [vmem:[%s237 + $0x30] sm:$0xf] %v780
      %857 = vst [vmem:[%s237 + $0x34] sm:$0xf] %v781
      %858 = vst [vmem:[%s237 + $0x38] sm:$0xf] %v782
      %859 = vst [vmem:[%s237 + $0x3c] sm:$0xf] %v783
      %860 = vst [vmem:[%s237 + $0x40] sm:$0xf] %v784
      %861 = vst [vmem:[%s237 + $0x44] sm:$0xf] %v785
      %862 = vst [vmem:[%s237 + $0x48] sm:$0xf] %v786
      %863 = vst [vmem:[%s237 + $0x4c] sm:$0xf] %v787
      %864 = vst [vmem:[%s237 + $0x50] sm:$0xf] %v788
      %865 = vst [vmem:[%s237 + $0x54] sm:$0xf] %v789
      %866 = vst [vmem:[%s237 + $0x58] sm:$0xf] %v790
      %867 = vst [vmem:[%s237 + $0x5c] sm:$0xf] %v791
      %868 = vst [vmem:[%s237 + $0x60] sm:$0xf] %v792
      %869 = vst [vmem:[%s237 + $0x64] sm:$0xf] %v793
      %870 = vst [vmem:[%s237 + $0x68] sm:$0xf] %v794
      %871 = vst [vmem:[%s237 + $0x6c] sm:$0xf] %v795
      %872 = vst [vmem:[%s237 + $0x70] sm:$0xf] %v796
      %873 = vst [vmem:[%s237 + $0x74] sm:$0xf] %v797
      %874 = vst [vmem:[%s237 + $0x78] sm:$0xf] %v798
      %875 = vst [vmem:[%s237 + $0x7c] sm:$0xf] %v799
      %876 = vst [vmem:[%s237 + $0x80] sm:$0xf] %v800
      %877 = vst [vmem:[%s237 + $0x84] sm:$0xf] %v801
      %878 = vst [vmem:[%s237 + $0x88] sm:$0xf] %v802
      %879 = vst [vmem:[%s237 + $0x8c] sm:$0xf] %v803
      %880 = vst [vmem:[%s237 + $0x90] sm:$0xf] %v804
      %881 = vst [vmem:[%s237 + $0x94] sm:$0xf] %v805
      %v882 = vadd.f32 %v654, %v655
      %v883 = vadd.f32 %v882, %v656
      %v884 = vadd.f32 %v883, %v657
      %v885 = vadd.f32 %v884, %v658
      %v886 = vadd.f32 %v885, %v659
      %v887 = vadd.f32 %v886, %v660
      %v888 = vadd.f32 %v887, %v661
      %v889 = vadd.f32 %v888, %v662
      %v890 = vadd.f32 %v889, %v663
      %v891 = vadd.f32 %v890, %v664
      %v892 = vadd.f32 %v891, %v665
      %v893 = vadd.f32 %v892, %v666
      %v894 = vadd.f32 %v893, %v667
      %v895 = vadd.f32 %v894, %v668
      %v896 = vadd.f32 %v895, %v669
      %v897 = vadd.f32 %v896, %v670
      %v898 = vadd.f32 %v897, %v671
      %v899 = vadd.f32 %v898, %v672
      %v900 = vadd.f32 %v899, %v673
      %v901 = vadd.f32 %v900, %v674
      %v902 = vadd.f32 %v901, %v675
      %v903 = vadd.f32 %v902, %v676
      %v904 = vadd.f32 %v903, %v677
      %v905 = vadd.f32 %v904, %v678
      %v906 = vadd.f32 %v905, %v679
      %v907 = vadd.f32 %v906, %v680
      %v908 = vadd.f32 %v907, %v681
      %v909 = vadd.f32 %v908, %v682
      %v910 = vadd.f32 %v909, %v683
      %v911 = vadd.f32 %v910, %v684
      %v912 = vadd.f32 %v911, %v685
      %v913 = vadd.f32 %v912, %v686
      %v914 = vadd.f32 %v913, %v687
      %v915 = vadd.f32 %v914, %v688
      %v916 = vadd.f32 %v915, %v689
      %v917 = vadd.f32 %v916, %v690
      %v918 = vadd.f32 %v917, %v691
      %v919 = vrot.slane %v918, 4
      %v920 = vadd.f32 %v918, %v919
      %v921 = vrot.slane %v920, 2
      %v922 = vadd.f32 %v920, %v921
      %v923 = vrot.slane %v922, 1
      %v924 = vadd.f32 %v922, %v923
      %925 = vst [vmem:[%s241] sm:$0x1] %v924
      %v926 = vmul.f32 %v654, %v654
      %v927 = vmul.f32 %v655, %v655
      %v928 = vmul.f32 %v656, %v656
      %v929 = vmul.f32 %v657, %v657
      %v930 = vmul.f32 %v658, %v658
      %v931 = vmul.f32 %v659, %v659
      %v932 = vmul.f32 %v660, %v660
      %v933 = vmul.f32 %v661, %v661
      %v934 = vmul.f32 %v662, %v662
      %v935 = vmul.f32 %v663, %v663
      %v936 = vmul.f32 %v664, %v664
      %v937 = vmul.f32 %v665, %v665
      %v938 = vmul.f32 %v666, %v666
      %v939 = vmul.f32 %v667, %v667
      %v940 = vmul.f32 %v668, %v668
      %v941 = vmul.f32 %v669, %v669
      %v942 = vmul.f32 %v670, %v670
      %v943 = vmul.f32 %v671, %v671
      %v944 = vmul.f32 %v672, %v672
      %v945 = vmul.f32 %v673, %v673
      %v946 = vmul.f32 %v674, %v674
      %v947 = vmul.f32 %v675, %v675
      %v948 = vmul.f32 %v676, %v676
      %v949 = vmul.f32 %v677, %v677
      %v950 = vmul.f32 %v678, %v678
      %v951 = vmul.f32 %v679, %v679
      %v952 = vmul.f32 %v680, %v680
      %v953 = vmul.f32 %v681, %v681
      %v954 = vmul.f32 %v682, %v682
      %v955 = vmul.f32 %v683, %v683
      %v956 = vmul.f32 %v684, %v684
      %v957 = vmul.f32 %v685, %v685
      %v958 = vmul.f32 %v686, %v686
      %v959 = vmul.f32 %v687, %v687
      %v960 = vmul.f32 %v688, %v688
      %v961 = vmul.f32 %v689, %v689
      %v962 = vmul.f32 %v690, %v690
      %v963 = vmul.f32 %v691, %v691
      %v964 = vadd.f32 %v926, %v927
      %v965 = vadd.f32 %v964, %v928
      %v966 = vadd.f32 %v965, %v929
      %v967 = vadd.f32 %v966, %v930
      %v968 = vadd.f32 %v967, %v931
      %v969 = vadd.f32 %v968, %v932
      %v970 = vadd.f32 %v969, %v933
      %v971 = vadd.f32 %v970, %v934
      %v972 = vadd.f32 %v971, %v935
      %v973 = vadd.f32 %v972, %v936
      %v974 = vadd.f32 %v973, %v937
      %v975 = vadd.f32 %v974, %v938
      %v976 = vadd.f32 %v975, %v939
      %v977 = vadd.f32 %v976, %v940
      %v978 = vadd.f32 %v977, %v941
      %v979 = vadd.f32 %v978, %v942
      %v980 = vadd.f32 %v979, %v943
      %v981 = vadd.f32 %v980, %v944
      %v982 = vadd.f32 %v981, %v945
      %v983 = vadd.f32 %v982, %v946
      %v984 = vadd.f32 %v983, %v947
      %v985 = vadd.f32 %v984, %v948
      %v986 = vadd.f32 %v985, %v949
      %v987 = vadd.f32 %v986, %v950
      %v988 = vadd.f32 %v987, %v951
      %v989 = vadd.f32 %v988, %v952
      %v990 = vadd.f32 %v989, %v953
      %v991 = vadd.f32 %v990, %v954
      %v992 = vadd.f32 %v991, %v955
      %v993 = vadd.f32 %v992, %v956
      %v994 = vadd.f32 %v993, %v957
      %v995 = vadd.f32 %v994, %v958
      %v996 = vadd.f32 %v995, %v959
      %v997 = vadd.f32 %v996, %v960
      %v998 = vadd.f32 %v997, %v961
      %v999 = vadd.f32 %v998, %v962
      %v1000 = vadd.f32 %v999, %v963
      %v1001 = vrot.slane %v1000, 4
      %v1002 = vadd.f32 %v1000, %v1001
      %v1003 = vrot.slane %v1002, 2
      %v1004 = vadd.f32 %v1002, %v1003
      %v1005 = vrot.slane %v1004, 1
      %v1006 = vadd.f32 %v1004, %v1005
      %1007 = vst [vmem:[%s244] sm:$0x1] %v1006
      %s1008 = smul.u32 38, %s17
      %p1009 = scmp.lt.s32.totalorder %s1008, 75
      %s1010 = scalar_select %p1009, %s1008, 75
      %s1011 = smul.addr %s1010, 4
      %s1012 = scalar_lea.vmem %s3, %s1011
      %p1013 = scmp.lt.s32.totalorder %s17, 1
      %s1014 = scalar_select %p1013, %s17, 1
      %s1015 = scalar_lea.vmem %s4, %s1014
      %p1016 = scmp.lt.s32.totalorder %s17, 1
      %s1017 = scalar_select %p1016, %s17, 1
      %s1018 = scalar_lea.vmem %s5, %s1017
      // Predicated region
      $region33: #{encoder_forward.4} parent=31 // pred_check
        %p1019 = pneg %p103
      $region34: #{encoder_forward.4} parent=31 // pred_check_branch
        %1021 = sbr.rel (%p1019) target = $region36
      $region35: #{encoder_forward.4} parent=31 // pred_region
        %s1022 = smul.u32 38, %s17
      $region36: #{encoder_forward.4} parent=31 // pred_fallthru
        _
      // Predicated region
      $region37: #{encoder_forward.4} parent=31 // pred_check
        %p1023 = pneg %p129
      $region38: #{encoder_forward.4} parent=31 // pred_check_branch
        %1025 = sbr.rel (%p1023) target = $region40
      $region39: #{encoder_forward.4} parent=31 // pred_region
        _
      $region40: #{encoder_forward.4} parent=31 // pred_fallthru
        _
      // Predicated region
      $region41: #{encoder_forward.4} parent=31 // pred_check
        %p1026 = pneg %p155
      $region42: #{encoder_forward.4} parent=31 // pred_check_branch
        %1028 = sbr.rel (%p1026) target = $region44
      $region43: #{encoder_forward.4} parent=31 // pred_region
        _
      $region44: #{encoder_forward.4} parent=31 // pred_fallthru
        _
    $region32: #{encoder_forward.4} parent=5 // pred_fallthru
      _
    %p1029 = scmp.le.s32.totalorder 2, %s12
    // Predicated region
    $region45: #{encoder_forward.4} parent=5 // pred_check
      %p1030 = pneg %p1029
    $region46: #{encoder_forward.4} parent=5 // pred_check_branch
      %1032 = sbr.rel (%p1030) target = $region48
    $region47: #{encoder_forward.4} parent=5 // pred_region
      %s1033 = ssub.s32 %s12, 2
      // Predicated region
      $region49: #{encoder_forward.4} parent=47 // pred_check
        %p1034 = pneg %p109
      $region50: #{encoder_forward.4} parent=47 // pred_check_branch
        %1036 = sbr.rel (%p1034) target = $region52
      $region51: #{encoder_forward.4} parent=47 // pred_region
        %s1037 = smul.u32 38, %s18
        %p1038 = scmp.lt.s32.totalorder %s1037, 75
        %s1039 = scalar_select %p1038, %s1037, 75
        %s1040 = smul.addr %s1039, 4
        %s1041 = scalar_lea.vmem %s3, %s1040
      $region52: #{encoder_forward.4} parent=47 // pred_fallthru
        _
      // Predicated region
      $region53: #{encoder_forward.4} parent=47 // pred_check
        %p1042 = pneg %p135
      $region54: #{encoder_forward.4} parent=47 // pred_check_branch
        %1044 = sbr.rel (%p1042) target = $region56
      $region55: #{encoder_forward.4} parent=47 // pred_region
        %p1045 = scmp.lt.s32.totalorder %s18, 1
        %s1046 = scalar_select %p1045, %s18, 1
        %s1047 = scalar_lea.vmem %s4, %s1046
      $region56: #{encoder_forward.4} parent=47 // pred_fallthru
        _
      // Predicated region
      $region57: #{encoder_forward.4} parent=47 // pred_check
        %p1048 = pneg %p161
      $region58: #{encoder_forward.4} parent=47 // pred_check_branch
        %1050 = sbr.rel (%p1048) target = $region60
      $region59: #{encoder_forward.4} parent=47 // pred_region
        %p1051 = scmp.lt.s32.totalorder %s18, 1
        %s1052 = scalar_select %p1051, %s18, 1
        %s1053 = scalar_lea.vmem %s5, %s1052
      $region60: #{encoder_forward.4} parent=47 // pred_fallthru
        _
    $region48: #{encoder_forward.4} parent=5 // pred_fallthru
      _
  $region6: #{encoder_forward.4} parent=0 // loop_footer
    %s16 = sadd.s32 1, %s12
  $region7: #{encoder_forward.4} parent=0 // loop_footer_branch
    %11 = sbr.rel target = $region3
  $region8: #{encoder_forward.4} parent=0 // loop_exit
    _

// kernel: encoder_forward.5
$region0: #{encoder_forward.5}
  #allocation0 [shape = 'u32[]', space=smem, size = 0x4, offset = 0x4, fixed_abs, tag = 'smem constant byte address 0x4 - core index']
  #allocation1 [shape = 'u32[144,128]{1,0:T(1,128)}', space=vmem, size = 0x12000, scoped, tag = 'internal scratch']
  %s0 = inlined_call_operand.vmem [shape: bf16[112,896], index: 0, kind: input, shape index: {}]
  %s1 = inlined_call_operand.vmem [shape: bf16[896,128], index: 1, kind: input, shape index: {}]
  %s2 = inlined_call_operand.vmem [shape: f32[1,128], index: 2, kind: input, shape index: {}]
  %s3 = inlined_call_operand.vmem [shape: bf16[112,128], index: 3, kind: output, shape index: {0}]
  %s4 = inlined_call_operand.vmem [shape: f32[1,1,128], index: 4, kind: output, shape index: {1}]
  %s5 = inlined_call_operand.vmem [shape: f32[1,1,128], index: 5, kind: output, shape index: {2}]
  %6 = xla_tuple %s3, %s4, %s5
  %s7 = sld [smem:[#allocation0]]
  $region38: #{encoder_forward.5} parent=0
    _
  %s9 = ssub.s32 1, %s7
  %s10 = scalar_select 0, %s9, %s7
  // Predicated region
  $region2: #{encoder_forward.5} parent=0 // pred_check
    _
  $region3: #{encoder_forward.5} parent=0 // pred_check_branch
    %12 = sbr.rel (0) target = $region5
  $region4: #{encoder_forward.5} parent=0 // pred_region
    _
  $region5: #{encoder_forward.5} parent=0 // pred_fallthru
    _
  // Predicated region
  $region6: #{encoder_forward.5} parent=0 // pred_check
    _
  $region7: #{encoder_forward.5} parent=0 // pred_check_branch
    %14 = sbr.rel (0) target = $region9
  $region8: #{encoder_forward.5} parent=0 // pred_region
    _
  $region9: #{encoder_forward.5} parent=0 // pred_fallthru
    _
  // Predicated region
  $region10: #{encoder_forward.5} parent=0 // pred_check
    _
  $region11: #{encoder_forward.5} parent=0 // pred_check_branch
    %16 = sbr.rel (0) target = $region13
  $region12: #{encoder_forward.5} parent=0 // pred_region
    _
  $region13: #{encoder_forward.5} parent=0 // pred_fallthru
    _
  %v18 = vld [vmem:[%s0] sm:$0xff]
  %v19 = vld [vmem:[%s0 + $0x8] sm:$0xff]
  %v20 = vld [vmem:[%s0 + $0x10] sm:$0xff]
  %v21 = vld [vmem:[%s0 + $0x18] sm:$0xf]
  %v22 = vld [vmem:[%s0 + $0x1c] sm:$0xff]
  %v23 = vld [vmem:[%s0 + $0x24] sm:$0xff]
  %v24 = vld [vmem:[%s0 + $0x2c] sm:$0xff]
  %v25 = vld [vmem:[%s0 + $0x34] sm:$0xf]
  %v26 = vld [vmem:[%s0 + $0x38] sm:$0xff]
  %v27 = vld [vmem:[%s0 + $0x40] sm:$0xff]
  %v28 = vld [vmem:[%s0 + $0x48] sm:$0xff]
  %v29 = vld [vmem:[%s0 + $0x50] sm:$0xf]
  %v30 = vld [vmem:[%s0 + $0x54] sm:$0xff]
  %v31 = vld [vmem:[%s0 + $0x5c] sm:$0xff]
  %v32 = vld [vmem:[%s0 + $0x64] sm:$0xff]
  %v33 = vld [vmem:[%s0 + $0x6c] sm:$0xf]
  %v34 = vld [vmem:[%s0 + $0x70] sm:$0xff]
  %v35 = vld [vmem:[%s0 + $0x78] sm:$0xff]
  %v36 = vld [vmem:[%s0 + $0x80] sm:$0xff]
  %v37 = vld [vmem:[%s0 + $0x88] sm:$0xf]
  %v38 = vld [vmem:[%s0 + $0x8c] sm:$0xff]
  %v39 = vld [vmem:[%s0 + $0x94] sm:$0xff]
  %v40 = vld [vmem:[%s0 + $0x9c] sm:$0xff]
  %v41 = vld [vmem:[%s0 + $0xa4] sm:$0xf]
  %v42 = vld [vmem:[%s0 + $0xa8] sm:$0xff]
  %v43 = vld [vmem:[%s0 + $0xb0] sm:$0xff]
  %v44 = vld [vmem:[%s0 + $0xb8] sm:$0xff]
  %v45 = vld [vmem:[%s0 + $0xc0] sm:$0xf]
  %v46 = vld [vmem:[%s0 + $0xc4] sm:$0xff]
  %v47 = vld [vmem:[%s0 + $0xcc] sm:$0xff]
  %v48 = vld [vmem:[%s0 + $0xd4] sm:$0xff]
  %v49 = vld [vmem:[%s0 + $0xdc] sm:$0xf]
  %v50 = vld [vmem:[%s0 + $0xe0] sm:$0xff]
  %v51 = vld [vmem:[%s0 + $0xe8] sm:$0xff]
  %v52 = vld [vmem:[%s0 + $0xf0] sm:$0xff]
  %v53 = vld [vmem:[%s0 + $0xf8] sm:$0xf]
  %v54 = vld [vmem:[%s0 + $0xfc] sm:$0xff]
  %v55 = vld [vmem:[%s0 + $0x104] sm:$0xff]
  %v56 = vld [vmem:[%s0 + $0x10c] sm:$0xff]
  %v57 = vld [vmem:[%s0 + $0x114] sm:$0xf]
  %v58 = vld [vmem:[%s0 + $0x118] sm:$0xff]
  %v59 = vld [vmem:[%s0 + $0x120] sm:$0xff]
  %v60 = vld [vmem:[%s0 + $0x128] sm:$0xff]
  %v61 = vld [vmem:[%s0 + $0x130] sm:$0xf]
  %v62 = vld [vmem:[%s0 + $0x134] sm:$0xff]
  %v63 = vld [vmem:[%s0 + $0x13c] sm:$0xff]
  %v64 = vld [vmem:[%s0 + $0x144] sm:$0xff]
  %v65 = vld [vmem:[%s0 + $0x14c] sm:$0xf]
  %v66 = vld [vmem:[%s0 + $0x150] sm:$0xff]
  %v67 = vld [vmem:[%s0 + $0x158] sm:$0xff]
  %v68 = vld [vmem:[%s0 + $0x160] sm:$0xff]
  %v69 = vld [vmem:[%s0 + $0x168] sm:$0xf]
  %v70 = vld [vmem:[%s0 + $0x16c] sm:$0xff]
  %v71 = vld [vmem:[%s0 + $0x174] sm:$0xff]
  %v72 = vld [vmem:[%s0 + $0x17c] sm:$0xff]
  %v73 = vld [vmem:[%s0 + $0x184] sm:$0xf]
  %v74 = vld [vmem:[%s1] sm:$0xf]
  %v75 = vld [vmem:[%s1 + $0x4] sm:$0xf]
  %v76 = vld [vmem:[%s1 + $0x8] sm:$0xf]
  %v77 = vld [vmem:[%s1 + $0xc] sm:$0xf]
  %v78 = vld [vmem:[%s1 + $0x10] sm:$0xf]
  %v79 = vld [vmem:[%s1 + $0x14] sm:$0xf]
  %v80 = vld [vmem:[%s1 + $0x18] sm:$0xf]
  %v81 = vld [vmem:[%s1 + $0x1c] sm:$0xf]
  %v82 = vld [vmem:[%s1 + $0x20] sm:$0xf]
  %v83 = vld [vmem:[%s1 + $0x24] sm:$0xf]
  %v84 = vld [vmem:[%s1 + $0x28] sm:$0xf]
  %v85 = vld [vmem:[%s1 + $0x2c] sm:$0xf]
  %v86 = vld [vmem:[%s1 + $0x30] sm:$0xf]
  %v87 = vld [vmem:[%s1 + $0x34] sm:$0xf]
  %v88 = vld [vmem:[%s1 + $0x38] sm:$0xf]
  %v89 = vld [vmem:[%s1 + $0x3c] sm:$0xf]
  %v90 = vld [vmem:[%s1 + $0x40] sm:$0xf]
  %v91 = vld [vmem:[%s1 + $0x44] sm:$0xf]
  %v92 = vld [vmem:[%s1 + $0x48] sm:$0xf]
  %v93 = vld [vmem:[%s1 + $0x4c] sm:$0xf]
  %v94 = vld [vmem:[%s1 + $0x50] sm:$0xf]
  %v95 = vld [vmem:[%s1 + $0x54] sm:$0xf]
  %v96 = vld [vmem:[%s1 + $0x58] sm:$0xf]
  %v97 = vld [vmem:[%s1 + $0x5c] sm:$0xf]
  %v98 = vld [vmem:[%s1 + $0x60] sm:$0xf]
  %v99 = vld [vmem:[%s1 + $0x64] sm:$0xf]
  %v100 = vld [vmem:[%s1 + $0x68] sm:$0xf]
  %v101 = vld [vmem:[%s1 + $0x6c] sm:$0xf]
  %v102 = vld [vmem:[%s1 + $0x70] sm:$0xf]
  %v103 = vld [vmem:[%s1 + $0x74] sm:$0xf]
  %v104 = vld [vmem:[%s1 + $0x78] sm:$0xf]
  %v105 = vld [vmem:[%s1 + $0x7c] sm:$0xf]
  %v106 = vld [vmem:[%s1 + $0x80] sm:$0xf]
  %v107 = vld [vmem:[%s1 + $0x84] sm:$0xf]
  %v108 = vld [vmem:[%s1 + $0x88] sm:$0xf]
  %v109 = vld [vmem:[%s1 + $0x8c] sm:$0xf]
  %v110 = vld [vmem:[%s1 + $0x90] sm:$0xf]
  %v111 = vld [vmem:[%s1 + $0x94] sm:$0xf]
  %v112 = vld [vmem:[%s1 + $0x98] sm:$0xf]
  %v113 = vld [vmem:[%s1 + $0x9c] sm:$0xf]
  %v114 = vld [vmem:[%s1 + $0xa0] sm:$0xf]
  %v115 = vld [vmem:[%s1 + $0xa4] sm:$0xf]
  %v116 = vld [vmem:[%s1 + $0xa8] sm:$0xf]
  %v117 = vld [vmem:[%s1 + $0xac] sm:$0xf]
  %v118 = vld [vmem:[%s1 + $0xb0] sm:$0xf]
  %v119 = vld [vmem:[%s1 + $0xb4] sm:$0xf]
  %v120 = vld [vmem:[%s1 + $0xb8] sm:$0xf]
  %v121 = vld [vmem:[%s1 + $0xbc] sm:$0xf]
  %v122 = vld [vmem:[%s1 + $0xc0] sm:$0xf]
  %v123 = vld [vmem:[%s1 + $0xc4] sm:$0xf]
  %v124 = vld [vmem:[%s1 + $0xc8] sm:$0xf]
  %v125 = vld [vmem:[%s1 + $0xcc] sm:$0xf]
  %v126 = vld [vmem:[%s1 + $0xd0] sm:$0xf]
  %v127 = vld [vmem:[%s1 + $0xd4] sm:$0xf]
  %v128 = vld [vmem:[%s1 + $0xd8] sm:$0xf]
  %v129 = vld [vmem:[%s1 + $0xdc] sm:$0xf]
  %v130 = vld [vmem:[%s1 + $0xe0] sm:$0xf]
  %v131 = vld [vmem:[%s1 + $0xe4] sm:$0xf]
  %v132 = vld [vmem:[%s1 + $0xe8] sm:$0xf]
  %v133 = vld [vmem:[%s1 + $0xec] sm:$0xf]
  %v134 = vld [vmem:[%s1 + $0xf0] sm:$0xf]
  %v135 = vld [vmem:[%s1 + $0xf4] sm:$0xf]
  %v136 = vld [vmem:[%s1 + $0xf8] sm:$0xf]
  %v137 = vld [vmem:[%s1 + $0xfc] sm:$0xf]
  %v138 = vld [vmem:[%s1 + $0x100] sm:$0xf]
  %v139 = vld [vmem:[%s1 + $0x104] sm:$0xf]
  %v140 = vld [vmem:[%s1 + $0x108] sm:$0xf]
  %v141 = vld [vmem:[%s1 + $0x10c] sm:$0xf]
  %v142 = vld [vmem:[%s1 + $0x110] sm:$0xf]
  %v143 = vld [vmem:[%s1 + $0x114] sm:$0xf]
  %v144 = vld [vmem:[%s1 + $0x118] sm:$0xf]
  %v145 = vld [vmem:[%s1 + $0x11c] sm:$0xf]
  %v146 = vld [vmem:[%s1 + $0x120] sm:$0xf]
  %v147 = vld [vmem:[%s1 + $0x124] sm:$0xf]
  %v148 = vld [vmem:[%s1 + $0x128] sm:$0xf]
  %v149 = vld [vmem:[%s1 + $0x12c] sm:$0xf]
  %v150 = vld [vmem:[%s1 + $0x130] sm:$0xf]
  %v151 = vld [vmem:[%s1 + $0x134] sm:$0xf]
  %v152 = vld [vmem:[%s1 + $0x138] sm:$0xf]
  %v153 = vld [vmem:[%s1 + $0x13c] sm:$0xf]
  %v154 = vld [vmem:[%s1 + $0x140] sm:$0xf]
  %v155 = vld [vmem:[%s1 + $0x144] sm:$0xf]
  %v156 = vld [vmem:[%s1 + $0x148] sm:$0xf]
  %v157 = vld [vmem:[%s1 + $0x14c] sm:$0xf]
  %v158 = vld [vmem:[%s1 + $0x150] sm:$0xf]
  %v159 = vld [vmem:[%s1 + $0x154] sm:$0xf]
  %v160 = vld [vmem:[%s1 + $0x158] sm:$0xf]
  %v161 = vld [vmem:[%s1 + $0x15c] sm:$0xf]
  %v162 = vld [vmem:[%s1 + $0x160] sm:$0xf]
  %v163 = vld [vmem:[%s1 + $0x164] sm:$0xf]
  %v164 = vld [vmem:[%s1 + $0x168] sm:$0xf]
  %v165 = vld [vmem:[%s1 + $0x16c] sm:$0xf]
  %v166 = vld [vmem:[%s1 + $0x170] sm:$0xf]
  %v167 = vld [vmem:[%s1 + $0x174] sm:$0xf]
  %v168 = vld [vmem:[%s1 + $0x178] sm:$0xf]
  %v169 = vld [vmem:[%s1 + $0x17c] sm:$0xf]
  %v170 = vld [vmem:[%s1 + $0x180] sm:$0xf]
  %v171 = vld [vmem:[%s1 + $0x184] sm:$0xf]
  %v172 = vld [vmem:[%s1 + $0x188] sm:$0xf]
  %v173 = vld [vmem:[%s1 + $0x18c] sm:$0xf]
  %v174 = vld [vmem:[%s1 + $0x190] sm:$0xf]
  %v175 = vld [vmem:[%s1 + $0x194] sm:$0xf]
  %v176 = vld [vmem:[%s1 + $0x198] sm:$0xf]
  %v177 = vld [vmem:[%s1 + $0x19c] sm:$0xf]
  %v178 = vld [vmem:[%s1 + $0x1a0] sm:$0xf]
  %v179 = vld [vmem:[%s1 + $0x1a4] sm:$0xf]
  %v180 = vld [vmem:[%s1 + $0x1a8] sm:$0xf]
  %v181 = vld [vmem:[%s1 + $0x1ac] sm:$0xf]
  %v182 = vld [vmem:[%s1 + $0x1b0] sm:$0xf]
  %v183 = vld [vmem:[%s1 + $0x1b4] sm:$0xf]
  %v184 = vld [vmem:[%s1 + $0x1b8] sm:$0xf]
  %v185 = vld [vmem:[%s1 + $0x1bc] sm:$0xf]
  %v186 = vld [vmem:[%s2] sm:$0x1]
  %v188 = vlaneseq
  %v189 = vshrl.u32 %v188, 7
  %v190 = vsub.s32 0, %v189
  %v191 = vrot.slane %v186, %v190
  %v249 = vunpack.c.l.b16 %v18
  %v250 = vunpack.c.h.b16 %v18
  %v251 = vunpack.c.l.b16 %v19
  %v252 = vunpack.c.h.b16 %v19
  %v253 = vunpack.c.l.b16 %v20
  %v254 = vunpack.c.h.b16 %v20
  %v255 = vunpack.c.l.b16 %v21
  %v256 = vunpack.c.l.b16 %v22
  %v257 = vunpack.c.h.b16 %v22
  %v258 = vunpack.c.l.b16 %v23
  %v259 = vunpack.c.h.b16 %v23
  %v260 = vunpack.c.l.b16 %v24
  %v261 = vunpack.c.h.b16 %v24
  %v262 = vunpack.c.l.b16 %v25
  %v263 = vunpack.c.l.b16 %v26
  %v264 = vunpack.c.h.b16 %v26
  %v265 = vunpack.c.l.b16 %v27
  %v266 = vunpack.c.h.b16 %v27
  %v267 = vunpack.c.l.b16 %v28
  %v268 = vunpack.c.h.b16 %v28
  %v269 = vunpack.c.l.b16 %v29
  %v270 = vunpack.c.l.b16 %v30
  %v271 = vunpack.c.h.b16 %v30
  %v272 = vunpack.c.l.b16 %v31
  %v273 = vunpack.c.h.b16 %v31
  %v274 = vunpack.c.l.b16 %v32
  %v275 = vunpack.c.h.b16 %v32
  %v276 = vunpack.c.l.b16 %v33
  %v277 = vunpack.c.l.b16 %v34
  %v278 = vunpack.c.h.b16 %v34
  %v279 = vunpack.c.l.b16 %v35
  %v280 = vunpack.c.h.b16 %v35
  %v281 = vunpack.c.l.b16 %v36
  %v282 = vunpack.c.h.b16 %v36
  %v283 = vunpack.c.l.b16 %v37
  %v284 = vunpack.c.l.b16 %v38
  %v285 = vunpack.c.h.b16 %v38
  %v286 = vunpack.c.l.b16 %v39
  %v287 = vunpack.c.h.b16 %v39
  %v288 = vunpack.c.l.b16 %v40
  %v289 = vunpack.c.h.b16 %v40
  %v290 = vunpack.c.l.b16 %v41
  %v291 = vunpack.c.l.b16 %v42
  %v292 = vunpack.c.h.b16 %v42
  %v293 = vunpack.c.l.b16 %v43
  %v294 = vunpack.c.h.b16 %v43
  %v295 = vunpack.c.l.b16 %v44
  %v296 = vunpack.c.h.b16 %v44
  %v297 = vunpack.c.l.b16 %v45
  %v298 = vunpack.c.l.b16 %v46
  %v299 = vunpack.c.h.b16 %v46
  %v300 = vunpack.c.l.b16 %v47
  %v301 = vunpack.c.h.b16 %v47
  %v302 = vunpack.c.l.b16 %v48
  %v303 = vunpack.c.h.b16 %v48
  %v304 = vunpack.c.l.b16 %v49
  %v305 = vunpack.c.l.b16 %v50
  %v306 = vunpack.c.h.b16 %v50
  %v307 = vunpack.c.l.b16 %v51
  %v308 = vunpack.c.h.b16 %v51
  %v309 = vunpack.c.l.b16 %v52
  %v310 = vunpack.c.h.b16 %v52
  %v311 = vunpack.c.l.b16 %v53
  %v312 = vunpack.c.l.b16 %v54
  %v313 = vunpack.c.h.b16 %v54
  %v314 = vunpack.c.l.b16 %v55
  %v315 = vunpack.c.h.b16 %v55
  %v316 = vunpack.c.l.b16 %v56
  %v317 = vunpack.c.h.b16 %v56
  %v318 = vunpack.c.l.b16 %v57
  %v319 = vunpack.c.l.b16 %v58
  %v320 = vunpack.c.h.b16 %v58
  %v321 = vunpack.c.l.b16 %v59
  %v322 = vunpack.c.h.b16 %v59
  %v323 = vunpack.c.l.b16 %v60
  %v324 = vunpack.c.h.b16 %v60
  %v325 = vunpack.c.l.b16 %v61
  %v326 = vunpack.c.l.b16 %v62
  %v327 = vunpack.c.h.b16 %v62
  %v328 = vunpack.c.l.b16 %v63
  %v329 = vunpack.c.h.b16 %v63
  %v330 = vunpack.c.l.b16 %v64
  %v331 = vunpack.c.h.b16 %v64
  %v332 = vunpack.c.l.b16 %v65
  %v333 = vunpack.c.l.b16 %v66
  %v334 = vunpack.c.h.b16 %v66
  %v335 = vunpack.c.l.b16 %v67
  %v336 = vunpack.c.h.b16 %v67
  %v337 = vunpack.c.l.b16 %v68
  %v338 = vunpack.c.h.b16 %v68
  %v339 = vunpack.c.l.b16 %v69
  %v340 = vunpack.c.l.b16 %v70
  %v341 = vunpack.c.h.b16 %v70
  %v342 = vunpack.c.l.b16 %v71
  %v343 = vunpack.c.h.b16 %v71
  %v344 = vunpack.c.l.b16 %v72
  %v345 = vunpack.c.h.b16 %v72
  %v346 = vunpack.c.l.b16 %v73
  %v347 = vpack.c.b16 %v256, %v249
  %v348 = vpack.c.b16 %v257, %v250
  %v349 = vpack.c.b16 %v258, %v251
  %v350 = vpack.c.b16 %v259, %v252
  %v351 = vpack.c.b16 %v260, %v253
  %v352 = vpack.c.b16 %v261, %v254
  %v353 = vpack.c.b16 %v262, %v255
  %v354 = vpack.c.b16 %v270, %v263
  %v355 = vpack.c.b16 %v271, %v264
  %v356 = vpack.c.b16 %v272, %v265
  %v357 = vpack.c.b16 %v273, %v266
  %v358 = vpack.c.b16 %v274, %v267
  %v359 = vpack.c.b16 %v275, %v268
  %v360 = vpack.c.b16 %v276, %v269
  %v361 = vpack.c.b16 %v284, %v277
  %v362 = vpack.c.b16 %v285, %v278
  %v363 = vpack.c.b16 %v286, %v279
  %v364 = vpack.c.b16 %v287, %v280
  %v365 = vpack.c.b16 %v288, %v281
  %v366 = vpack.c.b16 %v289, %v282
  %v367 = vpack.c.b16 %v290, %v283
  %v368 = vpack.c.b16 %v298, %v291
  %v369 = vpack.c.b16 %v299, %v292
  %v370 = vpack.c.b16 %v300, %v293
  %v371 = vpack.c.b16 %v301, %v294
  %v372 = vpack.c.b16 %v302, %v295
  %v373 = vpack.c.b16 %v303, %v296
  %v374 = vpack.c.b16 %v304, %v297
  %v375 = vpack.c.b16 %v312, %v305
  %v376 = vpack.c.b16 %v313, %v306
  %v377 = vpack.c.b16 %v314, %v307
  %v378 = vpack.c.b16 %v315, %v308
  %v379 = vpack.c.b16 %v316, %v309
  %v380 = vpack.c.b16 %v317, %v310
  %v381 = vpack.c.b16 %v318, %v311
  %v382 = vpack.c.b16 %v326, %v319
  %v383 = vpack.c.b16 %v327, %v320
  %v384 = vpack.c.b16 %v328, %v321
  %v385 = vpack.c.b16 %v329, %v322
  %v386 = vpack.c.b16 %v330, %v323
  %v387 = vpack.c.b16 %v331, %v324
  %v388 = vpack.c.b16 %v332, %v325
  %v389 = vpack.c.b16 %v340, %v333
  %v390 = vpack.c.b16 %v341, %v334
  %v391 = vpack.c.b16 %v342, %v335
  %v392 = vpack.c.b16 %v343, %v336
  %v393 = vpack.c.b16 %v344, %v337
  %v394 = vpack.c.b16 %v345, %v338
  %v395 = vpack.c.b16 %v346, %v339
  %v557 = vunpack.c.l.b16 %v74
  %v558 = vunpack.c.l.b16 %v75
  %v559 = vunpack.c.l.b16 %v76
  %v560 = vunpack.c.l.b16 %v77
  %v561 = vunpack.c.l.b16 %v78
  %v562 = vunpack.c.l.b16 %v79
  %v563 = vunpack.c.l.b16 %v80
  %v564 = vunpack.c.l.b16 %v81
  %v565 = vunpack.c.l.b16 %v82
  %v566 = vunpack.c.l.b16 %v83
  %v567 = vunpack.c.l.b16 %v84
  %v568 = vunpack.c.l.b16 %v85
  %v569 = vunpack.c.l.b16 %v86
  %v570 = vunpack.c.l.b16 %v87
  %v571 = vunpack.c.l.b16 %v88
  %v572 = vunpack.c.l.b16 %v89
  %v573 = vunpack.c.l.b16 %v90
  %v574 = vunpack.c.l.b16 %v91
  %v575 = vunpack.c.l.b16 %v92
  %v576 = vunpack.c.l.b16 %v93
  %v577 = vunpack.c.l.b16 %v94
  %v578 = vunpack.c.l.b16 %v95
  %v579 = vunpack.c.l.b16 %v96
  %v580 = vunpack.c.l.b16 %v97
  %v581 = vunpack.c.l.b16 %v98
  %v582 = vunpack.c.l.b16 %v99
  %v583 = vunpack.c.l.b16 %v100
  %v584 = vunpack.c.l.b16 %v101
  %v585 = vunpack.c.l.b16 %v102
  %v586 = vunpack.c.l.b16 %v103
  %v587 = vunpack.c.l.b16 %v104
  %v588 = vunpack.c.l.b16 %v105
  %v589 = vunpack.c.l.b16 %v106
  %v590 = vunpack.c.l.b16 %v107
  %v591 = vunpack.c.l.b16 %v108
  %v592 = vunpack.c.l.b16 %v109
  %v593 = vunpack.c.l.b16 %v110
  %v594 = vunpack.c.l.b16 %v111
  %v595 = vunpack.c.l.b16 %v112
  %v596 = vunpack.c.l.b16 %v113
  %v597 = vunpack.c.l.b16 %v114
  %v598 = vunpack.c.l.b16 %v115
  %v599 = vunpack.c.l.b16 %v116
  %v600 = vunpack.c.l.b16 %v117
  %v601 = vunpack.c.l.b16 %v118
  %v602 = vunpack.c.l.b16 %v119
  %v603 = vunpack.c.l.b16 %v120
  %v604 = vunpack.c.l.b16 %v121
  %v605 = vunpack.c.l.b16 %v122
  %v606 = vunpack.c.l.b16 %v123
  %v607 = vunpack.c.l.b16 %v124
  %v608 = vunpack.c.l.b16 %v125
  %v609 = vunpack.c.l.b16 %v126
  %v610 = vunpack.c.l.b16 %v127
  %v611 = vunpack.c.l.b16 %v128
  %v612 = vunpack.c.l.b16 %v129
  %v613 = vunpack.c.l.b16 %v130
  %v614 = vunpack.c.l.b16 %v131
  %v615 = vunpack.c.l.b16 %v132
  %v616 = vunpack.c.l.b16 %v133
  %v617 = vunpack.c.l.b16 %v134
  %v618 = vunpack.c.l.b16 %v135
  %v619 = vunpack.c.l.b16 %v136
  %v620 = vunpack.c.l.b16 %v137
  %v621 = vunpack.c.l.b16 %v138
  %v622 = vunpack.c.l.b16 %v139
  %v623 = vunpack.c.l.b16 %v140
  %v624 = vunpack.c.l.b16 %v141
  %v625 = vunpack.c.l.b16 %v142
  %v626 = vunpack.c.l.b16 %v143
  %v627 = vunpack.c.l.b16 %v144
  %v628 = vunpack.c.l.b16 %v145
  %v629 = vunpack.c.l.b16 %v146
  %v630 = vunpack.c.l.b16 %v147
  %v631 = vunpack.c.l.b16 %v148
  %v632 = vunpack.c.l.b16 %v149
  %v633 = vunpack.c.l.b16 %v150
  %v634 = vunpack.c.l.b16 %v151
  %v635 = vunpack.c.l.b16 %v152
  %v636 = vunpack.c.l.b16 %v153
  %v637 = vunpack.c.l.b16 %v154
  %v638 = vunpack.c.l.b16 %v155
  %v639 = vunpack.c.l.b16 %v156
  %v640 = vunpack.c.l.b16 %v157
  %v641 = vunpack.c.l.b16 %v158
  %v642 = vunpack.c.l.b16 %v159
  %v643 = vunpack.c.l.b16 %v160
  %v644 = vunpack.c.l.b16 %v161
  %v645 = vunpack.c.l.b16 %v162
  %v646 = vunpack.c.l.b16 %v163
  %v647 = vunpack.c.l.b16 %v164
  %v648 = vunpack.c.l.b16 %v165
  %v649 = vunpack.c.l.b16 %v166
  %v650 = vunpack.c.l.b16 %v167
  %v651 = vunpack.c.l.b16 %v168
  %v652 = vunpack.c.l.b16 %v169
  %v653 = vunpack.c.l.b16 %v170
  %v654 = vunpack.c.l.b16 %v171
  %v655 = vunpack.c.l.b16 %v172
  %v656 = vunpack.c.l.b16 %v173
  %v657 = vunpack.c.l.b16 %v174
  %v658 = vunpack.c.l.b16 %v175
  %v659 = vunpack.c.l.b16 %v176
  %v660 = vunpack.c.l.b16 %v177
  %v661 = vunpack.c.l.b16 %v178
  %v662 = vunpack.c.l.b16 %v179
  %v663 = vunpack.c.l.b16 %v180
  %v664 = vunpack.c.l.b16 %v181
  %v665 = vunpack.c.l.b16 %v182
  %v666 = vunpack.c.l.b16 %v183
  %v667 = vunpack.c.l.b16 %v184
  %v668 = vunpack.c.l.b16 %v185
  %v669 = vpack.c.b16 %v558, %v557
  %v670 = vpack.c.b16 %v560, %v559
  %v671 = vpack.c.b16 %v562, %v561
  %v672 = vpack.c.b16 %v564, %v563
  %v673 = vpack.c.b16 %v566, %v565
  %v674 = vpack.c.b16 %v568, %v567
  %v675 = vpack.c.b16 %v570, %v569
  %v676 = vpack.c.b16 %v572, %v571
  %v677 = vpack.c.b16 %v574, %v573
  %v678 = vpack.c.b16 %v576, %v575
  %v679 = vpack.c.b16 %v578, %v577
  %v680 = vpack.c.b16 %v580, %v579
  %v681 = vpack.c.b16 %v582, %v581
  %v682 = vpack.c.b16 %v584, %v583
  %v683 = vpack.c.b16 %v586, %v585
  %v684 = vpack.c.b16 %v588, %v587
  %v685 = vpack.c.b16 %v590, %v589
  %v686 = vpack.c.b16 %v592, %v591
  %v687 = vpack.c.b16 %v594, %v593
  %v688 = vpack.c.b16 %v596, %v595
  %v689 = vpack.c.b16 %v598, %v597
  %v690 = vpack.c.b16 %v600, %v599
  %v691 = vpack.c.b16 %v602, %v601
  %v692 = vpack.c.b16 %v604, %v603
  %v693 = vpack.c.b16 %v606, %v605
  %v694 = vpack.c.b16 %v608, %v607
  %v695 = vpack.c.b16 %v610, %v609
  %v696 = vpack.c.b16 %v612, %v611
  %v697 = vpack.c.b16 %v614, %v613
  %v698 = vpack.c.b16 %v616, %v615
  %v699 = vpack.c.b16 %v618, %v617
  %v700 = vpack.c.b16 %v620, %v619
  %v701 = vpack.c.b16 %v622, %v621
  %v702 = vpack.c.b16 %v624, %v623
  %v703 = vpack.c.b16 %v626, %v625
  %v704 = vpack.c.b16 %v628, %v627
  %v705 = vpack.c.b16 %v630, %v629
  %v706 = vpack.c.b16 %v632, %v631
  %v707 = vpack.c.b16 %v634, %v633
  %v708 = vpack.c.b16 %v636, %v635
  %v709 = vpack.c.b16 %v638, %v637
  %v710 = vpack.c.b16 %v640, %v639
  %v711 = vpack.c.b16 %v642, %v641
  %v712 = vpack.c.b16 %v644, %v643
  %v713 = vpack.c.b16 %v646, %v645
  %v714 = vpack.c.b16 %v648, %v647
  %v715 = vpack.c.b16 %v650, %v649
  %v716 = vpack.c.b16 %v652, %v651
  %v717 = vpack.c.b16 %v654, %v653
  %v718 = vpack.c.b16 %v656, %v655
  %v719 = vpack.c.b16 %v658, %v657
  %v720 = vpack.c.b16 %v660, %v659
  %v721 = vpack.c.b16 %v662, %v661
  %v722 = vpack.c.b16 %v664, %v663
  %v723 = vpack.c.b16 %v666, %v665
  %v724 = vpack.c.b16 %v668, %v667
  %781 = vmatprep.subr.bf16.mxu0 0
  %782 = vmatpush1.bf16.msra.mxu0 %v669
  %783 = vmatprep.subr.bf16.mxu0 0
  %784 = vmatpush1.bf16.msra.mxu0 %v670
  %785 = vmatprep.subr.bf16.mxu0 0
  %786 = vmatpush1.bf16.msra.mxu0 %v671
  %787 = vmatprep.subr.bf16.mxu0 0
  %788 = vmatpush1.bf16.msra.mxu0 %v672
  %789 = vmatprep.subr.bf16.mxu0 0
  %790 = vmatpush1.bf16.msra.mxu0 %v673
  %791 = vmatprep.subr.bf16.mxu0 0
  %792 = vmatpush1.bf16.msra.mxu0 %v674
  %793 = vmatprep.subr.bf16.mxu0 0
  %794 = vmatpush1.bf16.msra.mxu0 %v675
  %795 = vmatprep.subr.bf16.mxu0 0
  %796 = vmatpush1.bf16.msra.mxu0 %v676
  %797 = vmatprep.subr.bf16.mxu0 0
  %798 = vmatpush1.bf16.msra.mxu0 %v677
  %799 = vmatprep.subr.bf16.mxu0 0
  %800 = vmatpush1.bf16.msra.mxu0 %v678
  %801 = vmatprep.subr.bf16.mxu0 0
  %802 = vmatpush1.bf16.msra.mxu0 %v679
  %803 = vmatprep.subr.bf16.mxu0 0
  %804 = vmatpush1.bf16.msra.mxu0 %v680
  %805 = vmatprep.subr.bf16.mxu0 0
  %806 = vmatpush1.bf16.msra.mxu0 %v681
  %807 = vmatprep.subr.bf16.mxu0 0
  %808 = vmatpush1.bf16.msra.mxu0 %v682
  %809 = vmatprep.subr.bf16.mxu0 0
  %810 = vmatpush1.bf16.msra.mxu0 %v683
  %811 = vmatprep.subr.bf16.mxu0 0
  %812 = vmatpush1.bf16.msra.mxu0 %v684
  %813 = vmatprep.mubr.bf16.mxu0 %v348
  %814 = vmatmul.mubr.bf16.gmra.mrb[0].mxu0 %v347
  %v815 = vpop.f32.mrb[0].mxu0
  %v816 = vadd.f32 %v191, %v815
  %v817 = vpop.f32.mrb[0].mxu0
  %v818 = vpop.f32.mrb[0].mxu0
  %v819 = vadd.f32 %v191, %v818
  %v820 = vpop.f32.mrb[0].mxu0
  %821 = vmatprep.mubr.bf16.mxu0 %v355
  %822 = vmatmul.mubr.bf16.gmra.mrb[0].mxu0 %v354
  %v823 = vpop.f32.mrb[0].mxu0
  %v824 = vadd.f32 %v191, %v823
  %v825 = vpop.f32.mrb[0].mxu0
  %v826 = vpop.f32.mrb[0].mxu0
  %v827 = vadd.f32 %v191, %v826
  %v828 = vpop.f32.mrb[0].mxu0
  %829 = vmatprep.mubr.bf16.mxu0 %v362
  %830 = vmatmul.mubr.bf16.gmra.mrb[0].mxu0 %v361
  %v831 = vpop.f32.mrb[0].mxu0
  %v832 = vadd.f32 %v191, %v831
  %v833 = vpop.f32.mrb[0].mxu0
  %v834 = vpop.f32.mrb[0].mxu0
  %v835 = vadd.f32 %v191, %v834
  %v836 = vpop.f32.mrb[0].mxu0
  %837 = vmatprep.mubr.bf16.mxu0 %v369
  %838 = vmatmul.mubr.bf16.gmra.mrb[0].mxu0 %v368
  %v839 = vpop.f32.mrb[0].mxu0
  %v840 = vadd.f32 %v191, %v839
  %v841 = vpop.f32.mrb[0].mxu0
  %v842 = vpop.f32.mrb[0].mxu0
  %v843 = vadd.f32 %v191, %v842
  %v844 = vpop.f32.mrb[0].mxu0
  %845 = vmatprep.mubr.bf16.mxu0 %v376
  %846 = vmatmul.mubr.bf16.gmra.mrb[0].mxu0 %v375
  %v847 = vpop.f32.mrb[0].mxu0
  %v848 = vadd.f32 %v191, %v847
  %v849 = vpop.f32.mrb[0].mxu0
  %v850 = vpop.f32.mrb[0].mxu0
  %v851 = vadd.f32 %v191, %v850
  %v852 = vpop.f32.mrb[0].mxu0
  %853 = vmatprep.mubr.bf16.mxu0 %v383
  %854 = vmatmul.mubr.bf16.gmra.mrb[0].mxu0 %v382
  %v855 = vpop.f32.mrb[0].mxu0
  %v856 = vadd.f32 %v191, %v855
  %v857 = vpop.f32.mrb[0].mxu0
  %v858 = vpop.f32.mrb[0].mxu0
  %v859 = vadd.f32 %v191, %v858
  %v860 = vpop.f32.mrb[0].mxu0
  %861 = vmatprep.mubr.bf16.mxu0 %v390
  %862 = vmatmul.mubr.bf16.gmra.mrb[0].mxu0 %v389
  %v863 = vpop.f32.mrb[0].mxu0
  %v864 = vadd.f32 %v191, %v863
  %v865 = vpop.f32.mrb[0].mxu0
  %v866 = vpop.f32.mrb[0].mxu0
  %v867 = vadd.f32 %v191, %v866
  %v868 = vpop.f32.mrb[0].mxu0
  %869 = vdwg.mxu0
  %870 = vmatprep.subr.bf16.mxu0 0
  %871 = vmatpush1.bf16.msra.mxu0 %v685
  %872 = vmatprep.subr.bf16.mxu0 0
  %873 = vmatpush1.bf16.msra.mxu0 %v686
  %874 = vmatprep.subr.bf16.mxu0 0
  %875 = vmatpush1.bf16.msra.mxu0 %v687
  %876 = vmatprep.subr.bf16.mxu0 0
  %877 = vmatpush1.bf16.msra.mxu0 %v688
  %878 = vmatprep.subr.bf16.mxu0 0
  %879 = vmatpush1.bf16.msra.mxu0 %v689
  %880 = vmatprep.subr.bf16.mxu0 0
  %881 = vmatpush1.bf16.msra.mxu0 %v690
  %882 = vmatprep.subr.bf16.mxu0 0
  %883 = vmatpush1.bf16.msra.mxu0 %v691
  %884 = vmatprep.subr.bf16.mxu0 0
  %885 = vmatpush1.bf16.msra.mxu0 %v692
  %886 = vmatprep.subr.bf16.mxu0 0
  %887 = vmatpush1.bf16.msra.mxu0 %v693
  %888 = vmatprep.subr.bf16.mxu0 0
  %889 = vmatpush1.bf16.msra.mxu0 %v694
  %890 = vmatprep.subr.bf16.mxu0 0
  %891 = vmatpush1.bf16.msra.mxu0 %v695
  %892 = vmatprep.subr.bf16.mxu0 0
  %893 = vmatpush1.bf16.msra.mxu0 %v696
  %894 = vmatprep.subr.bf16.mxu0 0
  %895 = vmatpush1.bf16.msra.mxu0 %v697
  %896 = vmatprep.subr.bf16.mxu0 0
  %897 = vmatpush1.bf16.msra.mxu0 %v698
  %898 = vmatprep.subr.bf16.mxu0 0
  %899 = vmatpush1.bf16.msra.mxu0 %v699
  %900 = vmatprep.subr.bf16.mxu0 0
  %901 = vmatpush1.bf16.msra.mxu0 %v700
  %902 = vmatprep.mubr.bf16.mxu0 %v350
  %903 = vmatmul.mubr.bf16.gmra.mrb[0].mxu0 %v349
  %v904 = vpop.f32.mrb[0].mxu0
  %v905 = vadd.f32 %v816, %v904
  %v906 = vpop.f32.mrb[0].mxu0
  %v907 = vpop.f32.mrb[0].mxu0
  %v908 = vadd.f32 %v819, %v907
  %v909 = vpop.f32.mrb[0].mxu0
  %910 = vmatprep.mubr.bf16.mxu0 %v357
  %911 = vmatmul.mubr.bf16.gmra.mrb[0].mxu0 %v356
  %v912 = vpop.f32.mrb[0].mxu0
  %v913 = vadd.f32 %v824, %v912
  %v914 = vpop.f32.mrb[0].mxu0
  %v915 = vpop.f32.mrb[0].mxu0
  %v916 = vadd.f32 %v827, %v915
  %v917 = vpop.f32.mrb[0].mxu0
  %918 = vmatprep.mubr.bf16.mxu0 %v364
  %919 = vmatmul.mubr.bf16.gmra.mrb[0].mxu0 %v363
  %v920 = vpop.f32.mrb[0].mxu0
  %v921 = vadd.f32 %v832, %v920
  %v922 = vpop.f32.mrb[0].mxu0
  %v923 = vpop.f32.mrb[0].mxu0
  %v924 = vadd.f32 %v835, %v923
  %v925 = vpop.f32.mrb[0].mxu0
  %926 = vmatprep.mubr.bf16.mxu0 %v371
  %927 = vmatmul.mubr.bf16.gmra.mrb[0].mxu0 %v370
  %v928 = vpop.f32.mrb[0].mxu0
  %v929 = vadd.f32 %v840, %v928
  %v930 = vpop.f32.mrb[0].mxu0
  %v931 = vpop.f32.mrb[0].mxu0
  %v932 = vadd.f32 %v843, %v931
  %v933 = vpop.f32.mrb[0].mxu0
  %934 = vmatprep.mubr.bf16.mxu0 %v378
  %935 = vmatmul.mubr.bf16.gmra.mrb[0].mxu0 %v377
  %v936 = vpop.f32.mrb[0].mxu0
  %v937 = vadd.f32 %v848, %v936
  %v938 = vpop.f32.mrb[0].mxu0
  %v939 = vpop.f32.mrb[0].mxu0
  %v940 = vadd.f32 %v851, %v939
  %v941 = vpop.f32.mrb[0].mxu0
  %942 = vmatprep.mubr.bf16.mxu0 %v385
  %943 = vmatmul.mubr.bf16.gmra.mrb[0].mxu0 %v384
  %v944 = vpop.f32.mrb[0].mxu0
  %v945 = vadd.f32 %v856, %v944
  %v946 = vpop.f32.mrb[0].mxu0
  %v947 = vpop.f32.mrb[0].mxu0
  %v948 = vadd.f32 %v859, %v947
  %v949 = vpop.f32.mrb[0].mxu0
  %950 = vmatprep.mubr.bf16.mxu0 %v392
  %951 = vmatmul.mubr.bf16.gmra.mrb[0].mxu0 %v391
  %v952 = vpop.f32.mrb[0].mxu0
  %v953 = vadd.f32 %v864, %v952
  %v954 = vpop.f32.mrb[0].mxu0
  %v955 = vpop.f32.mrb[0].mxu0
  %v956 = vadd.f32 %v867, %v955
  %v957 = vpop.f32.mrb[0].mxu0
  %958 = vdwg.mxu0
  %959 = vmatprep.subr.bf16.mxu0 0
  %960 = vmatpush1.bf16.msra.mxu0 %v701
  %961 = vmatprep.subr.bf16.mxu0 0
  %962 = vmatpush1.bf16.msra.mxu0 %v702
  %963 = vmatprep.subr.bf16.mxu0 0
  %964 = vmatpush1.bf16.msra.mxu0 %v703
  %965 = vmatprep.subr.bf16.mxu0 0
  %966 = vmatpush1.bf16.msra.mxu0 %v704
  %967 = vmatprep.subr.bf16.mxu0 0
  %968 = vmatpush1.bf16.msra.mxu0 %v705
  %969 = vmatprep.subr.bf16.mxu0 0
  %970 = vmatpush1.bf16.msra.mxu0 %v706
  %971 = vmatprep.subr.bf16.mxu0 0
  %972 = vmatpush1.bf16.msra.mxu0 %v707
  %973 = vmatprep.subr.bf16.mxu0 0
  %974 = vmatpush1.bf16.msra.mxu0 %v708
  %975 = vmatprep.subr.bf16.mxu0 0
  %976 = vmatpush1.bf16.msra.mxu0 %v709
  %977 = vmatprep.subr.bf16.mxu0 0
  %978 = vmatpush1.bf16.msra.mxu0 %v710
  %979 = vmatprep.subr.bf16.mxu0 0
  %980 = vmatpush1.bf16.msra.mxu0 %v711
  %981 = vmatprep.subr.bf16.mxu0 0
  %982 = vmatpush1.bf16.msra.mxu0 %v712
  %983 = vmatprep.subr.bf16.mxu0 0
  %984 = vmatpush1.bf16.msra.mxu0 %v713
  %985 = vmatprep.subr.bf16.mxu0 0
  %986 = vmatpush1.bf16.msra.mxu0 %v714
  %987 = vmatprep.subr.bf16.mxu0 0
  %988 = vmatpush1.bf16.msra.mxu0 %v715
  %989 = vmatprep.subr.bf16.mxu0 0
  %990 = vmatpush1.bf16.msra.mxu0 %v716
  %991 = vmatprep.mubr.bf16.mxu0 %v352
  %992 = vmatmul.mubr.bf16.gmra.mrb[0].mxu0 %v351
  %v993 = vpop.f32.mrb[0].mxu0
  %v994 = vadd.f32 %v905, %v993
  %v995 = vpop.f32.mrb[0].mxu0
  %v996 = vpop.f32.mrb[0].mxu0
  %v997 = vadd.f32 %v908, %v996
  %v998 = vpop.f32.mrb[0].mxu0
  %999 = vmatprep.mubr.bf16.mxu0 %v359
  %1000 = vmatmul.mubr.bf16.gmra.mrb[0].mxu0 %v358
  %v1001 = vpop.f32.mrb[0].mxu0
  %v1002 = vadd.f32 %v913, %v1001
  %v1003 = vpop.f32.mrb[0].mxu0
  %v1004 = vpop.f32.mrb[0].mxu0
  %v1005 = vadd.f32 %v916, %v1004
  %v1006 = vpop.f32.mrb[0].mxu0
  %1007 = vmatprep.mubr.bf16.mxu0 %v366
  %1008 = vmatmul.mubr.bf16.gmra.mrb[0].mxu0 %v365
  %v1009 = vpop.f32.mrb[0].mxu0
  %v1010 = vadd.f32 %v921, %v1009
  %v1011 = vpop.f32.mrb[0].mxu0
  %v1012 = vpop.f32.mrb[0].mxu0
  %v1013 = vadd.f32 %v924, %v1012
  %v1014 = vpop.f32.mrb[0].mxu0
  %1015 = vmatprep.mubr.bf16.mxu0 %v373
  %1016 = vmatmul.mubr.bf16.gmra.mrb[0].mxu0 %v372
  %v1017 = vpop.f32.mrb[0].mxu0
  %v1018 = vadd.f32 %v929, %v1017
  %v1019 = vpop.f32.mrb[0].mxu0
  %v1020 = vpop.f32.mrb[0].mxu0
  %v1021 = vadd.f32 %v932, %v1020
  %v1022 = vpop.f32.mrb[0].mxu0
  %1023 = vmatprep.mubr.bf16.mxu0 %v380
  %1024 = vmatmul.mubr.bf16.gmra.mrb[0].mxu0 %v379
  %v1025 = vpop.f32.mrb[0].mxu0
  %v1026 = vadd.f32 %v937, %v1025
  %v1027 = vpop.f32.mrb[0].mxu0
  %v1028 = vpop.f32.mrb[0].mxu0
  %v1029 = vadd.f32 %v940, %v1028
  %v1030 = vpop.f32.mrb[0].mxu0
  %1031 = vmatprep.mubr.bf16.mxu0 %v387
  %1032 = vmatmul.mubr.bf16.gmra.mrb[0].mxu0 %v386
  %v1033 = vpop.f32.mrb[0].mxu0
  %v1034 = vadd.f32 %v945, %v1033
  %v1035 = vpop.f32.mrb[0].mxu0
  %v1036 = vpop.f32.mrb[0].mxu0
  %v1037 = vadd.f32 %v948, %v1036
  %v1038 = vpop.f32.mrb[0].mxu0
  %1039 = vmatprep.mubr.bf16.mxu0 %v394
  %1040 = vmatmul.mubr.bf16.gmra.mrb[0].mxu0 %v393
  %v1041 = vpop.f32.mrb[0].mxu0
  %v1042 = vadd.f32 %v953, %v1041
  %v1043 = vpop.f32.mrb[0].mxu0
  %v1044 = vpop.f32.mrb[0].mxu0
  %v1045 = vadd.f32 %v956, %v1044
  %v1046 = vpop.f32.mrb[0].mxu0
  %1047 = vdwg.mxu0
  %1048 = vmatprep.subr.bf16.mxu0 0
  %1049 = vmatpush1.bf16.msra.mxu0 %v717
  %1050 = vmatprep.subr.bf16.mxu0 0
  %1051 = vmatpush1.bf16.msra.mxu0 %v718
  %1052 = vmatprep.subr.bf16.mxu0 0
  %1053 = vmatpush1.bf16.msra.mxu0 %v719
  %1054 = vmatprep.subr.bf16.mxu0 0
  %1055 = vmatpush1.bf16.msra.mxu0 %v720
  %1056 = vmatprep.subr.bf16.mxu0 0
  %1057 = vmatpush1.bf16.msra.mxu0 %v721
  %1058 = vmatprep.subr.bf16.mxu0 0
  %1059 = vmatpush1.bf16.msra.mxu0 %v722
  %1060 = vmatprep.subr.bf16.mxu0 0
  %1061 = vmatpush1.bf16.msra.mxu0 %v723
  %1062 = vmatprep.subr.bf16.mxu0 0
  %1063 = vmatpush1.bf16.msra.mxu0 %v724
  %1064 = vmatprep.subr.bf16.mxu0 0
  %1065 = vmatpush1.bf16.msra.mxu0 0
  %1066 = vmatprep.subr.bf16.mxu0 0
  %1067 = vmatpush1.bf16.msra.mxu0 0
  %1068 = vmatprep.subr.bf16.mxu0 0
  %1069 = vmatpush1.bf16.msra.mxu0 0
  %1070 = vmatprep.subr.bf16.mxu0 0
  %1071 = vmatpush1.bf16.msra.mxu0 0
  %1072 = vmatprep.subr.bf16.mxu0 0
  %1073 = vmatpush1.bf16.msra.mxu0 0
  %1074 = vmatprep.subr.bf16.mxu0 0
  %1075 = vmatpush1.bf16.msra.mxu0 0
  %1076 = vmatprep.subr.bf16.mxu0 0
  %1077 = vmatpush1.bf16.msra.mxu0 0
  %1078 = vmatprep.subr.bf16.mxu0 0
  %1079 = vmatpush1.bf16.msra.mxu0 0
  %1080 = vmatprep.mubr.bf16.mxu0 0
  %1081 = vmatmul.mubr.bf16.gmra.mrb[0].mxu0 %v353
  %v1082 = vpop.f32.mrb[0].mxu0
  %v1083 = vadd.f32 %v994, %v1082
  %v1084 = vpop.f32.mrb[0].mxu0
  %v1085 = vpop.f32.mrb[0].mxu0
  %v1086 = vadd.f32 %v997, %v1085
  %v1087 = vpop.f32.mrb[0].mxu0
  %1088 = vmatprep.mubr.bf16.mxu0 0
  %1089 = vmatmul.mubr.bf16.gmra.mrb[0].mxu0 %v360
  %v1090 = vpop.f32.mrb[0].mxu0
  %v1091 = vadd.f32 %v1002, %v1090
  %v1092 = vpop.f32.mrb[0].mxu0
  %v1093 = vpop.f32.mrb[0].mxu0
  %v1094 = vadd.f32 %v1005, %v1093
  %v1095 = vpop.f32.mrb[0].mxu0
  %1096 = vmatprep.mubr.bf16.mxu0 0
  %1097 = vmatmul.mubr.bf16.gmra.mrb[0].mxu0 %v367
  %v1098 = vpop.f32.mrb[0].mxu0
  %v1099 = vadd.f32 %v1010, %v1098
  %v1100 = vpop.f32.mrb[0].mxu0
  %v1101 = vpop.f32.mrb[0].mxu0
  %v1102 = vadd.f32 %v1013, %v1101
  %v1103 = vpop.f32.mrb[0].mxu0
  %1104 = vmatprep.mubr.bf16.mxu0 0
  %1105 = vmatmul.mubr.bf16.gmra.mrb[0].mxu0 %v374
  %v1106 = vpop.f32.mrb[0].mxu0
  %v1107 = vadd.f32 %v1018, %v1106
  %v1108 = vpop.f32.mrb[0].mxu0
  %v1109 = vpop.f32.mrb[0].mxu0
  %v1110 = vadd.f32 %v1021, %v1109
  %v1111 = vpop.f32.mrb[0].mxu0
  %1112 = vmatprep.mubr.bf16.mxu0 0
  %1113 = vmatmul.mubr.bf16.gmra.mrb[0].mxu0 %v381
  %v1114 = vpop.f32.mrb[0].mxu0
  %v1115 = vadd.f32 %v1026, %v1114
  %v1116 = vpop.f32.mrb[0].mxu0
  %v1117 = vpop.f32.mrb[0].mxu0
  %v1118 = vadd.f32 %v1029, %v1117
  %v1119 = vpop.f32.mrb[0].mxu0
  %1120 = vmatprep.mubr.bf16.mxu0 0
  %1121 = vmatmul.mubr.bf16.gmra.mrb[0].mxu0 %v388
  %v1122 = vpop.f32.mrb[0].mxu0
  %v1123 = vadd.f32 %v1034, %v1122
  %v1124 = vpop.f32.mrb[0].mxu0
  %v1125 = vpop.f32.mrb[0].mxu0
  %v1126 = vadd.f32 %v1037, %v1125
  %v1127 = vpop.f32.mrb[0].mxu0
  %1128 = vmatprep.mubr.bf16.mxu0 0
  %1129 = vmatmul.mubr.bf16.gmra.mrb[0].mxu0 %v395
  %v1130 = vpop.f32.mrb[0].mxu0
  %v1131 = vadd.f32 %v1042, %v1130
  %v1132 = vpop.f32.mrb[0].mxu0
  %v1133 = vpop.f32.mrb[0].mxu0
  %v1134 = vadd.f32 %v1045, %v1133
  %v1135 = vpop.f32.mrb[0].mxu0
  %1136 = vdwg.mxu0
  %v1137 = vmax.f32 %v1083, 0.0
  %v1138 = vmax.f32 %v1086, 0.0
  %v1139 = vmax.f32 %v1091, 0.0
  %v1140 = vmax.f32 %v1094, 0.0
  %v1141 = vmax.f32 %v1099, 0.0
  %v1142 = vmax.f32 %v1102, 0.0
  %v1143 = vmax.f32 %v1107, 0.0
  %v1144 = vmax.f32 %v1110, 0.0
  %v1145 = vmax.f32 %v1115, 0.0
  %v1146 = vmax.f32 %v1118, 0.0
  %v1147 = vmax.f32 %v1123, 0.0
  %v1148 = vmax.f32 %v1126, 0.0
  %v1149 = vmax.f32 %v1131, 0.0
  %v1150 = vmax.f32 %v1134, 0.0
  %v1151 = vpack.c.bf16 %v1138, %v1137
  %v1152 = vpack.c.bf16 %v1140, %v1139
  %v1153 = vpack.c.bf16 %v1142, %v1141
  %v1154 = vpack.c.bf16 %v1144, %v1143
  %v1155 = vpack.c.bf16 %v1146, %v1145
  %v1156 = vpack.c.bf16 %v1148, %v1147
  %v1157 = vpack.c.bf16 %v1150, %v1149
  %v1165 = vunpack.c.l.b16 %v1151
  %v1166 = vunpack.c.h.b16 %v1151
  %v1167 = vunpack.c.l.b16 %v1152
  %v1168 = vunpack.c.h.b16 %v1152
  %v1169 = vunpack.c.l.b16 %v1153
  %v1170 = vunpack.c.h.b16 %v1153
  %v1171 = vunpack.c.l.b16 %v1154
  %v1172 = vunpack.c.h.b16 %v1154
  %v1173 = vunpack.c.l.b16 %v1155
  %v1174 = vunpack.c.h.b16 %v1155
  %v1175 = vunpack.c.l.b16 %v1156
  %v1176 = vunpack.c.h.b16 %v1156
  %v1177 = vunpack.c.l.b16 %v1157
  %v1178 = vunpack.c.h.b16 %v1157
  %v1179 = vpack.c.b16 %v1165, %v1165
  %v1180 = vpack.c.b16 %v1166, %v1166
  %v1181 = vpack.c.b16 %v1167, %v1167
  %v1182 = vpack.c.b16 %v1168, %v1168
  %v1183 = vpack.c.b16 %v1169, %v1169
  %v1184 = vpack.c.b16 %v1170, %v1170
  %v1185 = vpack.c.b16 %v1171, %v1171
  %v1186 = vpack.c.b16 %v1172, %v1172
  %v1187 = vpack.c.b16 %v1173, %v1173
  %v1188 = vpack.c.b16 %v1174, %v1174
  %v1189 = vpack.c.b16 %v1175, %v1175
  %v1190 = vpack.c.b16 %v1176, %v1176
  %v1191 = vpack.c.b16 %v1177, %v1177
  %v1192 = vpack.c.b16 %v1178, %v1178
  %1207 = vst [vmem:[%s3] sm:$0xf] %v1179
  %1208 = vst [vmem:[%s3 + $0x4] sm:$0xf] %v1180
  %1209 = vst [vmem:[%s3 + $0x8] sm:$0xf] %v1181
  %1210 = vst [vmem:[%s3 + $0xc] sm:$0xf] %v1182
  %1211 = vst [vmem:[%s3 + $0x10] sm:$0xf] %v1183
  %1212 = vst [vmem:[%s3 + $0x14] sm:$0xf] %v1184
  %1213 = vst [vmem:[%s3 + $0x18] sm:$0xf] %v1185
  %1214 = vst [vmem:[%s3 + $0x1c] sm:$0xf] %v1186
  %1215 = vst [vmem:[%s3 + $0x20] sm:$0xf] %v1187
  %1216 = vst [vmem:[%s3 + $0x24] sm:$0xf] %v1188
  %1217 = vst [vmem:[%s3 + $0x28] sm:$0xf] %v1189
  %1218 = vst [vmem:[%s3 + $0x2c] sm:$0xf] %v1190
  %1219 = vst [vmem:[%s3 + $0x30] sm:$0xf] %v1191
  %1220 = vst [vmem:[%s3 + $0x34] sm:$0xf] %v1192
  %v1221 = vadd.f32 %v1137, %v1138
  %v1222 = vadd.f32 %v1221, %v1139
  %v1223 = vadd.f32 %v1222, %v1140
  %v1224 = vadd.f32 %v1223, %v1141
  %v1225 = vadd.f32 %v1224, %v1142
  %v1226 = vadd.f32 %v1225, %v1143
  %v1227 = vadd.f32 %v1226, %v1144
  %v1228 = vadd.f32 %v1227, %v1145
  %v1229 = vadd.f32 %v1228, %v1146
  %v1230 = vadd.f32 %v1229, %v1147
  %v1231 = vadd.f32 %v1230, %v1148
  %v1232 = vadd.f32 %v1231, %v1149
  %v1233 = vadd.f32 %v1232, %v1150
  %v1234 = vrot.slane %v1233, 4
  %v1235 = vadd.f32 %v1233, %v1234
  %v1236 = vrot.slane %v1235, 2
  %v1237 = vadd.f32 %v1235, %v1236
  %v1238 = vrot.slane %v1237, 1
  %v1239 = vadd.f32 %v1237, %v1238
  %1240 = vst [vmem:[%s4] sm:$0x1] %v1239
  %v1241 = vmul.f32 %v1137, %v1137
  %v1242 = vmul.f32 %v1138, %v1138
  %v1243 = vmul.f32 %v1139, %v1139
  %v1244 = vmul.f32 %v1140, %v1140
  %v1245 = vmul.f32 %v1141, %v1141
  %v1246 = vmul.f32 %v1142, %v1142
  %v1247 = vmul.f32 %v1143, %v1143
  %v1248 = vmul.f32 %v1144, %v1144
  %v1249 = vmul.f32 %v1145, %v1145
  %v1250 = vmul.f32 %v1146, %v1146
  %v1251 = vmul.f32 %v1147, %v1147
  %v1252 = vmul.f32 %v1148, %v1148
  %v1253 = vmul.f32 %v1149, %v1149
  %v1254 = vmul.f32 %v1150, %v1150
  %v1255 = vadd.f32 %v1241, %v1242
  %v1256 = vadd.f32 %v1255, %v1243
  %v1257 = vadd.f32 %v1256, %v1244
  %v1258 = vadd.f32 %v1257, %v1245
  %v1259 = vadd.f32 %v1258, %v1246
  %v1260 = vadd.f32 %v1259, %v1247
  %v1261 = vadd.f32 %v1260, %v1248
  %v1262 = vadd.f32 %v1261, %v1249
  %v1263 = vadd.f32 %v1262, %v1250
  %v1264 = vadd.f32 %v1263, %v1251
  %v1265 = vadd.f32 %v1264, %v1252
  %v1266 = vadd.f32 %v1265, %v1253
  %v1267 = vadd.f32 %v1266, %v1254
  %v1268 = vrot.slane %v1267, 4
  %v1269 = vadd.f32 %v1267, %v1268
  %v1270 = vrot.slane %v1269, 2
  %v1271 = vadd.f32 %v1269, %v1270
  %v1272 = vrot.slane %v1271, 1
  %v1273 = vadd.f32 %v1271, %v1272
  %1274 = vst [vmem:[%s5] sm:$0x1] %v1273
  // Predicated region
  $region14: #{encoder_forward.5} parent=0 // pred_check
    _
  $region15: #{encoder_forward.5} parent=0 // pred_check_branch
    %1276 = sbr.rel (0) target = $region17
  $region16: #{encoder_forward.5} parent=0 // pred_region
    _
  $region17: #{encoder_forward.5} parent=0 // pred_fallthru
    _
  // Predicated region
  $region18: #{encoder_forward.5} parent=0 // pred_check
    _
  $region19: #{encoder_forward.5} parent=0 // pred_check_branch
    %1278 = sbr.rel (0) target = $region21
  $region20: #{encoder_forward.5} parent=0 // pred_region
    _
  $region21: #{encoder_forward.5} parent=0 // pred_fallthru
    _
  // Predicated region
  $region22: #{encoder_forward.5} parent=0 // pred_check
    _
  $region23: #{encoder_forward.5} parent=0 // pred_check_branch
    %1280 = sbr.rel (0) target = $region25
  $region24: #{encoder_forward.5} parent=0 // pred_region
    _
  $region25: #{encoder_forward.5} parent=0 // pred_fallthru
    _
  // Predicated region
  $region26: #{encoder_forward.5} parent=0 // pred_check
    _
  $region27: #{encoder_forward.5} parent=0 // pred_check_branch
    %1282 = sbr.rel (0) target = $region29
  $region28: #{encoder_forward.5} parent=0 // pred_region
    _
  $region29: #{encoder_forward.5} parent=0 // pred_fallthru
    _
  // Predicated region
  $region30: #{encoder_forward.5} parent=0 // pred_check
    _
  $region31: #{encoder_forward.5} parent=0 // pred_check_branch
    %1284 = sbr.rel (0) target = $region33
  $region32: #{encoder_forward.5} parent=0 // pred_region
    _
  $region33: #{encoder_forward.5} parent=0 // pred_fallthru
    _
  // Predicated region
  $region34: #{encoder_forward.5} parent=0 // pred_check
    _
  $region35: #{encoder_forward.5} parent=0 // pred_check_branch
    %1286 = sbr.rel (0) target = $region37
  $region36: #{encoder_forward.5} parent=0 // pred_region
    _
  $region37: #{encoder_forward.5} parent=0 // pred_fallthru
    _

// kernel: mul.61
$region0: #{mul.61}
  %s0 = inlined_call_operand.vmem [shape: f32[128,9], index: 0, kind: input, shape index: {}]
  %s1 = inlined_call_operand.vmem [shape: f32[1152], index: 1, kind: output, shape index: {}]
  %v2 = vld [vmem:[%s0] sm:$0x1]
  %vm3 = vcmask 72704
  %4 = vst.msk [vmem:[%s1] sm:$0x1] %vm3, %v2
  %s5 = scalar_lea.vmem %s0, 71
  %v6 = vld [vmem:[%s5] sm:$0x1]
  %s7 = scalar_lea.vmem %s0, 71
  %v8 = vld [vmem:[%s7] sm:$0x1]
  %vm9 = vcmask 7168
  %v10 = vsel %vm9, %v8, %v6
  %11 = vrot.lane.b32.xlu0 %v10, 127
  %v12 = vpop.permute.xlu0 %11
  %vm13 = vcmask 64512
  %s14 = scalar_lea.vmem %s1, 5
  %15 = vst.msk [vmem:[%s14] sm:$0x1] %vm13, %v12
  %vm16 = vcmask 1048568
  %s17 = scalar_lea.vmem %s1, 4
  %18 = vst.msk [vmem:[%s17] sm:$0x1] %vm16, %v12
  %s19 = scalar_lea.vmem %s0, 14
  %v20 = vld [vmem:[%s19] sm:$0x1]
  %s21 = scalar_lea.vmem %s0, 14
  %v22 = vld [vmem:[%s21] sm:$0x1]
  %vm23 = vcmask 15360
  %v24 = vsel %vm23, %v22, %v20
  %25 = vrot.lane.b32.xlu0 %v24, 126
  %v26 = vpop.permute.xlu0 %25
  %vm27 = vcmask 56320
  %s28 = scalar_lea.vmem %s1, 1
  %29 = vst.msk [vmem:[%s28] sm:$0x1] %vm27, %v26
  %vm30 = vcmask 1048560
  %31 = vst.msk [vmem:[%s1] sm:$0x1] %vm30, %v26
  %s32 = scalar_lea.vmem %s0, 85
  %v33 = vld [vmem:[%s32] sm:$0x1]
  %s34 = scalar_lea.vmem %s0, 85
  %v35 = vld [vmem:[%s34] sm:$0x1]
  %vm36 = vcmask 23552
  %v37 = vsel %vm36, %v35, %v33
  %38 = vrot.lane.b32.xlu0 %v37, 125
  %v39 = vpop.permute.xlu0 %38
  %vm40 = vcmask 48128
  %s41 = scalar_lea.vmem %s1, 6
  %42 = vst.msk [vmem:[%s41] sm:$0x1] %vm40, %v39
  %vm43 = vcmask 1048552
  %s44 = scalar_lea.vmem %s1, 5
  %45 = vst.msk [vmem:[%s44] sm:$0x1] %vm43, %v39
  %s46 = scalar_lea.vmem %s0, 28
  %v47 = vld [vmem:[%s46] sm:$0x1]
  %s48 = scalar_lea.vmem %s0, 28
  %v49 = vld [vmem:[%s48] sm:$0x1]
  %vm50 = vcmask 31744
  %v51 = vsel %vm50, %v49, %v47
  %52 = vrot.lane.b32.xlu0 %v51, 124
  %v53 = vpop.permute.xlu0 %52
  %vm54 = vcmask 39936
  %s55 = scalar_lea.vmem %s1, 2
  %56 = vst.msk [vmem:[%s55] sm:$0x1] %vm54, %v53
  %vm57 = vcmask 1048544
  %s58 = scalar_lea.vmem %s1, 1
  %59 = vst.msk [vmem:[%s58] sm:$0x1] %vm57, %v53
  %s60 = scalar_lea.vmem %s0, 99
  %v61 = vld [vmem:[%s60] sm:$0x1]
  %s62 = scalar_lea.vmem %s0, 99
  %v63 = vld [vmem:[%s62] sm:$0x1]
  %vm64 = vcmask 39936
  %v65 = vsel %vm64, %v63, %v61
  %66 = vrot.lane.b32.xlu0 %v65, 123
  %v67 = vpop.permute.xlu0 %66
  %vm68 = vcmask 31744
  %s69 = scalar_lea.vmem %s1, 7
  %70 = vst.msk [vmem:[%s69] sm:$0x1] %vm68, %v67
  %vm71 = vcmask 1048536
  %s72 = scalar_lea.vmem %s1, 6
  %73 = vst.msk [vmem:[%s72] sm:$0x1] %vm71, %v67
  %s74 = scalar_lea.vmem %s0, 42
  %v75 = vld [vmem:[%s74] sm:$0x1]
  %s76 = scalar_lea.vmem %s0, 42
  %v77 = vld [vmem:[%s76] sm:$0x1]
  %vm78 = vcmask 48128
  %v79 = vsel %vm78, %v77, %v75
  %80 = vrot.lane.b32.xlu0 %v79, 122
  %v81 = vpop.permute.xlu0 %80
  %vm82 = vcmask 23552
  %s83 = scalar_lea.vmem %s1, 3
  %84 = vst.msk [vmem:[%s83] sm:$0x1] %vm82, %v81
  %vm85 = vcmask 1048528
  %s86 = scalar_lea.vmem %s1, 2
  %87 = vst.msk [vmem:[%s86] sm:$0x1] %vm85, %v81
  %s88 = scalar_lea.vmem %s0, 113
  %v89 = vld [vmem:[%s88] sm:$0x1]
  %s90 = scalar_lea.vmem %s0, 113
  %v91 = vld [vmem:[%s90] sm:$0x1]
  %vm92 = vcmask 56320
  %v93 = vsel %vm92, %v91, %v89
  %94 = vrot.lane.b32.xlu0 %v93, 121
  %v95 = vpop.permute.xlu0 %94
  %vm96 = vcmask 15360
  %s97 = scalar_lea.vmem %s1, 8
  %98 = vst.msk [vmem:[%s97] sm:$0x1] %vm96, %v95
  %vm99 = vcmask 1048520
  %s100 = scalar_lea.vmem %s1, 7
  %101 = vst.msk [vmem:[%s100] sm:$0x1] %vm99, %v95
  %s102 = scalar_lea.vmem %s0, 56
  %v103 = vld [vmem:[%s102] sm:$0x1]
  %s104 = scalar_lea.vmem %s0, 56
  %v105 = vld [vmem:[%s104] sm:$0x1]
  %vm106 = vcmask 64512
  %v107 = vsel %vm106, %v105, %v103
  %108 = vrot.lane.b32.xlu0 %v107, 120
  %v109 = vpop.permute.xlu0 %108
  %vm110 = vcmask 7168
  %s111 = scalar_lea.vmem %s1, 4
  %112 = vst.msk [vmem:[%s111] sm:$0x1] %vm110, %v109
  %vm113 = vcmask 1048512
  %s114 = scalar_lea.vmem %s1, 3
  %115 = vst.msk [vmem:[%s114] sm:$0x1] %vm113, %v109
  %s116 = scalar_lea.vmem %s0, 127
  %v117 = vld [vmem:[%s116] sm:$0x1]
  %118 = vrot.lane.b32.xlu0 %v117, 119
  %v119 = vpop.permute.xlu0 %118
  %vm120 = vcmask 1048504
  %s121 = scalar_lea.vmem %s1, 8
  %122 = vst.msk [vmem:[%s121] sm:$0x1] %vm120, %v119
  %s123 = scalar_lea.vmem %s0, 70
  %v124 = vld [vmem:[%s123] sm:$0x1]
  %125 = vrot.lane.b32.xlu0 %v124, 118
  %v126 = vpop.permute.xlu0 %125
  %vm127 = vcmask 1040304
  %s128 = scalar_lea.vmem %s1, 4
  %129 = vst.msk [vmem:[%s128] sm:$0x1] %vm127, %v126
  %s130 = scalar_lea.vmem %s0, 13
  %v131 = vld [vmem:[%s130] sm:$0x1]
  %132 = vrot.lane.b32.xlu0 %v131, 117
  %v133 = vpop.permute.xlu0 %132
  %vm134 = vcmask 1032104
  %135 = vst.msk [vmem:[%s1] sm:$0x1] %vm134, %v133
  %s136 = scalar_lea.vmem %s0, 84
  %v137 = vld [vmem:[%s136] sm:$0x1]
  %138 = vrot.lane.b32.xlu0 %v137, 116
  %v139 = vpop.permute.xlu0 %138
  %vm140 = vcmask 1023904
  %s141 = scalar_lea.vmem %s1, 5
  %142 = vst.msk [vmem:[%s141] sm:$0x1] %vm140, %v139
  %s143 = scalar_lea.vmem %s0, 27
  %v144 = vld [vmem:[%s143] sm:$0x1]
  %145 = vrot.lane.b32.xlu0 %v144, 115
  %v146 = vpop.permute.xlu0 %145
  %vm147 = vcmask 1015704
  %s148 = scalar_lea.vmem %s1, 1
  %149 = vst.msk [vmem:[%s148] sm:$0x1] %vm147, %v146
  %s150 = scalar_lea.vmem %s0, 98
  %v151 = vld [vmem:[%s150] sm:$0x1]
  %152 = vrot.lane.b32.xlu0 %v151, 114
  %v153 = vpop.permute.xlu0 %152
  %vm154 = vcmask 1007504
  %s155 = scalar_lea.vmem %s1, 6
  %156 = vst.msk [vmem:[%s155] sm:$0x1] %vm154, %v153
  %s157 = scalar_lea.vmem %s0, 41
  %v158 = vld [vmem:[%s157] sm:$0x1]
  %159 = vrot.lane.b32.xlu0 %v158, 113
  %v160 = vpop.permute.xlu0 %159
  %vm161 = vcmask 999304
  %s162 = scalar_lea.vmem %s1, 2
  %163 = vst.msk [vmem:[%s162] sm:$0x1] %vm161, %v160
  %s164 = scalar_lea.vmem %s0, 112
  %v165 = vld [vmem:[%s164] sm:$0x1]
  %166 = vrot.lane.b32.xlu0 %v165, 112
  %v167 = vpop.permute.xlu0 %166
  %vm168 = vcmask 991104
  %s169 = scalar_lea.vmem %s1, 7
  %170 = vst.msk [vmem:[%s169] sm:$0x1] %vm168, %v167
  %s171 = scalar_lea.vmem %s0, 55
  %v172 = vld [vmem:[%s171] sm:$0x1]
  %173 = vrot.lane.b32.xlu0 %v172, 111
  %v174 = vpop.permute.xlu0 %173
  %vm175 = vcmask 982904
  %s176 = scalar_lea.vmem %s1, 3
  %177 = vst.msk [vmem:[%s176] sm:$0x1] %vm175, %v174
  %s178 = scalar_lea.vmem %s0, 126
  %v179 = vld [vmem:[%s178] sm:$0x1]
  %180 = vrot.lane.b32.xlu0 %v179, 110
  %v181 = vpop.permute.xlu0 %180
  %vm182 = vcmask 974704
  %s183 = scalar_lea.vmem %s1, 8
  %184 = vst.msk [vmem:[%s183] sm:$0x1] %vm182, %v181
  %s185 = scalar_lea.vmem %s0, 69
  %v186 = vld [vmem:[%s185] sm:$0x1]
  %187 = vrot.lane.b32.xlu0 %v186, 109
  %v188 = vpop.permute.xlu0 %187
  %vm189 = vcmask 966504
  %s190 = scalar_lea.vmem %s1, 4
  %191 = vst.msk [vmem:[%s190] sm:$0x1] %vm189, %v188
  %s192 = scalar_lea.vmem %s0, 12
  %v193 = vld [vmem:[%s192] sm:$0x1]
  %194 = vrot.lane.b32.xlu0 %v193, 108
  %v195 = vpop.permute.xlu0 %194
  %vm196 = vcmask 958304
  %197 = vst.msk [vmem:[%s1] sm:$0x1] %vm196, %v195
  %s198 = scalar_lea.vmem %s0, 83
  %v199 = vld [vmem:[%s198] sm:$0x1]
  %200 = vrot.lane.b32.xlu0 %v199, 107
  %v201 = vpop.permute.xlu0 %200
  %vm202 = vcmask 950104
  %s203 = scalar_lea.vmem %s1, 5
  %204 = vst.msk [vmem:[%s203] sm:$0x1] %vm202, %v201
  %s205 = scalar_lea.vmem %s0, 26
  %v206 = vld [vmem:[%s205] sm:$0x1]
  %207 = vrot.lane.b32.xlu0 %v206, 106
  %v208 = vpop.permute.xlu0 %207
  %vm209 = vcmask 941904
  %s210 = scalar_lea.vmem %s1, 1
  %211 = vst.msk [vmem:[%s210] sm:$0x1] %vm209, %v208
  %s212 = scalar_lea.vmem %s0, 97
  %v213 = vld [vmem:[%s212] sm:$0x1]
  %214 = vrot.lane.b32.xlu0 %v213, 105
  %v215 = vpop.permute.xlu0 %214
  %vm216 = vcmask 933704
  %s217 = scalar_lea.vmem %s1, 6
  %218 = vst.msk [vmem:[%s217] sm:$0x1] %vm216, %v215
  %s219 = scalar_lea.vmem %s0, 40
  %v220 = vld [vmem:[%s219] sm:$0x1]
  %221 = vrot.lane.b32.xlu0 %v220, 104
  %v222 = vpop.permute.xlu0 %221
  %vm223 = vcmask 925504
  %s224 = scalar_lea.vmem %s1, 2
  %225 = vst.msk [vmem:[%s224] sm:$0x1] %vm223, %v222
  %s226 = scalar_lea.vmem %s0, 111
  %v227 = vld [vmem:[%s226] sm:$0x1]
  %228 = vrot.lane.b32.xlu0 %v227, 103
  %v229 = vpop.permute.xlu0 %228
  %vm230 = vcmask 917304
  %s231 = scalar_lea.vmem %s1, 7
  %232 = vst.msk [vmem:[%s231] sm:$0x1] %vm230, %v229
  %s233 = scalar_lea.vmem %s0, 54
  %v234 = vld [vmem:[%s233] sm:$0x1]
  %235 = vrot.lane.b32.xlu0 %v234, 102
  %v236 = vpop.permute.xlu0 %235
  %vm237 = vcmask 909104
  %s238 = scalar_lea.vmem %s1, 3
  %239 = vst.msk [vmem:[%s238] sm:$0x1] %vm237, %v236
  %s240 = scalar_lea.vmem %s0, 125
  %v241 = vld [vmem:[%s240] sm:$0x1]
  %242 = vrot.lane.b32.xlu0 %v241, 101
  %v243 = vpop.permute.xlu0 %242
  %vm244 = vcmask 900904
  %s245 = scalar_lea.vmem %s1, 8
  %246 = vst.msk [vmem:[%s245] sm:$0x1] %vm244, %v243
  %s247 = scalar_lea.vmem %s0, 68
  %v248 = vld [vmem:[%s247] sm:$0x1]
  %249 = vrot.lane.b32.xlu0 %v248, 100
  %v250 = vpop.permute.xlu0 %249
  %vm251 = vcmask 892704
  %s252 = scalar_lea.vmem %s1, 4
  %253 = vst.msk [vmem:[%s252] sm:$0x1] %vm251, %v250
  %s254 = scalar_lea.vmem %s0, 11
  %v255 = vld [vmem:[%s254] sm:$0x1]
  %256 = vrot.lane.b32.xlu0 %v255, 99
  %v257 = vpop.permute.xlu0 %256
  %vm258 = vcmask 884504
  %259 = vst.msk [vmem:[%s1] sm:$0x1] %vm258, %v257
  %s260 = scalar_lea.vmem %s0, 82
  %v261 = vld [vmem:[%s260] sm:$0x1]
  %262 = vrot.lane.b32.xlu0 %v261, 98
  %v263 = vpop.permute.xlu0 %262
  %vm264 = vcmask 876304
  %s265 = scalar_lea.vmem %s1, 5
  %266 = vst.msk [vmem:[%s265] sm:$0x1] %vm264, %v263
  %s267 = scalar_lea.vmem %s0, 25
  %v268 = vld [vmem:[%s267] sm:$0x1]
  %269 = vrot.lane.b32.xlu0 %v268, 97
  %v270 = vpop.permute.xlu0 %269
  %vm271 = vcmask 868104
  %s272 = scalar_lea.vmem %s1, 1
  %273 = vst.msk [vmem:[%s272] sm:$0x1] %vm271, %v270
  %s274 = scalar_lea.vmem %s0, 96
  %v275 = vld [vmem:[%s274] sm:$0x1]
  %276 = vrot.lane.b32.xlu0 %v275, 96
  %v277 = vpop.permute.xlu0 %276
  %vm278 = vcmask 859904
  %s279 = scalar_lea.vmem %s1, 6
  %280 = vst.msk [vmem:[%s279] sm:$0x1] %vm278, %v277
  %s281 = scalar_lea.vmem %s0, 39
  %v282 = vld [vmem:[%s281] sm:$0x1]
  %283 = vrot.lane.b32.xlu0 %v282, 95
  %v284 = vpop.permute.xlu0 %283
  %vm285 = vcmask 851704
  %s286 = scalar_lea.vmem %s1, 2
  %287 = vst.msk [vmem:[%s286] sm:$0x1] %vm285, %v284
  %s288 = scalar_lea.vmem %s0, 110
  %v289 = vld [vmem:[%s288] sm:$0x1]
  %290 = vrot.lane.b32.xlu0 %v289, 94
  %v291 = vpop.permute.xlu0 %290
  %vm292 = vcmask 843504
  %s293 = scalar_lea.vmem %s1, 7
  %294 = vst.msk [vmem:[%s293] sm:$0x1] %vm292, %v291
  %s295 = scalar_lea.vmem %s0, 53
  %v296 = vld [vmem:[%s295] sm:$0x1]
  %297 = vrot.lane.b32.xlu0 %v296, 93
  %v298 = vpop.permute.xlu0 %297
  %vm299 = vcmask 835304
  %s300 = scalar_lea.vmem %s1, 3
  %301 = vst.msk [vmem:[%s300] sm:$0x1] %vm299, %v298
  %s302 = scalar_lea.vmem %s0, 124
  %v303 = vld [vmem:[%s302] sm:$0x1]
  %304 = vrot.lane.b32.xlu0 %v303, 92
  %v305 = vpop.permute.xlu0 %304
  %vm306 = vcmask 827104
  %s307 = scalar_lea.vmem %s1, 8
  %308 = vst.msk [vmem:[%s307] sm:$0x1] %vm306, %v305
  %s309 = scalar_lea.vmem %s0, 67
  %v310 = vld [vmem:[%s309] sm:$0x1]
  %311 = vrot.lane.b32.xlu0 %v310, 91
  %v312 = vpop.permute.xlu0 %311
  %vm313 = vcmask 818904
  %s314 = scalar_lea.vmem %s1, 4
  %315 = vst.msk [vmem:[%s314] sm:$0x1] %vm313, %v312
  %s316 = scalar_lea.vmem %s0, 10
  %v317 = vld [vmem:[%s316] sm:$0x1]
  %318 = vrot.lane.b32.xlu0 %v317, 90
  %v319 = vpop.permute.xlu0 %318
  %vm320 = vcmask 810704
  %321 = vst.msk [vmem:[%s1] sm:$0x1] %vm320, %v319
  %s322 = scalar_lea.vmem %s0, 81
  %v323 = vld [vmem:[%s322] sm:$0x1]
  %324 = vrot.lane.b32.xlu0 %v323, 89
  %v325 = vpop.permute.xlu0 %324
  %vm326 = vcmask 802504
  %s327 = scalar_lea.vmem %s1, 5
  %328 = vst.msk [vmem:[%s327] sm:$0x1] %vm326, %v325
  %s329 = scalar_lea.vmem %s0, 24
  %v330 = vld [vmem:[%s329] sm:$0x1]
  %331 = vrot.lane.b32.xlu0 %v330, 88
  %v332 = vpop.permute.xlu0 %331
  %vm333 = vcmask 794304
  %s334 = scalar_lea.vmem %s1, 1
  %335 = vst.msk [vmem:[%s334] sm:$0x1] %vm333, %v332
  %s336 = scalar_lea.vmem %s0, 95
  %v337 = vld [vmem:[%s336] sm:$0x1]
  %338 = vrot.lane.b32.xlu0 %v337, 87
  %v339 = vpop.permute.xlu0 %338
  %vm340 = vcmask 786104
  %s341 = scalar_lea.vmem %s1, 6
  %342 = vst.msk [vmem:[%s341] sm:$0x1] %vm340, %v339
  %s343 = scalar_lea.vmem %s0, 38
  %v344 = vld [vmem:[%s343] sm:$0x1]
  %345 = vrot.lane.b32.xlu0 %v344, 86
  %v346 = vpop.permute.xlu0 %345
  %vm347 = vcmask 777904
  %s348 = scalar_lea.vmem %s1, 2
  %349 = vst.msk [vmem:[%s348] sm:$0x1] %vm347, %v346
  %s350 = scalar_lea.vmem %s0, 109
  %v351 = vld [vmem:[%s350] sm:$0x1]
  %352 = vrot.lane.b32.xlu0 %v351, 85
  %v353 = vpop.permute.xlu0 %352
  %vm354 = vcmask 769704
  %s355 = scalar_lea.vmem %s1, 7
  %356 = vst.msk [vmem:[%s355] sm:$0x1] %vm354, %v353
  %s357 = scalar_lea.vmem %s0, 52
  %v358 = vld [vmem:[%s357] sm:$0x1]
  %359 = vrot.lane.b32.xlu0 %v358, 84
  %v360 = vpop.permute.xlu0 %359
  %vm361 = vcmask 761504
  %s362 = scalar_lea.vmem %s1, 3
  %363 = vst.msk [vmem:[%s362] sm:$0x1] %vm361, %v360
  %s364 = scalar_lea.vmem %s0, 123
  %v365 = vld [vmem:[%s364] sm:$0x1]
  %366 = vrot.lane.b32.xlu0 %v365, 83
  %v367 = vpop.permute.xlu0 %366
  %vm368 = vcmask 753304
  %s369 = scalar_lea.vmem %s1, 8
  %370 = vst.msk [vmem:[%s369] sm:$0x1] %vm368, %v367
  %s371 = scalar_lea.vmem %s0, 66
  %v372 = vld [vmem:[%s371] sm:$0x1]
  %373 = vrot.lane.b32.xlu0 %v372, 82
  %v374 = vpop.permute.xlu0 %373
  %vm375 = vcmask 745104
  %s376 = scalar_lea.vmem %s1, 4
  %377 = vst.msk [vmem:[%s376] sm:$0x1] %vm375, %v374
  %s378 = scalar_lea.vmem %s0, 9
  %v379 = vld [vmem:[%s378] sm:$0x1]
  %380 = vrot.lane.b32.xlu0 %v379, 81
  %v381 = vpop.permute.xlu0 %380
  %vm382 = vcmask 736904
  %383 = vst.msk [vmem:[%s1] sm:$0x1] %vm382, %v381
  %s384 = scalar_lea.vmem %s0, 80
  %v385 = vld [vmem:[%s384] sm:$0x1]
  %386 = vrot.lane.b32.xlu0 %v385, 80
  %v387 = vpop.permute.xlu0 %386
  %vm388 = vcmask 728704
  %s389 = scalar_lea.vmem %s1, 5
  %390 = vst.msk [vmem:[%s389] sm:$0x1] %vm388, %v387
  %s391 = scalar_lea.vmem %s0, 23
  %v392 = vld [vmem:[%s391] sm:$0x1]
  %393 = vrot.lane.b32.xlu0 %v392, 79
  %v394 = vpop.permute.xlu0 %393
  %vm395 = vcmask 720504
  %s396 = scalar_lea.vmem %s1, 1
  %397 = vst.msk [vmem:[%s396] sm:$0x1] %vm395, %v394
  %s398 = scalar_lea.vmem %s0, 94
  %v399 = vld [vmem:[%s398] sm:$0x1]
  %400 = vrot.lane.b32.xlu0 %v399, 78
  %v401 = vpop.permute.xlu0 %400
  %vm402 = vcmask 712304
  %s403 = scalar_lea.vmem %s1, 6
  %404 = vst.msk [vmem:[%s403] sm:$0x1] %vm402, %v401
  %s405 = scalar_lea.vmem %s0, 37
  %v406 = vld [vmem:[%s405] sm:$0x1]
  %407 = vrot.lane.b32.xlu0 %v406, 77
  %v408 = vpop.permute.xlu0 %407
  %vm409 = vcmask 704104
  %s410 = scalar_lea.vmem %s1, 2
  %411 = vst.msk [vmem:[%s410] sm:$0x1] %vm409, %v408
  %s412 = scalar_lea.vmem %s0, 108
  %v413 = vld [vmem:[%s412] sm:$0x1]
  %414 = vrot.lane.b32.xlu0 %v413, 76
  %v415 = vpop.permute.xlu0 %414
  %vm416 = vcmask 695904
  %s417 = scalar_lea.vmem %s1, 7
  %418 = vst.msk [vmem:[%s417] sm:$0x1] %vm416, %v415
  %s419 = scalar_lea.vmem %s0, 51
  %v420 = vld [vmem:[%s419] sm:$0x1]
  %421 = vrot.lane.b32.xlu0 %v420, 75
  %v422 = vpop.permute.xlu0 %421
  %vm423 = vcmask 687704
  %s424 = scalar_lea.vmem %s1, 3
  %425 = vst.msk [vmem:[%s424] sm:$0x1] %vm423, %v422
  %s426 = scalar_lea.vmem %s0, 122
  %v427 = vld [vmem:[%s426] sm:$0x1]
  %428 = vrot.lane.b32.xlu0 %v427, 74
  %v429 = vpop.permute.xlu0 %428
  %vm430 = vcmask 679504
  %s431 = scalar_lea.vmem %s1, 8
  %432 = vst.msk [vmem:[%s431] sm:$0x1] %vm430, %v429
  %s433 = scalar_lea.vmem %s0, 65
  %v434 = vld [vmem:[%s433] sm:$0x1]
  %435 = vrot.lane.b32.xlu0 %v434, 73
  %v436 = vpop.permute.xlu0 %435
  %vm437 = vcmask 671304
  %s438 = scalar_lea.vmem %s1, 4
  %439 = vst.msk [vmem:[%s438] sm:$0x1] %vm437, %v436
  %s440 = scalar_lea.vmem %s0, 8
  %v441 = vld [vmem:[%s440] sm:$0x1]
  %442 = vrot.lane.b32.xlu0 %v441, 72
  %v443 = vpop.permute.xlu0 %442
  %vm444 = vcmask 663104
  %445 = vst.msk [vmem:[%s1] sm:$0x1] %vm444, %v443
  %s446 = scalar_lea.vmem %s0, 79
  %v447 = vld [vmem:[%s446] sm:$0x1]
  %448 = vrot.lane.b32.xlu0 %v447, 71
  %v449 = vpop.permute.xlu0 %448
  %vm450 = vcmask 654904
  %s451 = scalar_lea.vmem %s1, 5
  %452 = vst.msk [vmem:[%s451] sm:$0x1] %vm450, %v449
  %s453 = scalar_lea.vmem %s0, 22
  %v454 = vld [vmem:[%s453] sm:$0x1]
  %455 = vrot.lane.b32.xlu0 %v454, 70
  %v456 = vpop.permute.xlu0 %455
  %vm457 = vcmask 646704
  %s458 = scalar_lea.vmem %s1, 1
  %459 = vst.msk [vmem:[%s458] sm:$0x1] %vm457, %v456
  %s460 = scalar_lea.vmem %s0, 93
  %v461 = vld [vmem:[%s460] sm:$0x1]
  %462 = vrot.lane.b32.xlu0 %v461, 69
  %v463 = vpop.permute.xlu0 %462
  %vm464 = vcmask 638504
  %s465 = scalar_lea.vmem %s1, 6
  %466 = vst.msk [vmem:[%s465] sm:$0x1] %vm464, %v463
  %s467 = scalar_lea.vmem %s0, 36
  %v468 = vld [vmem:[%s467] sm:$0x1]
  %469 = vrot.lane.b32.xlu0 %v468, 68
  %v470 = vpop.permute.xlu0 %469
  %vm471 = vcmask 630304
  %s472 = scalar_lea.vmem %s1, 2
  %473 = vst.msk [vmem:[%s472] sm:$0x1] %vm471, %v470
  %s474 = scalar_lea.vmem %s0, 107
  %v475 = vld [vmem:[%s474] sm:$0x1]
  %476 = vrot.lane.b32.xlu0 %v475, 67
  %v477 = vpop.permute.xlu0 %476
  %vm478 = vcmask 622104
  %s479 = scalar_lea.vmem %s1, 7
  %480 = vst.msk [vmem:[%s479] sm:$0x1] %vm478, %v477
  %s481 = scalar_lea.vmem %s0, 50
  %v482 = vld [vmem:[%s481] sm:$0x1]
  %483 = vrot.lane.b32.xlu0 %v482, 66
  %v484 = vpop.permute.xlu0 %483
  %vm485 = vcmask 613904
  %s486 = scalar_lea.vmem %s1, 3
  %487 = vst.msk [vmem:[%s486] sm:$0x1] %vm485, %v484
  %s488 = scalar_lea.vmem %s0, 121
  %v489 = vld [vmem:[%s488] sm:$0x1]
  %490 = vrot.lane.b32.xlu0 %v489, 65
  %v491 = vpop.permute.xlu0 %490
  %vm492 = vcmask 605704
  %s493 = scalar_lea.vmem %s1, 8
  %494 = vst.msk [vmem:[%s493] sm:$0x1] %vm492, %v491
  %s495 = scalar_lea.vmem %s0, 64
  %v496 = vld [vmem:[%s495] sm:$0x1]
  %497 = vrot.lane.b32.xlu0 %v496, 64
  %v498 = vpop.permute.xlu0 %497
  %vm499 = vcmask 597504
  %s500 = scalar_lea.vmem %s1, 4
  %501 = vst.msk [vmem:[%s500] sm:$0x1] %vm499, %v498
  %s502 = scalar_lea.vmem %s0, 7
  %v503 = vld [vmem:[%s502] sm:$0x1]
  %504 = vrot.lane.b32.xlu0 %v503, 63
  %v505 = vpop.permute.xlu0 %504
  %vm506 = vcmask 589304
  %507 = vst.msk [vmem:[%s1] sm:$0x1] %vm506, %v505
  %s508 = scalar_lea.vmem %s0, 78
  %v509 = vld [vmem:[%s508] sm:$0x1]
  %510 = vrot.lane.b32.xlu0 %v509, 62
  %v511 = vpop.permute.xlu0 %510
  %vm512 = vcmask 581104
  %s513 = scalar_lea.vmem %s1, 5
  %514 = vst.msk [vmem:[%s513] sm:$0x1] %vm512, %v511
  %s515 = scalar_lea.vmem %s0, 21
  %v516 = vld [vmem:[%s515] sm:$0x1]
  %517 = vrot.lane.b32.xlu0 %v516, 61
  %v518 = vpop.permute.xlu0 %517
  %vm519 = vcmask 572904
  %s520 = scalar_lea.vmem %s1, 1
  %521 = vst.msk [vmem:[%s520] sm:$0x1] %vm519, %v518
  %s522 = scalar_lea.vmem %s0, 92
  %v523 = vld [vmem:[%s522] sm:$0x1]
  %524 = vrot.lane.b32.xlu0 %v523, 60
  %v525 = vpop.permute.xlu0 %524
  %vm526 = vcmask 564704
  %s527 = scalar_lea.vmem %s1, 6
  %528 = vst.msk [vmem:[%s527] sm:$0x1] %vm526, %v525
  %s529 = scalar_lea.vmem %s0, 35
  %v530 = vld [vmem:[%s529] sm:$0x1]
  %531 = vrot.lane.b32.xlu0 %v530, 59
  %v532 = vpop.permute.xlu0 %531
  %vm533 = vcmask 556504
  %s534 = scalar_lea.vmem %s1, 2
  %535 = vst.msk [vmem:[%s534] sm:$0x1] %vm533, %v532
  %s536 = scalar_lea.vmem %s0, 106
  %v537 = vld [vmem:[%s536] sm:$0x1]
  %538 = vrot.lane.b32.xlu0 %v537, 58
  %v539 = vpop.permute.xlu0 %538
  %vm540 = vcmask 548304
  %s541 = scalar_lea.vmem %s1, 7
  %542 = vst.msk [vmem:[%s541] sm:$0x1] %vm540, %v539
  %s543 = scalar_lea.vmem %s0, 49
  %v544 = vld [vmem:[%s543] sm:$0x1]
  %545 = vrot.lane.b32.xlu0 %v544, 57
  %v546 = vpop.permute.xlu0 %545
  %vm547 = vcmask 540104
  %s548 = scalar_lea.vmem %s1, 3
  %549 = vst.msk [vmem:[%s548] sm:$0x1] %vm547, %v546
  %s550 = scalar_lea.vmem %s0, 120
  %v551 = vld [vmem:[%s550] sm:$0x1]
  %552 = vrot.lane.b32.xlu0 %v551, 56
  %v553 = vpop.permute.xlu0 %552
  %vm554 = vcmask 531904
  %s555 = scalar_lea.vmem %s1, 8
  %556 = vst.msk [vmem:[%s555] sm:$0x1] %vm554, %v553
  %s557 = scalar_lea.vmem %s0, 63
  %v558 = vld [vmem:[%s557] sm:$0x1]
  %559 = vrot.lane.b32.xlu0 %v558, 55
  %v560 = vpop.permute.xlu0 %559
  %vm561 = vcmask 523704
  %s562 = scalar_lea.vmem %s1, 4
  %563 = vst.msk [vmem:[%s562] sm:$0x1] %vm561, %v560
  %s564 = scalar_lea.vmem %s0, 6
  %v565 = vld [vmem:[%s564] sm:$0x1]
  %566 = vrot.lane.b32.xlu0 %v565, 54
  %v567 = vpop.permute.xlu0 %566
  %vm568 = vcmask 515504
  %569 = vst.msk [vmem:[%s1] sm:$0x1] %vm568, %v567
  %s570 = scalar_lea.vmem %s0, 77
  %v571 = vld [vmem:[%s570] sm:$0x1]
  %572 = vrot.lane.b32.xlu0 %v571, 53
  %v573 = vpop.permute.xlu0 %572
  %vm574 = vcmask 507304
  %s575 = scalar_lea.vmem %s1, 5
  %576 = vst.msk [vmem:[%s575] sm:$0x1] %vm574, %v573
  %s577 = scalar_lea.vmem %s0, 20
  %v578 = vld [vmem:[%s577] sm:$0x1]
  %579 = vrot.lane.b32.xlu0 %v578, 52
  %v580 = vpop.permute.xlu0 %579
  %vm581 = vcmask 499104
  %s582 = scalar_lea.vmem %s1, 1
  %583 = vst.msk [vmem:[%s582] sm:$0x1] %vm581, %v580
  %s584 = scalar_lea.vmem %s0, 91
  %v585 = vld [vmem:[%s584] sm:$0x1]
  %586 = vrot.lane.b32.xlu0 %v585, 51
  %v587 = vpop.permute.xlu0 %586
  %vm588 = vcmask 490904
  %s589 = scalar_lea.vmem %s1, 6
  %590 = vst.msk [vmem:[%s589] sm:$0x1] %vm588, %v587
  %s591 = scalar_lea.vmem %s0, 34
  %v592 = vld [vmem:[%s591] sm:$0x1]
  %593 = vrot.lane.b32.xlu0 %v592, 50
  %v594 = vpop.permute.xlu0 %593
  %vm595 = vcmask 482704
  %s596 = scalar_lea.vmem %s1, 2
  %597 = vst.msk [vmem:[%s596] sm:$0x1] %vm595, %v594
  %s598 = scalar_lea.vmem %s0, 105
  %v599 = vld [vmem:[%s598] sm:$0x1]
  %600 = vrot.lane.b32.xlu0 %v599, 49
  %v601 = vpop.permute.xlu0 %600
  %vm602 = vcmask 474504
  %s603 = scalar_lea.vmem %s1, 7
  %604 = vst.msk [vmem:[%s603] sm:$0x1] %vm602, %v601
  %s605 = scalar_lea.vmem %s0, 48
  %v606 = vld [vmem:[%s605] sm:$0x1]
  %607 = vrot.lane.b32.xlu0 %v606, 48
  %v608 = vpop.permute.xlu0 %607
  %vm609 = vcmask 466304
  %s610 = scalar_lea.vmem %s1, 3
  %611 = vst.msk [vmem:[%s610] sm:$0x1] %vm609, %v608
  %s612 = scalar_lea.vmem %s0, 119
  %v613 = vld [vmem:[%s612] sm:$0x1]
  %614 = vrot.lane.b32.xlu0 %v613, 47
  %v615 = vpop.permute.xlu0 %614
  %vm616 = vcmask 458104
  %s617 = scalar_lea.vmem %s1, 8
  %618 = vst.msk [vmem:[%s617] sm:$0x1] %vm616, %v615
  %s619 = scalar_lea.vmem %s0, 62
  %v620 = vld [vmem:[%s619] sm:$0x1]
  %621 = vrot.lane.b32.xlu0 %v620, 46
  %v622 = vpop.permute.xlu0 %621
  %vm623 = vcmask 449904
  %s624 = scalar_lea.vmem %s1, 4
  %625 = vst.msk [vmem:[%s624] sm:$0x1] %vm623, %v622
  %s626 = scalar_lea.vmem %s0, 5
  %v627 = vld [vmem:[%s626] sm:$0x1]
  %628 = vrot.lane.b32.xlu0 %v627, 45
  %v629 = vpop.permute.xlu0 %628
  %vm630 = vcmask 441704
  %631 = vst.msk [vmem:[%s1] sm:$0x1] %vm630, %v629
  %s632 = scalar_lea.vmem %s0, 76
  %v633 = vld [vmem:[%s632] sm:$0x1]
  %634 = vrot.lane.b32.xlu0 %v633, 44
  %v635 = vpop.permute.xlu0 %634
  %vm636 = vcmask 433504
  %s637 = scalar_lea.vmem %s1, 5
  %638 = vst.msk [vmem:[%s637] sm:$0x1] %vm636, %v635
  %s639 = scalar_lea.vmem %s0, 19
  %v640 = vld [vmem:[%s639] sm:$0x1]
  %641 = vrot.lane.b32.xlu0 %v640, 43
  %v642 = vpop.permute.xlu0 %641
  %vm643 = vcmask 425304
  %s644 = scalar_lea.vmem %s1, 1
  %645 = vst.msk [vmem:[%s644] sm:$0x1] %vm643, %v642
  %s646 = scalar_lea.vmem %s0, 90
  %v647 = vld [vmem:[%s646] sm:$0x1]
  %648 = vrot.lane.b32.xlu0 %v647, 42
  %v649 = vpop.permute.xlu0 %648
  %vm650 = vcmask 417104
  %s651 = scalar_lea.vmem %s1, 6
  %652 = vst.msk [vmem:[%s651] sm:$0x1] %vm650, %v649
  %s653 = scalar_lea.vmem %s0, 33
  %v654 = vld [vmem:[%s653] sm:$0x1]
  %655 = vrot.lane.b32.xlu0 %v654, 41
  %v656 = vpop.permute.xlu0 %655
  %vm657 = vcmask 408904
  %s658 = scalar_lea.vmem %s1, 2
  %659 = vst.msk [vmem:[%s658] sm:$0x1] %vm657, %v656
  %s660 = scalar_lea.vmem %s0, 104
  %v661 = vld [vmem:[%s660] sm:$0x1]
  %662 = vrot.lane.b32.xlu0 %v661, 40
  %v663 = vpop.permute.xlu0 %662
  %vm664 = vcmask 400704
  %s665 = scalar_lea.vmem %s1, 7
  %666 = vst.msk [vmem:[%s665] sm:$0x1] %vm664, %v663
  %s667 = scalar_lea.vmem %s0, 47
  %v668 = vld [vmem:[%s667] sm:$0x1]
  %669 = vrot.lane.b32.xlu0 %v668, 39
  %v670 = vpop.permute.xlu0 %669
  %vm671 = vcmask 392504
  %s672 = scalar_lea.vmem %s1, 3
  %673 = vst.msk [vmem:[%s672] sm:$0x1] %vm671, %v670
  %s674 = scalar_lea.vmem %s0, 118
  %v675 = vld [vmem:[%s674] sm:$0x1]
  %676 = vrot.lane.b32.xlu0 %v675, 38
  %v677 = vpop.permute.xlu0 %676
  %vm678 = vcmask 384304
  %s679 = scalar_lea.vmem %s1, 8
  %680 = vst.msk [vmem:[%s679] sm:$0x1] %vm678, %v677
  %s681 = scalar_lea.vmem %s0, 61
  %v682 = vld [vmem:[%s681] sm:$0x1]
  %683 = vrot.lane.b32.xlu0 %v682, 37
  %v684 = vpop.permute.xlu0 %683
  %vm685 = vcmask 376104
  %s686 = scalar_lea.vmem %s1, 4
  %687 = vst.msk [vmem:[%s686] sm:$0x1] %vm685, %v684
  %s688 = scalar_lea.vmem %s0, 4
  %v689 = vld [vmem:[%s688] sm:$0x1]
  %690 = vrot.lane.b32.xlu0 %v689, 36
  %v691 = vpop.permute.xlu0 %690
  %vm692 = vcmask 367904
  %693 = vst.msk [vmem:[%s1] sm:$0x1] %vm692, %v691
  %s694 = scalar_lea.vmem %s0, 75
  %v695 = vld [vmem:[%s694] sm:$0x1]
  %696 = vrot.lane.b32.xlu0 %v695, 35
  %v697 = vpop.permute.xlu0 %696
  %vm698 = vcmask 359704
  %s699 = scalar_lea.vmem %s1, 5
  %700 = vst.msk [vmem:[%s699] sm:$0x1] %vm698, %v697
  %s701 = scalar_lea.vmem %s0, 18
  %v702 = vld [vmem:[%s701] sm:$0x1]
  %703 = vrot.lane.b32.xlu0 %v702, 34
  %v704 = vpop.permute.xlu0 %703
  %vm705 = vcmask 351504
  %s706 = scalar_lea.vmem %s1, 1
  %707 = vst.msk [vmem:[%s706] sm:$0x1] %vm705, %v704
  %s708 = scalar_lea.vmem %s0, 89
  %v709 = vld [vmem:[%s708] sm:$0x1]
  %710 = vrot.lane.b32.xlu0 %v709, 33
  %v711 = vpop.permute.xlu0 %710
  %vm712 = vcmask 343304
  %s713 = scalar_lea.vmem %s1, 6
  %714 = vst.msk [vmem:[%s713] sm:$0x1] %vm712, %v711
  %s715 = scalar_lea.vmem %s0, 32
  %v716 = vld [vmem:[%s715] sm:$0x1]
  %717 = vrot.lane.b32.xlu0 %v716, 32
  %v718 = vpop.permute.xlu0 %717
  %vm719 = vcmask 335104
  %s720 = scalar_lea.vmem %s1, 2
  %721 = vst.msk [vmem:[%s720] sm:$0x1] %vm719, %v718
  %s722 = scalar_lea.vmem %s0, 103
  %v723 = vld [vmem:[%s722] sm:$0x1]
  %724 = vrot.lane.b32.xlu0 %v723, 31
  %v725 = vpop.permute.xlu0 %724
  %vm726 = vcmask 326904
  %s727 = scalar_lea.vmem %s1, 7
  %728 = vst.msk [vmem:[%s727] sm:$0x1] %vm726, %v725
  %s729 = scalar_lea.vmem %s0, 46
  %v730 = vld [vmem:[%s729] sm:$0x1]
  %731 = vrot.lane.b32.xlu0 %v730, 30
  %v732 = vpop.permute.xlu0 %731
  %vm733 = vcmask 318704
  %s734 = scalar_lea.vmem %s1, 3
  %735 = vst.msk [vmem:[%s734] sm:$0x1] %vm733, %v732
  %s736 = scalar_lea.vmem %s0, 117
  %v737 = vld [vmem:[%s736] sm:$0x1]
  %738 = vrot.lane.b32.xlu0 %v737, 29
  %v739 = vpop.permute.xlu0 %738
  %vm740 = vcmask 310504
  %s741 = scalar_lea.vmem %s1, 8
  %742 = vst.msk [vmem:[%s741] sm:$0x1] %vm740, %v739
  %s743 = scalar_lea.vmem %s0, 60
  %v744 = vld [vmem:[%s743] sm:$0x1]
  %745 = vrot.lane.b32.xlu0 %v744, 28
  %v746 = vpop.permute.xlu0 %745
  %vm747 = vcmask 302304
  %s748 = scalar_lea.vmem %s1, 4
  %749 = vst.msk [vmem:[%s748] sm:$0x1] %vm747, %v746
  %s750 = scalar_lea.vmem %s0, 3
  %v751 = vld [vmem:[%s750] sm:$0x1]
  %752 = vrot.lane.b32.xlu0 %v751, 27
  %v753 = vpop.permute.xlu0 %752
  %vm754 = vcmask 294104
  %755 = vst.msk [vmem:[%s1] sm:$0x1] %vm754, %v753
  %s756 = scalar_lea.vmem %s0, 74
  %v757 = vld [vmem:[%s756] sm:$0x1]
  %758 = vrot.lane.b32.xlu0 %v757, 26
  %v759 = vpop.permute.xlu0 %758
  %vm760 = vcmask 285904
  %s761 = scalar_lea.vmem %s1, 5
  %762 = vst.msk [vmem:[%s761] sm:$0x1] %vm760, %v759
  %s763 = scalar_lea.vmem %s0, 17
  %v764 = vld [vmem:[%s763] sm:$0x1]
  %765 = vrot.lane.b32.xlu0 %v764, 25
  %v766 = vpop.permute.xlu0 %765
  %vm767 = vcmask 277704
  %s768 = scalar_lea.vmem %s1, 1
  %769 = vst.msk [vmem:[%s768] sm:$0x1] %vm767, %v766
  %s770 = scalar_lea.vmem %s0, 88
  %v771 = vld [vmem:[%s770] sm:$0x1]
  %772 = vrot.lane.b32.xlu0 %v771, 24
  %v773 = vpop.permute.xlu0 %772
  %vm774 = vcmask 269504
  %s775 = scalar_lea.vmem %s1, 6
  %776 = vst.msk [vmem:[%s775] sm:$0x1] %vm774, %v773
  %s777 = scalar_lea.vmem %s0, 31
  %v778 = vld [vmem:[%s777] sm:$0x1]
  %779 = vrot.lane.b32.xlu0 %v778, 23
  %v780 = vpop.permute.xlu0 %779
  %vm781 = vcmask 261304
  %s782 = scalar_lea.vmem %s1, 2
  %783 = vst.msk [vmem:[%s782] sm:$0x1] %vm781, %v780
  %s784 = scalar_lea.vmem %s0, 102
  %v785 = vld [vmem:[%s784] sm:$0x1]
  %786 = vrot.lane.b32.xlu0 %v785, 22
  %v787 = vpop.permute.xlu0 %786
  %vm788 = vcmask 253104
  %s789 = scalar_lea.vmem %s1, 7
  %790 = vst.msk [vmem:[%s789] sm:$0x1] %vm788, %v787
  %s791 = scalar_lea.vmem %s0, 45
  %v792 = vld [vmem:[%s791] sm:$0x1]
  %793 = vrot.lane.b32.xlu0 %v792, 21
  %v794 = vpop.permute.xlu0 %793
  %vm795 = vcmask 244904
  %s796 = scalar_lea.vmem %s1, 3
  %797 = vst.msk [vmem:[%s796] sm:$0x1] %vm795, %v794
  %s798 = scalar_lea.vmem %s0, 116
  %v799 = vld [vmem:[%s798] sm:$0x1]
  %800 = vrot.lane.b32.xlu0 %v799, 20
  %v801 = vpop.permute.xlu0 %800
  %vm802 = vcmask 236704
  %s803 = scalar_lea.vmem %s1, 8
  %804 = vst.msk [vmem:[%s803] sm:$0x1] %vm802, %v801
  %s805 = scalar_lea.vmem %s0, 59
  %v806 = vld [vmem:[%s805] sm:$0x1]
  %807 = vrot.lane.b32.xlu0 %v806, 19
  %v808 = vpop.permute.xlu0 %807
  %vm809 = vcmask 228504
  %s810 = scalar_lea.vmem %s1, 4
  %811 = vst.msk [vmem:[%s810] sm:$0x1] %vm809, %v808
  %s812 = scalar_lea.vmem %s0, 2
  %v813 = vld [vmem:[%s812] sm:$0x1]
  %814 = vrot.lane.b32.xlu0 %v813, 18
  %v815 = vpop.permute.xlu0 %814
  %vm816 = vcmask 220304
  %817 = vst.msk [vmem:[%s1] sm:$0x1] %vm816, %v815
  %s818 = scalar_lea.vmem %s0, 73
  %v819 = vld [vmem:[%s818] sm:$0x1]
  %820 = vrot.lane.b32.xlu0 %v819, 17
  %v821 = vpop.permute.xlu0 %820
  %vm822 = vcmask 212104
  %s823 = scalar_lea.vmem %s1, 5
  %824 = vst.msk [vmem:[%s823] sm:$0x1] %vm822, %v821
  %s825 = scalar_lea.vmem %s0, 16
  %v826 = vld [vmem:[%s825] sm:$0x1]
  %827 = vrot.lane.b32.xlu0 %v826, 16
  %v828 = vpop.permute.xlu0 %827
  %vm829 = vcmask 203904
  %s830 = scalar_lea.vmem %s1, 1
  %831 = vst.msk [vmem:[%s830] sm:$0x1] %vm829, %v828
  %s832 = scalar_lea.vmem %s0, 87
  %v833 = vld [vmem:[%s832] sm:$0x1]
  %834 = vrot.lane.b32.xlu0 %v833, 15
  %v835 = vpop.permute.xlu0 %834
  %vm836 = vcmask 195704
  %s837 = scalar_lea.vmem %s1, 6
  %838 = vst.msk [vmem:[%s837] sm:$0x1] %vm836, %v835
  %s839 = scalar_lea.vmem %s0, 30
  %v840 = vld [vmem:[%s839] sm:$0x1]
  %841 = vrot.lane.b32.xlu0 %v840, 14
  %v842 = vpop.permute.xlu0 %841
  %vm843 = vcmask 187504
  %s844 = scalar_lea.vmem %s1, 2
  %845 = vst.msk [vmem:[%s844] sm:$0x1] %vm843, %v842
  %s846 = scalar_lea.vmem %s0, 101
  %v847 = vld [vmem:[%s846] sm:$0x1]
  %848 = vrot.lane.b32.xlu0 %v847, 13
  %v849 = vpop.permute.xlu0 %848
  %vm850 = vcmask 179304
  %s851 = scalar_lea.vmem %s1, 7
  %852 = vst.msk [vmem:[%s851] sm:$0x1] %vm850, %v849
  %s853 = scalar_lea.vmem %s0, 44
  %v854 = vld [vmem:[%s853] sm:$0x1]
  %855 = vrot.lane.b32.xlu0 %v854, 12
  %v856 = vpop.permute.xlu0 %855
  %vm857 = vcmask 171104
  %s858 = scalar_lea.vmem %s1, 3
  %859 = vst.msk [vmem:[%s858] sm:$0x1] %vm857, %v856
  %s860 = scalar_lea.vmem %s0, 115
  %v861 = vld [vmem:[%s860] sm:$0x1]
  %862 = vrot.lane.b32.xlu0 %v861, 11
  %v863 = vpop.permute.xlu0 %862
  %vm864 = vcmask 162904
  %s865 = scalar_lea.vmem %s1, 8
  %866 = vst.msk [vmem:[%s865] sm:$0x1] %vm864, %v863
  %s867 = scalar_lea.vmem %s0, 58
  %v868 = vld [vmem:[%s867] sm:$0x1]
  %869 = vrot.lane.b32.xlu0 %v868, 10
  %v870 = vpop.permute.xlu0 %869
  %vm871 = vcmask 154704
  %s872 = scalar_lea.vmem %s1, 4
  %873 = vst.msk [vmem:[%s872] sm:$0x1] %vm871, %v870
  %s874 = scalar_lea.vmem %s0, 1
  %v875 = vld [vmem:[%s874] sm:$0x1]
  %876 = vrot.lane.b32.xlu0 %v875, 9
  %v877 = vpop.permute.xlu0 %876
  %vm878 = vcmask 146504
  %879 = vst.msk [vmem:[%s1] sm:$0x1] %vm878, %v877
  %s880 = scalar_lea.vmem %s0, 72
  %v881 = vld [vmem:[%s880] sm:$0x1]
  %882 = vrot.lane.b32.xlu0 %v881, 8
  %v883 = vpop.permute.xlu0 %882
  %vm884 = vcmask 138304
  %s885 = scalar_lea.vmem %s1, 5
  %886 = vst.msk [vmem:[%s885] sm:$0x1] %vm884, %v883
  %s887 = scalar_lea.vmem %s0, 15
  %v888 = vld [vmem:[%s887] sm:$0x1]
  %889 = vrot.lane.b32.xlu0 %v888, 7
  %v890 = vpop.permute.xlu0 %889
  %vm891 = vcmask 130104
  %s892 = scalar_lea.vmem %s1, 1
  %893 = vst.msk [vmem:[%s892] sm:$0x1] %vm891, %v890
  %s894 = scalar_lea.vmem %s0, 86
  %v895 = vld [vmem:[%s894] sm:$0x1]
  %896 = vrot.lane.b32.xlu0 %v895, 6
  %v897 = vpop.permute.xlu0 %896
  %vm898 = vcmask 121904
  %s899 = scalar_lea.vmem %s1, 6
  %900 = vst.msk [vmem:[%s899] sm:$0x1] %vm898, %v897
  %s901 = scalar_lea.vmem %s0, 29
  %v902 = vld [vmem:[%s901] sm:$0x1]
  %903 = vrot.lane.b32.xlu0 %v902, 5
  %v904 = vpop.permute.xlu0 %903
  %vm905 = vcmask 113704
  %s906 = scalar_lea.vmem %s1, 2
  %907 = vst.msk [vmem:[%s906] sm:$0x1] %vm905, %v904
  %s908 = scalar_lea.vmem %s0, 100
  %v909 = vld [vmem:[%s908] sm:$0x1]
  %910 = vrot.lane.b32.xlu0 %v909, 4
  %v911 = vpop.permute.xlu0 %910
  %vm912 = vcmask 105504
  %s913 = scalar_lea.vmem %s1, 7
  %914 = vst.msk [vmem:[%s913] sm:$0x1] %vm912, %v911
  %s915 = scalar_lea.vmem %s0, 43
  %v916 = vld [vmem:[%s915] sm:$0x1]
  %917 = vrot.lane.b32.xlu0 %v916, 3
  %v918 = vpop.permute.xlu0 %917
  %vm919 = vcmask 97304
  %s920 = scalar_lea.vmem %s1, 3
  %921 = vst.msk [vmem:[%s920] sm:$0x1] %vm919, %v918
  %s922 = scalar_lea.vmem %s0, 114
  %v923 = vld [vmem:[%s922] sm:$0x1]
  %924 = vrot.lane.b32.xlu0 %v923, 2
  %v925 = vpop.permute.xlu0 %924
  %vm926 = vcmask 89104
  %s927 = scalar_lea.vmem %s1, 8
  %928 = vst.msk [vmem:[%s927] sm:$0x1] %vm926, %v925
  %s929 = scalar_lea.vmem %s0, 57
  %v930 = vld [vmem:[%s929] sm:$0x1]
  %931 = vrot.lane.b32.xlu0 %v930, 1
  %v932 = vpop.permute.xlu0 %931
  %vm933 = vcmask 80904
  %s934 = scalar_lea.vmem %s1, 4
  %935 = vst.msk [vmem:[%s934] sm:$0x1] %vm933, %v932

// kernel: encoder_forward.6
$region0: #{encoder_forward.6}
  #allocation0 [shape = 'u32[]', space=smem, size = 0x4, offset = 0x4, fixed_abs, tag = 'smem constant byte address 0x4 - core index']
  #allocation1 [shape = 'u32[144,128]{1,0:T(1,128)}', space=vmem, size = 0x12000, scoped, tag = 'internal scratch']
  %s0 = inlined_call_operand.vmem [shape: bf16[32,640], index: 0, kind: input, shape index: {}]
  %s1 = inlined_call_operand.vmem [shape: bf16[640,128], index: 1, kind: input, shape index: {}]
  %s2 = inlined_call_operand.vmem [shape: f32[1,128], index: 2, kind: input, shape index: {}]
  %s3 = inlined_call_operand.vmem [shape: bf16[32,128], index: 3, kind: output, shape index: {0}]
  %s4 = inlined_call_operand.vmem [shape: f32[1,1,128], index: 4, kind: output, shape index: {1}]
  %s5 = inlined_call_operand.vmem [shape: f32[1,1,128], index: 5, kind: output, shape index: {2}]
  %6 = xla_tuple %s3, %s4, %s5
  %s7 = sld [smem:[#allocation0]]
  $region38: #{encoder_forward.6} parent=0
    _
  %s9 = ssub.s32 1, %s7
  %s10 = scalar_select 0, %s9, %s7
  // Predicated region
  $region2: #{encoder_forward.6} parent=0 // pred_check
    _
  $region3: #{encoder_forward.6} parent=0 // pred_check_branch
    %12 = sbr.rel (0) target = $region5
  $region4: #{encoder_forward.6} parent=0 // pred_region
    _
  $region5: #{encoder_forward.6} parent=0 // pred_fallthru
    _
  // Predicated region
  $region6: #{encoder_forward.6} parent=0 // pred_check
    _
  $region7: #{encoder_forward.6} parent=0 // pred_check_branch
    %14 = sbr.rel (0) target = $region9
  $region8: #{encoder_forward.6} parent=0 // pred_region
    _
  $region9: #{encoder_forward.6} parent=0 // pred_fallthru
    _
  // Predicated region
  $region10: #{encoder_forward.6} parent=0 // pred_check
    _
  $region11: #{encoder_forward.6} parent=0 // pred_check_branch
    %16 = sbr.rel (0) target = $region13
  $region12: #{encoder_forward.6} parent=0 // pred_region
    _
  $region13: #{encoder_forward.6} parent=0 // pred_fallthru
    _
  %v18 = vld [vmem:[%s0] sm:$0xff]
  %v19 = vld [vmem:[%s0 + $0x8] sm:$0xff]
  %v20 = vld [vmem:[%s0 + $0x10] sm:$0xf]
  %v21 = vld [vmem:[%s0 + $0x14] sm:$0xff]
  %v22 = vld [vmem:[%s0 + $0x1c] sm:$0xff]
  %v23 = vld [vmem:[%s0 + $0x24] sm:$0xf]
  %v24 = vld [vmem:[%s0 + $0x28] sm:$0xff]
  %v25 = vld [vmem:[%s0 + $0x30] sm:$0xff]
  %v26 = vld [vmem:[%s0 + $0x38] sm:$0xf]
  %v27 = vld [vmem:[%s0 + $0x3c] sm:$0xff]
  %v28 = vld [vmem:[%s0 + $0x44] sm:$0xff]
  %v29 = vld [vmem:[%s0 + $0x4c] sm:$0xf]
  %v30 = vld [vmem:[%s1] sm:$0xf]
  %v31 = vld [vmem:[%s1 + $0x4] sm:$0xf]
  %v32 = vld [vmem:[%s1 + $0x8] sm:$0xf]
  %v33 = vld [vmem:[%s1 + $0xc] sm:$0xf]
  %v34 = vld [vmem:[%s1 + $0x10] sm:$0xf]
  %v35 = vld [vmem:[%s1 + $0x14] sm:$0xf]
  %v36 = vld [vmem:[%s1 + $0x18] sm:$0xf]
  %v37 = vld [vmem:[%s1 + $0x1c] sm:$0xf]
  %v38 = vld [vmem:[%s1 + $0x20] sm:$0xf]
  %v39 = vld [vmem:[%s1 + $0x24] sm:$0xf]
  %v40 = vld [vmem:[%s1 + $0x28] sm:$0xf]
  %v41 = vld [vmem:[%s1 + $0x2c] sm:$0xf]
  %v42 = vld [vmem:[%s1 + $0x30] sm:$0xf]
  %v43 = vld [vmem:[%s1 + $0x34] sm:$0xf]
  %v44 = vld [vmem:[%s1 + $0x38] sm:$0xf]
  %v45 = vld [vmem:[%s1 + $0x3c] sm:$0xf]
  %v46 = vld [vmem:[%s1 + $0x40] sm:$0xf]
  %v47 = vld [vmem:[%s1 + $0x44] sm:$0xf]
  %v48 = vld [vmem:[%s1 + $0x48] sm:$0xf]
  %v49 = vld [vmem:[%s1 + $0x4c] sm:$0xf]
  %v50 = vld [vmem:[%s1 + $0x50] sm:$0xf]
  %v51 = vld [vmem:[%s1 + $0x54] sm:$0xf]
  %v52 = vld [vmem:[%s1 + $0x58] sm:$0xf]
  %v53 = vld [vmem:[%s1 + $0x5c] sm:$0xf]
  %v54 = vld [vmem:[%s1 + $0x60] sm:$0xf]
  %v55 = vld [vmem:[%s1 + $0x64] sm:$0xf]
  %v56 = vld [vmem:[%s1 + $0x68] sm:$0xf]
  %v57 = vld [vmem:[%s1 + $0x6c] sm:$0xf]
  %v58 = vld [vmem:[%s1 + $0x70] sm:$0xf]
  %v59 = vld [vmem:[%s1 + $0x74] sm:$0xf]
  %v60 = vld [vmem:[%s1 + $0x78] sm:$0xf]
  %v61 = vld [vmem:[%s1 + $0x7c] sm:$0xf]
  %v62 = vld [vmem:[%s1 + $0x80] sm:$0xf]
  %v63 = vld [vmem:[%s1 + $0x84] sm:$0xf]
  %v64 = vld [vmem:[%s1 + $0x88] sm:$0xf]
  %v65 = vld [vmem:[%s1 + $0x8c] sm:$0xf]
  %v66 = vld [vmem:[%s1 + $0x90] sm:$0xf]
  %v67 = vld [vmem:[%s1 + $0x94] sm:$0xf]
  %v68 = vld [vmem:[%s1 + $0x98] sm:$0xf]
  %v69 = vld [vmem:[%s1 + $0x9c] sm:$0xf]
  %v70 = vld [vmem:[%s1 + $0xa0] sm:$0xf]
  %v71 = vld [vmem:[%s1 + $0xa4] sm:$0xf]
  %v72 = vld [vmem:[%s1 + $0xa8] sm:$0xf]
  %v73 = vld [vmem:[%s1 + $0xac] sm:$0xf]
  %v74 = vld [vmem:[%s1 + $0xb0] sm:$0xf]
  %v75 = vld [vmem:[%s1 + $0xb4] sm:$0xf]
  %v76 = vld [vmem:[%s1 + $0xb8] sm:$0xf]
  %v77 = vld [vmem:[%s1 + $0xbc] sm:$0xf]
  %v78 = vld [vmem:[%s1 + $0xc0] sm:$0xf]
  %v79 = vld [vmem:[%s1 + $0xc4] sm:$0xf]
  %v80 = vld [vmem:[%s1 + $0xc8] sm:$0xf]
  %v81 = vld [vmem:[%s1 + $0xcc] sm:$0xf]
  %v82 = vld [vmem:[%s1 + $0xd0] sm:$0xf]
  %v83 = vld [vmem:[%s1 + $0xd4] sm:$0xf]
  %v84 = vld [vmem:[%s1 + $0xd8] sm:$0xf]
  %v85 = vld [vmem:[%s1 + $0xdc] sm:$0xf]
  %v86 = vld [vmem:[%s1 + $0xe0] sm:$0xf]
  %v87 = vld [vmem:[%s1 + $0xe4] sm:$0xf]
  %v88 = vld [vmem:[%s1 + $0xe8] sm:$0xf]
  %v89 = vld [vmem:[%s1 + $0xec] sm:$0xf]
  %v90 = vld [vmem:[%s1 + $0xf0] sm:$0xf]
  %v91 = vld [vmem:[%s1 + $0xf4] sm:$0xf]
  %v92 = vld [vmem:[%s1 + $0xf8] sm:$0xf]
  %v93 = vld [vmem:[%s1 + $0xfc] sm:$0xf]
  %v94 = vld [vmem:[%s1 + $0x100] sm:$0xf]
  %v95 = vld [vmem:[%s1 + $0x104] sm:$0xf]
  %v96 = vld [vmem:[%s1 + $0x108] sm:$0xf]
  %v97 = vld [vmem:[%s1 + $0x10c] sm:$0xf]
  %v98 = vld [vmem:[%s1 + $0x110] sm:$0xf]
  %v99 = vld [vmem:[%s1 + $0x114] sm:$0xf]
  %v100 = vld [vmem:[%s1 + $0x118] sm:$0xf]
  %v101 = vld [vmem:[%s1 + $0x11c] sm:$0xf]
  %v102 = vld [vmem:[%s1 + $0x120] sm:$0xf]
  %v103 = vld [vmem:[%s1 + $0x124] sm:$0xf]
  %v104 = vld [vmem:[%s1 + $0x128] sm:$0xf]
  %v105 = vld [vmem:[%s1 + $0x12c] sm:$0xf]
  %v106 = vld [vmem:[%s1 + $0x130] sm:$0xf]
  %v107 = vld [vmem:[%s1 + $0x134] sm:$0xf]
  %v108 = vld [vmem:[%s1 + $0x138] sm:$0xf]
  %v109 = vld [vmem:[%s1 + $0x13c] sm:$0xf]
  %v110 = vld [vmem:[%s2] sm:$0x1]
  %v112 = vlaneseq
  %v113 = vshrl.u32 %v112, 7
  %v114 = vsub.s32 0, %v113
  %v115 = vrot.slane %v110, %v114
  %v129 = vunpack.c.l.b16 %v18
  %v130 = vunpack.c.h.b16 %v18
  %v131 = vunpack.c.l.b16 %v19
  %v132 = vunpack.c.h.b16 %v19
  %v133 = vunpack.c.l.b16 %v20
  %v134 = vunpack.c.l.b16 %v21
  %v135 = vunpack.c.h.b16 %v21
  %v136 = vunpack.c.l.b16 %v22
  %v137 = vunpack.c.h.b16 %v22
  %v138 = vunpack.c.l.b16 %v23
  %v139 = vunpack.c.l.b16 %v24
  %v140 = vunpack.c.h.b16 %v24
  %v141 = vunpack.c.l.b16 %v25
  %v142 = vunpack.c.h.b16 %v25
  %v143 = vunpack.c.l.b16 %v26
  %v144 = vunpack.c.l.b16 %v27
  %v145 = vunpack.c.h.b16 %v27
  %v146 = vunpack.c.l.b16 %v28
  %v147 = vunpack.c.h.b16 %v28
  %v148 = vunpack.c.l.b16 %v29
  %v149 = vpack.c.b16 %v134, %v129
  %v150 = vpack.c.b16 %v135, %v130
  %v151 = vpack.c.b16 %v136, %v131
  %v152 = vpack.c.b16 %v137, %v132
  %v153 = vpack.c.b16 %v138, %v133
  %v154 = vpack.c.b16 %v144, %v139
  %v155 = vpack.c.b16 %v145, %v140
  %v156 = vpack.c.b16 %v146, %v141
  %v157 = vpack.c.b16 %v147, %v142
  %v158 = vpack.c.b16 %v148, %v143
  %v249 = vunpack.c.l.b16 %v30
  %v250 = vunpack.c.l.b16 %v31
  %v251 = vunpack.c.l.b16 %v32
  %v252 = vunpack.c.l.b16 %v33
  %v253 = vunpack.c.l.b16 %v34
  %v254 = vunpack.c.l.b16 %v35
  %v255 = vunpack.c.l.b16 %v36
  %v256 = vunpack.c.l.b16 %v37
  %v257 = vunpack.c.l.b16 %v38
  %v258 = vunpack.c.l.b16 %v39
  %v259 = vunpack.c.l.b16 %v40
  %v260 = vunpack.c.l.b16 %v41
  %v261 = vunpack.c.l.b16 %v42
  %v262 = vunpack.c.l.b16 %v43
  %v263 = vunpack.c.l.b16 %v44
  %v264 = vunpack.c.l.b16 %v45
  %v265 = vunpack.c.l.b16 %v46
  %v266 = vunpack.c.l.b16 %v47
  %v267 = vunpack.c.l.b16 %v48
  %v268 = vunpack.c.l.b16 %v49
  %v269 = vunpack.c.l.b16 %v50
  %v270 = vunpack.c.l.b16 %v51
  %v271 = vunpack.c.l.b16 %v52
  %v272 = vunpack.c.l.b16 %v53
  %v273 = vunpack.c.l.b16 %v54
  %v274 = vunpack.c.l.b16 %v55
  %v275 = vunpack.c.l.b16 %v56
  %v276 = vunpack.c.l.b16 %v57
  %v277 = vunpack.c.l.b16 %v58
  %v278 = vunpack.c.l.b16 %v59
  %v279 = vunpack.c.l.b16 %v60
  %v280 = vunpack.c.l.b16 %v61
  %v281 = vunpack.c.l.b16 %v62
  %v282 = vunpack.c.l.b16 %v63
  %v283 = vunpack.c.l.b16 %v64
  %v284 = vunpack.c.l.b16 %v65
  %v285 = vunpack.c.l.b16 %v66
  %v286 = vunpack.c.l.b16 %v67
  %v287 = vunpack.c.l.b16 %v68
  %v288 = vunpack.c.l.b16 %v69
  %v289 = vunpack.c.l.b16 %v70
  %v290 = vunpack.c.l.b16 %v71
  %v291 = vunpack.c.l.b16 %v72
  %v292 = vunpack.c.l.b16 %v73
  %v293 = vunpack.c.l.b16 %v74
  %v294 = vunpack.c.l.b16 %v75
  %v295 = vunpack.c.l.b16 %v76
  %v296 = vunpack.c.l.b16 %v77
  %v297 = vunpack.c.l.b16 %v78
  %v298 = vunpack.c.l.b16 %v79
  %v299 = vunpack.c.l.b16 %v80
  %v300 = vunpack.c.l.b16 %v81
  %v301 = vunpack.c.l.b16 %v82
  %v302 = vunpack.c.l.b16 %v83
  %v303 = vunpack.c.l.b16 %v84
  %v304 = vunpack.c.l.b16 %v85
  %v305 = vunpack.c.l.b16 %v86
  %v306 = vunpack.c.l.b16 %v87
  %v307 = vunpack.c.l.b16 %v88
  %v308 = vunpack.c.l.b16 %v89
  %v309 = vunpack.c.l.b16 %v90
  %v310 = vunpack.c.l.b16 %v91
  %v311 = vunpack.c.l.b16 %v92
  %v312 = vunpack.c.l.b16 %v93
  %v313 = vunpack.c.l.b16 %v94
  %v314 = vunpack.c.l.b16 %v95
  %v315 = vunpack.c.l.b16 %v96
  %v316 = vunpack.c.l.b16 %v97
  %v317 = vunpack.c.l.b16 %v98
  %v318 = vunpack.c.l.b16 %v99
  %v319 = vunpack.c.l.b16 %v100
  %v320 = vunpack.c.l.b16 %v101
  %v321 = vunpack.c.l.b16 %v102
  %v322 = vunpack.c.l.b16 %v103
  %v323 = vunpack.c.l.b16 %v104
  %v324 = vunpack.c.l.b16 %v105
  %v325 = vunpack.c.l.b16 %v106
  %v326 = vunpack.c.l.b16 %v107
  %v327 = vunpack.c.l.b16 %v108
  %v328 = vunpack.c.l.b16 %v109
  %v329 = vpack.c.b16 %v250, %v249
  %v330 = vpack.c.b16 %v252, %v251
  %v331 = vpack.c.b16 %v254, %v253
  %v332 = vpack.c.b16 %v256, %v255
  %v333 = vpack.c.b16 %v258, %v257
  %v334 = vpack.c.b16 %v260, %v259
  %v335 = vpack.c.b16 %v262, %v261
  %v336 = vpack.c.b16 %v264, %v263
  %v337 = vpack.c.b16 %v266, %v265
  %v338 = vpack.c.b16 %v268, %v267
  %v339 = vpack.c.b16 %v270, %v269
  %v340 = vpack.c.b16 %v272, %v271
  %v341 = vpack.c.b16 %v274, %v273
  %v342 = vpack.c.b16 %v276, %v275
  %v343 = vpack.c.b16 %v278, %v277
  %v344 = vpack.c.b16 %v280, %v279
  %v345 = vpack.c.b16 %v282, %v281
  %v346 = vpack.c.b16 %v284, %v283
  %v347 = vpack.c.b16 %v286, %v285
  %v348 = vpack.c.b16 %v288, %v287
  %v349 = vpack.c.b16 %v290, %v289
  %v350 = vpack.c.b16 %v292, %v291
  %v351 = vpack.c.b16 %v294, %v293
  %v352 = vpack.c.b16 %v296, %v295
  %v353 = vpack.c.b16 %v298, %v297
  %v354 = vpack.c.b16 %v300, %v299
  %v355 = vpack.c.b16 %v302, %v301
  %v356 = vpack.c.b16 %v304, %v303
  %v357 = vpack.c.b16 %v306, %v305
  %v358 = vpack.c.b16 %v308, %v307
  %v359 = vpack.c.b16 %v310, %v309
  %v360 = vpack.c.b16 %v312, %v311
  %v361 = vpack.c.b16 %v314, %v313
  %v362 = vpack.c.b16 %v316, %v315
  %v363 = vpack.c.b16 %v318, %v317
  %v364 = vpack.c.b16 %v320, %v319
  %v365 = vpack.c.b16 %v322, %v321
  %v366 = vpack.c.b16 %v324, %v323
  %v367 = vpack.c.b16 %v326, %v325
  %v368 = vpack.c.b16 %v328, %v327
  %409 = vmatprep.subr.bf16.mxu0 0
  %410 = vmatpush1.bf16.msra.mxu0 %v329
  %411 = vmatprep.subr.bf16.mxu0 0
  %412 = vmatpush1.bf16.msra.mxu0 %v330
  %413 = vmatprep.subr.bf16.mxu0 0
  %414 = vmatpush1.bf16.msra.mxu0 %v331
  %415 = vmatprep.subr.bf16.mxu0 0
  %416 = vmatpush1.bf16.msra.mxu0 %v332
  %417 = vmatprep.subr.bf16.mxu0 0
  %418 = vmatpush1.bf16.msra.mxu0 %v333
  %419 = vmatprep.subr.bf16.mxu0 0
  %420 = vmatpush1.bf16.msra.mxu0 %v334
  %421 = vmatprep.subr.bf16.mxu0 0
  %422 = vmatpush1.bf16.msra.mxu0 %v335
  %423 = vmatprep.subr.bf16.mxu0 0
  %424 = vmatpush1.bf16.msra.mxu0 %v336
  %425 = vmatprep.subr.bf16.mxu0 0
  %426 = vmatpush1.bf16.msra.mxu0 %v337
  %427 = vmatprep.subr.bf16.mxu0 0
  %428 = vmatpush1.bf16.msra.mxu0 %v338
  %429 = vmatprep.subr.bf16.mxu0 0
  %430 = vmatpush1.bf16.msra.mxu0 %v339
  %431 = vmatprep.subr.bf16.mxu0 0
  %432 = vmatpush1.bf16.msra.mxu0 %v340
  %433 = vmatprep.subr.bf16.mxu0 0
  %434 = vmatpush1.bf16.msra.mxu0 %v341
  %435 = vmatprep.subr.bf16.mxu0 0
  %436 = vmatpush1.bf16.msra.mxu0 %v342
  %437 = vmatprep.subr.bf16.mxu0 0
  %438 = vmatpush1.bf16.msra.mxu0 %v343
  %439 = vmatprep.subr.bf16.mxu0 0
  %440 = vmatpush1.bf16.msra.mxu0 %v344
  %441 = vmatprep.mubr.bf16.mxu0 %v150
  %442 = vmatmul.mubr.bf16.gmra.mrb[0].mxu0 %v149
  %v443 = vpop.f32.mrb[0].mxu0
  %v444 = vadd.f32 %v115, %v443
  %v445 = vpop.f32.mrb[0].mxu0
  %v446 = vpop.f32.mrb[0].mxu0
  %v447 = vadd.f32 %v115, %v446
  %v448 = vpop.f32.mrb[0].mxu0
  %449 = vmatprep.mubr.bf16.mxu0 %v155
  %450 = vmatmul.mubr.bf16.gmra.mrb[0].mxu0 %v154
  %v451 = vpop.f32.mrb[0].mxu0
  %v452 = vadd.f32 %v115, %v451
  %v453 = vpop.f32.mrb[0].mxu0
  %v454 = vpop.f32.mrb[0].mxu0
  %v455 = vadd.f32 %v115, %v454
  %v456 = vpop.f32.mrb[0].mxu0
  %457 = vdwg.mxu0
  %458 = vmatprep.subr.bf16.mxu0 0
  %459 = vmatpush1.bf16.msra.mxu0 %v345
  %460 = vmatprep.subr.bf16.mxu0 0
  %461 = vmatpush1.bf16.msra.mxu0 %v346
  %462 = vmatprep.subr.bf16.mxu0 0
  %463 = vmatpush1.bf16.msra.mxu0 %v347
  %464 = vmatprep.subr.bf16.mxu0 0
  %465 = vmatpush1.bf16.msra.mxu0 %v348
  %466 = vmatprep.subr.bf16.mxu0 0
  %467 = vmatpush1.bf16.msra.mxu0 %v349
  %468 = vmatprep.subr.bf16.mxu0 0
  %469 = vmatpush1.bf16.msra.mxu0 %v350
  %470 = vmatprep.subr.bf16.mxu0 0
  %471 = vmatpush1.bf16.msra.mxu0 %v351
  %472 = vmatprep.subr.bf16.mxu0 0
  %473 = vmatpush1.bf16.msra.mxu0 %v352
  %474 = vmatprep.subr.bf16.mxu0 0
  %475 = vmatpush1.bf16.msra.mxu0 %v353
  %476 = vmatprep.subr.bf16.mxu0 0
  %477 = vmatpush1.bf16.msra.mxu0 %v354
  %478 = vmatprep.subr.bf16.mxu0 0
  %479 = vmatpush1.bf16.msra.mxu0 %v355
  %480 = vmatprep.subr.bf16.mxu0 0
  %481 = vmatpush1.bf16.msra.mxu0 %v356
  %482 = vmatprep.subr.bf16.mxu0 0
  %483 = vmatpush1.bf16.msra.mxu0 %v357
  %484 = vmatprep.subr.bf16.mxu0 0
  %485 = vmatpush1.bf16.msra.mxu0 %v358
  %486 = vmatprep.subr.bf16.mxu0 0
  %487 = vmatpush1.bf16.msra.mxu0 %v359
  %488 = vmatprep.subr.bf16.mxu0 0
  %489 = vmatpush1.bf16.msra.mxu0 %v360
  %490 = vmatprep.mubr.bf16.mxu0 %v152
  %491 = vmatmul.mubr.bf16.gmra.mrb[0].mxu0 %v151
  %v492 = vpop.f32.mrb[0].mxu0
  %v493 = vadd.f32 %v444, %v492
  %v494 = vpop.f32.mrb[0].mxu0
  %v495 = vpop.f32.mrb[0].mxu0
  %v496 = vadd.f32 %v447, %v495
  %v497 = vpop.f32.mrb[0].mxu0
  %498 = vmatprep.mubr.bf16.mxu0 %v157
  %499 = vmatmul.mubr.bf16.gmra.mrb[0].mxu0 %v156
  %v500 = vpop.f32.mrb[0].mxu0
  %v501 = vadd.f32 %v452, %v500
  %v502 = vpop.f32.mrb[0].mxu0
  %v503 = vpop.f32.mrb[0].mxu0
  %v504 = vadd.f32 %v455, %v503
  %v505 = vpop.f32.mrb[0].mxu0
  %506 = vdwg.mxu0
  %507 = vmatprep.subr.bf16.mxu0 0
  %508 = vmatpush1.bf16.msra.mxu0 %v361
  %509 = vmatprep.subr.bf16.mxu0 0
  %510 = vmatpush1.bf16.msra.mxu0 %v362
  %511 = vmatprep.subr.bf16.mxu0 0
  %512 = vmatpush1.bf16.msra.mxu0 %v363
  %513 = vmatprep.subr.bf16.mxu0 0
  %514 = vmatpush1.bf16.msra.mxu0 %v364
  %515 = vmatprep.subr.bf16.mxu0 0
  %516 = vmatpush1.bf16.msra.mxu0 %v365
  %517 = vmatprep.subr.bf16.mxu0 0
  %518 = vmatpush1.bf16.msra.mxu0 %v366
  %519 = vmatprep.subr.bf16.mxu0 0
  %520 = vmatpush1.bf16.msra.mxu0 %v367
  %521 = vmatprep.subr.bf16.mxu0 0
  %522 = vmatpush1.bf16.msra.mxu0 %v368
  %523 = vmatprep.subr.bf16.mxu0 0
  %524 = vmatpush1.bf16.msra.mxu0 0
  %525 = vmatprep.subr.bf16.mxu0 0
  %526 = vmatpush1.bf16.msra.mxu0 0
  %527 = vmatprep.subr.bf16.mxu0 0
  %528 = vmatpush1.bf16.msra.mxu0 0
  %529 = vmatprep.subr.bf16.mxu0 0
  %530 = vmatpush1.bf16.msra.mxu0 0
  %531 = vmatprep.subr.bf16.mxu0 0
  %532 = vmatpush1.bf16.msra.mxu0 0
  %533 = vmatprep.subr.bf16.mxu0 0
  %534 = vmatpush1.bf16.msra.mxu0 0
  %535 = vmatprep.subr.bf16.mxu0 0
  %536 = vmatpush1.bf16.msra.mxu0 0
  %537 = vmatprep.subr.bf16.mxu0 0
  %538 = vmatpush1.bf16.msra.mxu0 0
  %539 = vmatprep.mubr.bf16.mxu0 0
  %540 = vmatmul.mubr.bf16.gmra.mrb[0].mxu0 %v153
  %v541 = vpop.f32.mrb[0].mxu0
  %v542 = vadd.f32 %v493, %v541
  %v543 = vpop.f32.mrb[0].mxu0
  %v544 = vpop.f32.mrb[0].mxu0
  %v545 = vadd.f32 %v496, %v544
  %v546 = vpop.f32.mrb[0].mxu0
  %547 = vmatprep.mubr.bf16.mxu0 0
  %548 = vmatmul.mubr.bf16.gmra.mrb[0].mxu0 %v158
  %v549 = vpop.f32.mrb[0].mxu0
  %v550 = vadd.f32 %v501, %v549
  %v551 = vpop.f32.mrb[0].mxu0
  %v552 = vpop.f32.mrb[0].mxu0
  %v553 = vadd.f32 %v504, %v552
  %v554 = vpop.f32.mrb[0].mxu0
  %555 = vdwg.mxu0
  %v556 = vmax.f32 %v542, 0.0
  %v557 = vmax.f32 %v545, 0.0
  %v558 = vmax.f32 %v550, 0.0
  %v559 = vmax.f32 %v553, 0.0
  %v560 = vpack.c.bf16 %v557, %v556
  %v561 = vpack.c.bf16 %v559, %v558
  %v564 = vunpack.c.l.b16 %v560
  %v565 = vunpack.c.h.b16 %v560
  %v566 = vunpack.c.l.b16 %v561
  %v567 = vunpack.c.h.b16 %v561
  %v568 = vpack.c.b16 %v564, %v564
  %v569 = vpack.c.b16 %v565, %v565
  %v570 = vpack.c.b16 %v566, %v566
  %v571 = vpack.c.b16 %v567, %v567
  %576 = vst [vmem:[%s3] sm:$0xf] %v568
  %577 = vst [vmem:[%s3 + $0x4] sm:$0xf] %v569
  %578 = vst [vmem:[%s3 + $0x8] sm:$0xf] %v570
  %579 = vst [vmem:[%s3 + $0xc] sm:$0xf] %v571
  %v580 = vadd.f32 %v556, %v557
  %v581 = vadd.f32 %v580, %v558
  %v582 = vadd.f32 %v581, %v559
  %v583 = vrot.slane %v582, 4
  %v584 = vadd.f32 %v582, %v583
  %v585 = vrot.slane %v584, 2
  %v586 = vadd.f32 %v584, %v585
  %v587 = vrot.slane %v586, 1
  %v588 = vadd.f32 %v586, %v587
  %589 = vst [vmem:[%s4] sm:$0x1] %v588
  %v590 = vmul.f32 %v556, %v556
  %v591 = vmul.f32 %v557, %v557
  %v592 = vmul.f32 %v558, %v558
  %v593 = vmul.f32 %v559, %v559
  %v594 = vadd.f32 %v590, %v591
  %v595 = vadd.f32 %v594, %v592
  %v596 = vadd.f32 %v595, %v593
  %v597 = vrot.slane %v596, 4
  %v598 = vadd.f32 %v596, %v597
  %v599 = vrot.slane %v598, 2
  %v600 = vadd.f32 %v598, %v599
  %v601 = vrot.slane %v600, 1
  %v602 = vadd.f32 %v600, %v601
  %603 = vst [vmem:[%s5] sm:$0x1] %v602
  // Predicated region
  $region14: #{encoder_forward.6} parent=0 // pred_check
    _
  $region15: #{encoder_forward.6} parent=0 // pred_check_branch
    %605 = sbr.rel (0) target = $region17
  $region16: #{encoder_forward.6} parent=0 // pred_region
    _
  $region17: #{encoder_forward.6} parent=0 // pred_fallthru
    _
  // Predicated region
  $region18: #{encoder_forward.6} parent=0 // pred_check
    _
  $region19: #{encoder_forward.6} parent=0 // pred_check_branch
    %607 = sbr.rel (0) target = $region21
  $region20: #{encoder_forward.6} parent=0 // pred_region
    _
  $region21: #{encoder_forward.6} parent=0 // pred_fallthru
    _
  // Predicated region
  $region22: #{encoder_forward.6} parent=0 // pred_check
    _
  $region23: #{encoder_forward.6} parent=0 // pred_check_branch
    %609 = sbr.rel (0) target = $region25
  $region24: #{encoder_forward.6} parent=0 // pred_region
    _
  $region25: #{encoder_forward.6} parent=0 // pred_fallthru
    _
  // Predicated region
  $region26: #{encoder_forward.6} parent=0 // pred_check
    _
  $region27: #{encoder_forward.6} parent=0 // pred_check_branch
    %611 = sbr.rel (0) target = $region29
  $region28: #{encoder_forward.6} parent=0 // pred_region
    _
  $region29: #{encoder_forward.6} parent=0 // pred_fallthru
    _
  // Predicated region
  $region30: #{encoder_forward.6} parent=0 // pred_check
    _
  $region31: #{encoder_forward.6} parent=0 // pred_check_branch
    %613 = sbr.rel (0) target = $region33
  $region32: #{encoder_forward.6} parent=0 // pred_region
    _
  $region33: #{encoder_forward.6} parent=0 // pred_fallthru
    _
  // Predicated region
  $region34: #{encoder_forward.6} parent=0 // pred_check
    _
  $region35: #{encoder_forward.6} parent=0 // pred_check_branch
    %615 = sbr.rel (0) target = $region37
  $region36: #{encoder_forward.6} parent=0 // pred_region
    _
  $region37: #{encoder_forward.6} parent=0 // pred_fallthru
    _

// kernel: encoder_forward.7
$region0: #{encoder_forward.7}
  #allocation0 [shape = 'u32[]', space=smem, size = 0x4, offset = 0x4, fixed_abs, tag = 'smem constant byte address 0x4 - core index']
  #allocation1 [shape = 'u32[144,128]{1,0:T(1,128)}', space=vmem, size = 0x12000, scoped, tag = 'internal scratch']
  #allocation2 [shape = 'f32[16,128]{1,0:T(8,128)}', space=vmem, size = 0x2000, scoped, tag = 'scratch operand']
  %s0 = inlined_call_operand.vmem [shape: bf16[16,1152], index: 0, kind: input, shape index: {}]
  %s1 = inlined_call_operand.vmem [shape: bf16[1152,256], index: 1, kind: input, shape index: {}]
  %s2 = inlined_call_operand.vmem [shape: f32[1,256], index: 2, kind: input, shape index: {}]
  %s3 = inlined_call_operand.vmem [shape: f32[16,256], index: 3, kind: output, shape index: {}]
  %s4 = sld [smem:[#allocation0]]
  $region132: #{encoder_forward.7} parent=0
    _
  %s6 = ssub.s32 1, %s4
  %s7 = scalar_select 0, %s6, %s4
  $region1: #{encoder_forward.7} parent=0
    #allocation3 [shape = 'u8[589824]{0}', space=vmem, size = 0x90000, scoped, tag = 'input window, operand 1']
    #allocation4 [shape = 'u8[16384]{0}', space=vmem, size = 0x4000, scoped, tag = 'output window, operand 0']
    loop: start=0, step=1, limit=4
    $region2: #{encoder_forward.7} parent=1 // loop_pre_header
      _
    $region3: #{encoder_forward.7} parent=1 // loop_header
      %s9 = sphi 0, %s13
      %p10 = scmp.ge.s32.totalorder %s9, 4
      %s16 = sphi 0, %s28
      %s17 = sphi 0, %s24
      %s18 = sphi 0, %s16
      %s19 = sphi 0, %s17
      %s20 = sphi 0, %s18
      %s21 = sphi 0, %s19
      %s31 = sphi 0, %s33
      %s34 = sphi 0, %s31
      %s35 = sphi 0, %s34
      %s51 = sphi 0, %s35
      %s59 = sphi 0, %s61
      %s62 = sphi 0, %s59
      %s63 = sphi 0, %s62
      %s79 = sphi 0, %s63
      %s85 = sphi 0, %s87
      %s88 = sphi 0, %s85
      %s89 = sphi 0, %s88
      %s105 = sphi 0, %s89
      %s111 = sphi 0, %s113
      %s114 = sphi 0, %s111
      %s115 = sphi 0, %s114
      %s131 = sphi 0, %s115
    $region4: #{encoder_forward.7} parent=1 // loop_header_branch
      %12 = sbr.rel (%p10) target = $region8
    $region5: #{encoder_forward.7} parent=1 // loop_body
      %s14 = ssub.s32 %s9, 1
      %s15 = ssub.s32 %s9, 2
      %s22 = sadd.s32 1, %s17
      %p23 = scmp.ge.s32.totalorder %s22, 1
      %s24 = scalar_select %p23, 0, %s22
      %s25 = sadd.s32 1, %s16
      %s26 = scalar_select %p23, %s25, %s16
      %p27 = scmp.ge.s32.totalorder %s26, 2
      %s28 = scalar_select %p27, 0, %s26
      %s29 = ssub.s32 %s17, %s24
      %p30 = scmp.eq.s32.totalorder %s29, 0
      %s32 = sadd.s32 %s31, 1
      %s33 = scalar_select %p30, %s31, %s32
      %p36 = pneg %p30
      %p37 = scmp.eq.s32.totalorder %s9, 1
      %p38 = por %p36, %p37
      %p39 = scmp.ne.s32.totalorder %s31, %s34
      %p40 = scmp.eq.s32.totalorder %s9, 0
      %p41 = por %p39, %p40
      %p42 = scmp.ne.s32.totalorder %s31, %s34
      %p43 = scmp.eq.s32.totalorder %s14, 1
      %p44 = por %p42, %p43
      %p45 = scmp.ne.s32.totalorder %s34, %s35
      %p46 = scmp.eq.s32.totalorder %s14, 0
      %p47 = por %p45, %p46
      %p48 = scmp.ne.s32.totalorder %s34, %s35
      %p49 = scmp.eq.s32.totalorder %s15, 1
      %p50 = por %p48, %p49
      %p52 = scmp.ne.s32.totalorder %s35, %s51
      %p53 = scmp.eq.s32.totalorder %s15, 0
      %p54 = por %p52, %p53
      %s55 = ssub.s32 %s17, %s24
      %s56 = ssub.s32 %s16, %s28
      %s57 = sor.u32 %s55, %s56
      %p58 = scmp.eq.s32.totalorder %s57, 0
      %s60 = sadd.s32 %s59, 1
      %s61 = scalar_select %p58, %s59, %s60
      %p64 = pneg %p58
      %p65 = scmp.eq.s32.totalorder %s9, 1
      %p66 = por %p64, %p65
      %p67 = scmp.ne.s32.totalorder %s59, %s62
      %p68 = scmp.eq.s32.totalorder %s9, 0
      %p69 = por %p67, %p68
      %p70 = scmp.ne.s32.totalorder %s59, %s62
      %p71 = scmp.eq.s32.totalorder %s14, 1
      %p72 = por %p70, %p71
      %p73 = scmp.ne.s32.totalorder %s62, %s63
      %p74 = scmp.eq.s32.totalorder %s14, 0
      %p75 = por %p73, %p74
      %p76 = scmp.ne.s32.totalorder %s62, %s63
      %p77 = scmp.eq.s32.totalorder %s15, 1
      %p78 = por %p76, %p77
      %p80 = scmp.ne.s32.totalorder %s63, %s79
      %p81 = scmp.eq.s32.totalorder %s15, 0
      %p82 = por %p80, %p81
      %s83 = ssub.s32 %s16, %s28
      %p84 = scmp.eq.s32.totalorder %s83, 0
      %s86 = sadd.s32 %s85, 1
      %s87 = scalar_select %p84, %s85, %s86
      %p90 = pneg %p84
      %p91 = scmp.eq.s32.totalorder %s9, 1
      %p92 = por %p90, %p91
      %p93 = scmp.ne.s32.totalorder %s85, %s88
      %p94 = scmp.eq.s32.totalorder %s9, 0
      %p95 = por %p93, %p94
      %p96 = scmp.ne.s32.totalorder %s85, %s88
      %p97 = scmp.eq.s32.totalorder %s14, 1
      %p98 = por %p96, %p97
      %p99 = scmp.ne.s32.totalorder %s88, %s89
      %p100 = scmp.eq.s32.totalorder %s14, 0
      %p101 = por %p99, %p100
      %p102 = scmp.ne.s32.totalorder %s88, %s89
      %p103 = scmp.eq.s32.totalorder %s15, 1
      %p104 = por %p102, %p103
      %p106 = scmp.ne.s32.totalorder %s89, %s105
      %p107 = scmp.eq.s32.totalorder %s15, 0
      %p108 = por %p106, %p107
      %s109 = ssub.s32 %s16, %s28
      %p110 = scmp.eq.s32.totalorder %s109, 0
      %s112 = sadd.s32 %s111, 1
      %s113 = scalar_select %p110, %s111, %s112
      %p116 = pneg %p110
      %p117 = scmp.eq.s32.totalorder %s9, 1
      %p118 = por %p116, %p117
      %p119 = scmp.ne.s32.totalorder %s111, %s114
      %p120 = scmp.eq.s32.totalorder %s9, 0
      %p121 = por %p119, %p120
      %p122 = scmp.ne.s32.totalorder %s111, %s114
      %p123 = scmp.eq.s32.totalorder %s14, 1
      %p124 = por %p122, %p123
      %p125 = scmp.ne.s32.totalorder %s114, %s115
      %p126 = scmp.eq.s32.totalorder %s14, 0
      %p127 = por %p125, %p126
      %p128 = scmp.ne.s32.totalorder %s114, %s115
      %p129 = scmp.eq.s32.totalorder %s15, 1
      %p130 = por %p128, %p129
      %p132 = scmp.ne.s32.totalorder %s115, %s131
      %p133 = scmp.eq.s32.totalorder %s15, 0
      %p134 = por %p132, %p133
      %p135 = scmp.le.s32.totalorder 1, %s9
      %p136 = scmp.lt.s32.totalorder %s9, 3
      %p137 = pnand %p135, %p136
      %p138 = pneg %p137
      // Predicated region
      $region9: #{encoder_forward.7} parent=5 // pred_check
        _
      $region10: #{encoder_forward.7} parent=5 // pred_check_branch
        %140 = sbr.rel (%p137) target = $region12
      $region11: #{encoder_forward.7} parent=5 // pred_region
        %s141 = ssub.s32 %s9, 1
        // Predicated region
        $region13: #{encoder_forward.7} parent=11 // pred_check
          %p142 = pneg %p47
        $region14: #{encoder_forward.7} parent=11 // pred_check_branch
          %144 = sbr.rel (%p142) target = $region16
        $region15: #{encoder_forward.7} parent=11 // pred_region
          %s145 = smul.u32 9, %s19
          %p146 = scmp.lt.s32.totalorder %s145, 8
          %s147 = scalar_select %p146, %s145, 8
          %s148 = smul.addr %s147, 4
          %s149 = scalar_lea.vmem %s0, %s148
          %s150 = smul.u32 9, %s19
        $region16: #{encoder_forward.7} parent=11 // pred_fallthru
          _
      $region12: #{encoder_forward.7} parent=5 // pred_fallthru
        _
      %p151 = scmp.lt.s32.totalorder %s9, 2
      // Predicated region
      $region17: #{encoder_forward.7} parent=5 // pred_check
        %p152 = pneg %p151
      $region18: #{encoder_forward.7} parent=5 // pred_check_branch
        %154 = sbr.rel (%p152) target = $region20
      $region19: #{encoder_forward.7} parent=5 // pred_region
        // Predicated region
        $region21: #{encoder_forward.7} parent=19 // pred_check
          %p155 = pneg %p69
        $region22: #{encoder_forward.7} parent=19 // pred_check_branch
          %157 = sbr.rel (%p155) target = $region24
        $region23: #{encoder_forward.7} parent=19 // pred_region
          %s158 = sand.u32 %s59, 1
          %s159 = sand.u32 %s59, 1
          %s160 = smul.addr %s159, 576
          %s161 = scalar_lea.vmem [#allocation3], %s160
          %s162 = smul.u32 144, %s17
          %s163 = smul.addr %s162, 2
          %s164 = sadd.s32 %s16, %s163
          %s165 = smul.addr %s164, 4
          %s166 = scalar_lea.vmem %s1, %s165
          // Predicated region
          $region25: #{encoder_forward.7} parent=23 // pred_check
            _
          $region26: #{encoder_forward.7} parent=23 // pred_check_branch
            %168 = sbr.rel (0) target = $region28
          $region27: #{encoder_forward.7} parent=23 // pred_region
            // Predicated region
            $region29: #{encoder_forward.7} parent=27 // pred_check
              _
            $region30: #{encoder_forward.7} parent=27 // pred_check_branch
              %170 = sbr.rel target = $region32
            $region31: #{encoder_forward.7} parent=27 // pred_region
              // Predicated region
              $region44: #{encoder_forward.7} parent=31 // pred_check
                _
              $region45: #{encoder_forward.7} parent=31 // pred_check_branch
                %471 = sbr.rel (0) target = $region47
              $region46: #{encoder_forward.7} parent=31 // pred_region
                loop: start=0, step=1, limit=1
                $region48: #{encoder_forward.7} parent=46 // loop_pre_header
                  _
                $region49: #{encoder_forward.7} parent=46 // loop_header
                  %s473 = sphi 0, %s477
                  %p474 = scmp.ge.s32.totalorder %s473, 1
                  %s478 = sphi %s166, %s166
                  %s479 = sphi %s161, %s161
                $region50: #{encoder_forward.7} parent=46 // loop_header_branch
                  %476 = sbr.rel (%p474) target = $region54
                $region51: #{encoder_forward.7} parent=46 // loop_body
                  _
                $region52: #{encoder_forward.7} parent=46 // loop_footer
                  %s477 = sadd.s32 1, %s473
                $region53: #{encoder_forward.7} parent=46 // loop_footer_branch
                  %472 = sbr.rel target = $region49
                $region54: #{encoder_forward.7} parent=46 // loop_exit
                  _
                loop: start=0, step=1, limit=1
                $region55: #{encoder_forward.7} parent=46 // loop_pre_header
                  _
                $region56: #{encoder_forward.7} parent=46 // loop_header
                  %s482 = sphi 0, %s486
                  %p483 = scmp.ge.s32.totalorder %s482, 1
                  %s487 = sphi %s166, %s166
                  %s488 = sphi %s161, %s161
                $region57: #{encoder_forward.7} parent=46 // loop_header_branch
                  %485 = sbr.rel (%p483) target = $region61
                $region58: #{encoder_forward.7} parent=46 // loop_body
                  %v489 = vld [vmem:[%s487] sm:$0xf]
                  %490 = vst [vmem:[%s488] sm:$0xf] %v489
                  %v491 = vld [vmem:[%s487 + $0x8] sm:$0xf]
                  %492 = vst [vmem:[%s488 + $0x4] sm:$0xf] %v491
                  %v493 = vld [vmem:[%s487 + $0x10] sm:$0xf]
                  %494 = vst [vmem:[%s488 + $0x8] sm:$0xf] %v493
                  %v495 = vld [vmem:[%s487 + $0x18] sm:$0xf]
                  %496 = vst [vmem:[%s488 + $0xc] sm:$0xf] %v495
                  %v497 = vld [vmem:[%s487 + $0x20] sm:$0xf]
                  %498 = vst [vmem:[%s488 + $0x10] sm:$0xf] %v497
                  %v499 = vld [vmem:[%s487 + $0x28] sm:$0xf]
                  %500 = vst [vmem:[%s488 + $0x14] sm:$0xf] %v499
                  %v501 = vld [vmem:[%s487 + $0x30] sm:$0xf]
                  %502 = vst [vmem:[%s488 + $0x18] sm:$0xf] %v501
                  %v503 = vld [vmem:[%s487 + $0x38] sm:$0xf]
                  %504 = vst [vmem:[%s488 + $0x1c] sm:$0xf] %v503
                  %v505 = vld [vmem:[%s487 + $0x40] sm:$0xf]
                  %506 = vst [vmem:[%s488 + $0x20] sm:$0xf] %v505
                  %v507 = vld [vmem:[%s487 + $0x48] sm:$0xf]
                  %508 = vst [vmem:[%s488 + $0x24] sm:$0xf] %v507
                  %v509 = vld [vmem:[%s487 + $0x50] sm:$0xf]
                  %510 = vst [vmem:[%s488 + $0x28] sm:$0xf] %v509
                  %v511 = vld [vmem:[%s487 + $0x58] sm:$0xf]
                  %512 = vst [vmem:[%s488 + $0x2c] sm:$0xf] %v511
                  %v513 = vld [vmem:[%s487 + $0x60] sm:$0xf]
                  %514 = vst [vmem:[%s488 + $0x30] sm:$0xf] %v513
                  %v515 = vld [vmem:[%s487 + $0x68] sm:$0xf]
                  %516 = vst [vmem:[%s488 + $0x34] sm:$0xf] %v515
                  %v517 = vld [vmem:[%s487 + $0x70] sm:$0xf]
                  %518 = vst [vmem:[%s488 + $0x38] sm:$0xf] %v517
                  %v519 = vld [vmem:[%s487 + $0x78] sm:$0xf]
                  %520 = vst [vmem:[%s488 + $0x3c] sm:$0xf] %v519
                  %v521 = vld [vmem:[%s487 + $0x80] sm:$0xf]
                  %522 = vst [vmem:[%s488 + $0x40] sm:$0xf] %v521
                  %v523 = vld [vmem:[%s487 + $0x88] sm:$0xf]
                  %524 = vst [vmem:[%s488 + $0x44] sm:$0xf] %v523
                  %v525 = vld [vmem:[%s487 + $0x90] sm:$0xf]
                  %526 = vst [vmem:[%s488 + $0x48] sm:$0xf] %v525
                  %v527 = vld [vmem:[%s487 + $0x98] sm:$0xf]
                  %528 = vst [vmem:[%s488 + $0x4c] sm:$0xf] %v527
                  %v529 = vld [vmem:[%s487 + $0xa0] sm:$0xf]
                  %530 = vst [vmem:[%s488 + $0x50] sm:$0xf] %v529
                  %v531 = vld [vmem:[%s487 + $0xa8] sm:$0xf]
                  %532 = vst [vmem:[%s488 + $0x54] sm:$0xf] %v531
                  %v533 = vld [vmem:[%s487 + $0xb0] sm:$0xf]
                  %534 = vst [vmem:[%s488 + $0x58] sm:$0xf] %v533
                  %v535 = vld [vmem:[%s487 + $0xb8] sm:$0xf]
                  %536 = vst [vmem:[%s488 + $0x5c] sm:$0xf] %v535
                  %v537 = vld [vmem:[%s487 + $0xc0] sm:$0xf]
                  %538 = vst [vmem:[%s488 + $0x60] sm:$0xf] %v537
                  %v539 = vld [vmem:[%s487 + $0xc8] sm:$0xf]
                  %540 = vst [vmem:[%s488 + $0x64] sm:$0xf] %v539
                  %v541 = vld [vmem:[%s487 + $0xd0] sm:$0xf]
                  %542 = vst [vmem:[%s488 + $0x68] sm:$0xf] %v541
                  %v543 = vld [vmem:[%s487 + $0xd8] sm:$0xf]
                  %544 = vst [vmem:[%s488 + $0x6c] sm:$0xf] %v543
                  %v545 = vld [vmem:[%s487 + $0xe0] sm:$0xf]
                  %546 = vst [vmem:[%s488 + $0x70] sm:$0xf] %v545
                  %v547 = vld [vmem:[%s487 + $0xe8] sm:$0xf]
                  %548 = vst [vmem:[%s488 + $0x74] sm:$0xf] %v547
                  %v549 = vld [vmem:[%s487 + $0xf0] sm:$0xf]
                  %550 = vst [vmem:[%s488 + $0x78] sm:$0xf] %v549
                  %v551 = vld [vmem:[%s487 + $0xf8] sm:$0xf]
                  %552 = vst [vmem:[%s488 + $0x7c] sm:$0xf] %v551
                  %v553 = vld [vmem:[%s487 + $0x100] sm:$0xf]
                  %554 = vst [vmem:[%s488 + $0x80] sm:$0xf] %v553
                  %v555 = vld [vmem:[%s487 + $0x108] sm:$0xf]
                  %556 = vst [vmem:[%s488 + $0x84] sm:$0xf] %v555
                  %v557 = vld [vmem:[%s487 + $0x110] sm:$0xf]
                  %558 = vst [vmem:[%s488 + $0x88] sm:$0xf] %v557
                  %v559 = vld [vmem:[%s487 + $0x118] sm:$0xf]
                  %560 = vst [vmem:[%s488 + $0x8c] sm:$0xf] %v559
                  %v561 = vld [vmem:[%s487 + $0x120] sm:$0xf]
                  %562 = vst [vmem:[%s488 + $0x90] sm:$0xf] %v561
                  %v563 = vld [vmem:[%s487 + $0x128] sm:$0xf]
                  %564 = vst [vmem:[%s488 + $0x94] sm:$0xf] %v563
                  %v565 = vld [vmem:[%s487 + $0x130] sm:$0xf]
                  %566 = vst [vmem:[%s488 + $0x98] sm:$0xf] %v565
                  %v567 = vld [vmem:[%s487 + $0x138] sm:$0xf]
                  %568 = vst [vmem:[%s488 + $0x9c] sm:$0xf] %v567
                  %v569 = vld [vmem:[%s487 + $0x140] sm:$0xf]
                  %570 = vst [vmem:[%s488 + $0xa0] sm:$0xf] %v569
                  %v571 = vld [vmem:[%s487 + $0x148] sm:$0xf]
                  %572 = vst [vmem:[%s488 + $0xa4] sm:$0xf] %v571
                  %v573 = vld [vmem:[%s487 + $0x150] sm:$0xf]
                  %574 = vst [vmem:[%s488 + $0xa8] sm:$0xf] %v573
                  %v575 = vld [vmem:[%s487 + $0x158] sm:$0xf]
                  %576 = vst [vmem:[%s488 + $0xac] sm:$0xf] %v575
                  %v577 = vld [vmem:[%s487 + $0x160] sm:$0xf]
                  %578 = vst [vmem:[%s488 + $0xb0] sm:$0xf] %v577
                  %v579 = vld [vmem:[%s487 + $0x168] sm:$0xf]
                  %580 = vst [vmem:[%s488 + $0xb4] sm:$0xf] %v579
                  %v581 = vld [vmem:[%s487 + $0x170] sm:$0xf]
                  %582 = vst [vmem:[%s488 + $0xb8] sm:$0xf] %v581
                  %v583 = vld [vmem:[%s487 + $0x178] sm:$0xf]
                  %584 = vst [vmem:[%s488 + $0xbc] sm:$0xf] %v583
                  %v585 = vld [vmem:[%s487 + $0x180] sm:$0xf]
                  %586 = vst [vmem:[%s488 + $0xc0] sm:$0xf] %v585
                  %v587 = vld [vmem:[%s487 + $0x188] sm:$0xf]
                  %588 = vst [vmem:[%s488 + $0xc4] sm:$0xf] %v587
                  %v589 = vld [vmem:[%s487 + $0x190] sm:$0xf]
                  %590 = vst [vmem:[%s488 + $0xc8] sm:$0xf] %v589
                  %v591 = vld [vmem:[%s487 + $0x198] sm:$0xf]
                  %592 = vst [vmem:[%s488 + $0xcc] sm:$0xf] %v591
                  %v593 = vld [vmem:[%s487 + $0x1a0] sm:$0xf]
                  %594 = vst [vmem:[%s488 + $0xd0] sm:$0xf] %v593
                  %v595 = vld [vmem:[%s487 + $0x1a8] sm:$0xf]
                  %596 = vst [vmem:[%s488 + $0xd4] sm:$0xf] %v595
                  %v597 = vld [vmem:[%s487 + $0x1b0] sm:$0xf]
                  %598 = vst [vmem:[%s488 + $0xd8] sm:$0xf] %v597
                  %v599 = vld [vmem:[%s487 + $0x1b8] sm:$0xf]
                  %600 = vst [vmem:[%s488 + $0xdc] sm:$0xf] %v599
                  %v601 = vld [vmem:[%s487 + $0x1c0] sm:$0xf]
                  %602 = vst [vmem:[%s488 + $0xe0] sm:$0xf] %v601
                  %v603 = vld [vmem:[%s487 + $0x1c8] sm:$0xf]
                  %604 = vst [vmem:[%s488 + $0xe4] sm:$0xf] %v603
                  %v605 = vld [vmem:[%s487 + $0x1d0] sm:$0xf]
                  %606 = vst [vmem:[%s488 + $0xe8] sm:$0xf] %v605
                  %v607 = vld [vmem:[%s487 + $0x1d8] sm:$0xf]
                  %608 = vst [vmem:[%s488 + $0xec] sm:$0xf] %v607
                  %v609 = vld [vmem:[%s487 + $0x1e0] sm:$0xf]
                  %610 = vst [vmem:[%s488 + $0xf0] sm:$0xf] %v609
                  %v611 = vld [vmem:[%s487 + $0x1e8] sm:$0xf]
                  %612 = vst [vmem:[%s488 + $0xf4] sm:$0xf] %v611
                  %v613 = vld [vmem:[%s487 + $0x1f0] sm:$0xf]
                  %614 = vst [vmem:[%s488 + $0xf8] sm:$0xf] %v613
                  %v615 = vld [vmem:[%s487 + $0x1f8] sm:$0xf]
                  %616 = vst [vmem:[%s488 + $0xfc] sm:$0xf] %v615
                  %v617 = vld [vmem:[%s487 + $0x200] sm:$0xf]
                  %618 = vst [vmem:[%s488 + $0x100] sm:$0xf] %v617
                  %v619 = vld [vmem:[%s487 + $0x208] sm:$0xf]
                  %620 = vst [vmem:[%s488 + $0x104] sm:$0xf] %v619
                  %v621 = vld [vmem:[%s487 + $0x210] sm:$0xf]
                  %622 = vst [vmem:[%s488 + $0x108] sm:$0xf] %v621
                  %v623 = vld [vmem:[%s487 + $0x218] sm:$0xf]
                  %624 = vst [vmem:[%s488 + $0x10c] sm:$0xf] %v623
                  %v625 = vld [vmem:[%s487 + $0x220] sm:$0xf]
                  %626 = vst [vmem:[%s488 + $0x110] sm:$0xf] %v625
                  %v627 = vld [vmem:[%s487 + $0x228] sm:$0xf]
                  %628 = vst [vmem:[%s488 + $0x114] sm:$0xf] %v627
                  %v629 = vld [vmem:[%s487 + $0x230] sm:$0xf]
                  %630 = vst [vmem:[%s488 + $0x118] sm:$0xf] %v629
                  %v631 = vld [vmem:[%s487 + $0x238] sm:$0xf]
                  %632 = vst [vmem:[%s488 + $0x11c] sm:$0xf] %v631
                  %v633 = vld [vmem:[%s487 + $0x240] sm:$0xf]
                  %634 = vst [vmem:[%s488 + $0x120] sm:$0xf] %v633
                  %v635 = vld [vmem:[%s487 + $0x248] sm:$0xf]
                  %636 = vst [vmem:[%s488 + $0x124] sm:$0xf] %v635
                  %v637 = vld [vmem:[%s487 + $0x250] sm:$0xf]
                  %638 = vst [vmem:[%s488 + $0x128] sm:$0xf] %v637
                  %v639 = vld [vmem:[%s487 + $0x258] sm:$0xf]
                  %640 = vst [vmem:[%s488 + $0x12c] sm:$0xf] %v639
                  %v641 = vld [vmem:[%s487 + $0x260] sm:$0xf]
                  %642 = vst [vmem:[%s488 + $0x130] sm:$0xf] %v641
                  %v643 = vld [vmem:[%s487 + $0x268] sm:$0xf]
                  %644 = vst [vmem:[%s488 + $0x134] sm:$0xf] %v643
                  %v645 = vld [vmem:[%s487 + $0x270] sm:$0xf]
                  %646 = vst [vmem:[%s488 + $0x138] sm:$0xf] %v645
                  %v647 = vld [vmem:[%s487 + $0x278] sm:$0xf]
                  %648 = vst [vmem:[%s488 + $0x13c] sm:$0xf] %v647
                  %v649 = vld [vmem:[%s487 + $0x280] sm:$0xf]
                  %650 = vst [vmem:[%s488 + $0x140] sm:$0xf] %v649
                  %v651 = vld [vmem:[%s487 + $0x288] sm:$0xf]
                  %652 = vst [vmem:[%s488 + $0x144] sm:$0xf] %v651
                  %v653 = vld [vmem:[%s487 + $0x290] sm:$0xf]
                  %654 = vst [vmem:[%s488 + $0x148] sm:$0xf] %v653
                  %v655 = vld [vmem:[%s487 + $0x298] sm:$0xf]
                  %656 = vst [vmem:[%s488 + $0x14c] sm:$0xf] %v655
                  %v657 = vld [vmem:[%s487 + $0x2a0] sm:$0xf]
                  %658 = vst [vmem:[%s488 + $0x150] sm:$0xf] %v657
                  %v659 = vld [vmem:[%s487 + $0x2a8] sm:$0xf]
                  %660 = vst [vmem:[%s488 + $0x154] sm:$0xf] %v659
                  %v661 = vld [vmem:[%s487 + $0x2b0] sm:$0xf]
                  %662 = vst [vmem:[%s488 + $0x158] sm:$0xf] %v661
                  %v663 = vld [vmem:[%s487 + $0x2b8] sm:$0xf]
                  %664 = vst [vmem:[%s488 + $0x15c] sm:$0xf] %v663
                  %v665 = vld [vmem:[%s487 + $0x2c0] sm:$0xf]
                  %666 = vst [vmem:[%s488 + $0x160] sm:$0xf] %v665
                  %v667 = vld [vmem:[%s487 + $0x2c8] sm:$0xf]
                  %668 = vst [vmem:[%s488 + $0x164] sm:$0xf] %v667
                  %v669 = vld [vmem:[%s487 + $0x2d0] sm:$0xf]
                  %670 = vst [vmem:[%s488 + $0x168] sm:$0xf] %v669
                  %v671 = vld [vmem:[%s487 + $0x2d8] sm:$0xf]
                  %672 = vst [vmem:[%s488 + $0x16c] sm:$0xf] %v671
                  %v673 = vld [vmem:[%s487 + $0x2e0] sm:$0xf]
                  %674 = vst [vmem:[%s488 + $0x170] sm:$0xf] %v673
                  %v675 = vld [vmem:[%s487 + $0x2e8] sm:$0xf]
                  %676 = vst [vmem:[%s488 + $0x174] sm:$0xf] %v675
                  %v677 = vld [vmem:[%s487 + $0x2f0] sm:$0xf]
                  %678 = vst [vmem:[%s488 + $0x178] sm:$0xf] %v677
                  %v679 = vld [vmem:[%s487 + $0x2f8] sm:$0xf]
                  %680 = vst [vmem:[%s488 + $0x17c] sm:$0xf] %v679
                  %v681 = vld [vmem:[%s487 + $0x300] sm:$0xf]
                  %682 = vst [vmem:[%s488 + $0x180] sm:$0xf] %v681
                  %v683 = vld [vmem:[%s487 + $0x308] sm:$0xf]
                  %684 = vst [vmem:[%s488 + $0x184] sm:$0xf] %v683
                  %v685 = vld [vmem:[%s487 + $0x310] sm:$0xf]
                  %686 = vst [vmem:[%s488 + $0x188] sm:$0xf] %v685
                  %v687 = vld [vmem:[%s487 + $0x318] sm:$0xf]
                  %688 = vst [vmem:[%s488 + $0x18c] sm:$0xf] %v687
                  %v689 = vld [vmem:[%s487 + $0x320] sm:$0xf]
                  %690 = vst [vmem:[%s488 + $0x190] sm:$0xf] %v689
                  %v691 = vld [vmem:[%s487 + $0x328] sm:$0xf]
                  %692 = vst [vmem:[%s488 + $0x194] sm:$0xf] %v691
                  %v693 = vld [vmem:[%s487 + $0x330] sm:$0xf]
                  %694 = vst [vmem:[%s488 + $0x198] sm:$0xf] %v693
                  %v695 = vld [vmem:[%s487 + $0x338] sm:$0xf]
                  %696 = vst [vmem:[%s488 + $0x19c] sm:$0xf] %v695
                  %v697 = vld [vmem:[%s487 + $0x340] sm:$0xf]
                  %698 = vst [vmem:[%s488 + $0x1a0] sm:$0xf] %v697
                  %v699 = vld [vmem:[%s487 + $0x348] sm:$0xf]
                  %700 = vst [vmem:[%s488 + $0x1a4] sm:$0xf] %v699
                  %v701 = vld [vmem:[%s487 + $0x350] sm:$0xf]
                  %702 = vst [vmem:[%s488 + $0x1a8] sm:$0xf] %v701
                  %v703 = vld [vmem:[%s487 + $0x358] sm:$0xf]
                  %704 = vst [vmem:[%s488 + $0x1ac] sm:$0xf] %v703
                  %v705 = vld [vmem:[%s487 + $0x360] sm:$0xf]
                  %706 = vst [vmem:[%s488 + $0x1b0] sm:$0xf] %v705
                  %v707 = vld [vmem:[%s487 + $0x368] sm:$0xf]
                  %708 = vst [vmem:[%s488 + $0x1b4] sm:$0xf] %v707
                  %v709 = vld [vmem:[%s487 + $0x370] sm:$0xf]
                  %710 = vst [vmem:[%s488 + $0x1b8] sm:$0xf] %v709
                  %v711 = vld [vmem:[%s487 + $0x378] sm:$0xf]
                  %712 = vst [vmem:[%s488 + $0x1bc] sm:$0xf] %v711
                  %v713 = vld [vmem:[%s487 + $0x380] sm:$0xf]
                  %714 = vst [vmem:[%s488 + $0x1c0] sm:$0xf] %v713
                  %v715 = vld [vmem:[%s487 + $0x388] sm:$0xf]
                  %716 = vst [vmem:[%s488 + $0x1c4] sm:$0xf] %v715
                  %v717 = vld [vmem:[%s487 + $0x390] sm:$0xf]
                  %718 = vst [vmem:[%s488 + $0x1c8] sm:$0xf] %v717
                  %v719 = vld [vmem:[%s487 + $0x398] sm:$0xf]
                  %720 = vst [vmem:[%s488 + $0x1cc] sm:$0xf] %v719
                  %v721 = vld [vmem:[%s487 + $0x3a0] sm:$0xf]
                  %722 = vst [vmem:[%s488 + $0x1d0] sm:$0xf] %v721
                  %v723 = vld [vmem:[%s487 + $0x3a8] sm:$0xf]
                  %724 = vst [vmem:[%s488 + $0x1d4] sm:$0xf] %v723
                  %v725 = vld [vmem:[%s487 + $0x3b0] sm:$0xf]
                  %726 = vst [vmem:[%s488 + $0x1d8] sm:$0xf] %v725
                  %v727 = vld [vmem:[%s487 + $0x3b8] sm:$0xf]
                  %728 = vst [vmem:[%s488 + $0x1dc] sm:$0xf] %v727
                  %v729 = vld [vmem:[%s487 + $0x3c0] sm:$0xf]
                  %730 = vst [vmem:[%s488 + $0x1e0] sm:$0xf] %v729
                  %v731 = vld [vmem:[%s487 + $0x3c8] sm:$0xf]
                  %732 = vst [vmem:[%s488 + $0x1e4] sm:$0xf] %v731
                  %v733 = vld [vmem:[%s487 + $0x3d0] sm:$0xf]
                  %734 = vst [vmem:[%s488 + $0x1e8] sm:$0xf] %v733
                  %v735 = vld [vmem:[%s487 + $0x3d8] sm:$0xf]
                  %736 = vst [vmem:[%s488 + $0x1ec] sm:$0xf] %v735
                  %v737 = vld [vmem:[%s487 + $0x3e0] sm:$0xf]
                  %738 = vst [vmem:[%s488 + $0x1f0] sm:$0xf] %v737
                  %v739 = vld [vmem:[%s487 + $0x3e8] sm:$0xf]
                  %740 = vst [vmem:[%s488 + $0x1f4] sm:$0xf] %v739
                  %v741 = vld [vmem:[%s487 + $0x3f0] sm:$0xf]
                  %742 = vst [vmem:[%s488 + $0x1f8] sm:$0xf] %v741
                  %v743 = vld [vmem:[%s487 + $0x3f8] sm:$0xf]
                  %744 = vst [vmem:[%s488 + $0x1fc] sm:$0xf] %v743
                  %v745 = vld [vmem:[%s487 + $0x400] sm:$0xf]
                  %746 = vst [vmem:[%s488 + $0x200] sm:$0xf] %v745
                  %v747 = vld [vmem:[%s487 + $0x408] sm:$0xf]
                  %748 = vst [vmem:[%s488 + $0x204] sm:$0xf] %v747
                  %v749 = vld [vmem:[%s487 + $0x410] sm:$0xf]
                  %750 = vst [vmem:[%s488 + $0x208] sm:$0xf] %v749
                  %v751 = vld [vmem:[%s487 + $0x418] sm:$0xf]
                  %752 = vst [vmem:[%s488 + $0x20c] sm:$0xf] %v751
                  %v753 = vld [vmem:[%s487 + $0x420] sm:$0xf]
                  %754 = vst [vmem:[%s488 + $0x210] sm:$0xf] %v753
                  %v755 = vld [vmem:[%s487 + $0x428] sm:$0xf]
                  %756 = vst [vmem:[%s488 + $0x214] sm:$0xf] %v755
                  %v757 = vld [vmem:[%s487 + $0x430] sm:$0xf]
                  %758 = vst [vmem:[%s488 + $0x218] sm:$0xf] %v757
                  %v759 = vld [vmem:[%s487 + $0x438] sm:$0xf]
                  %760 = vst [vmem:[%s488 + $0x21c] sm:$0xf] %v759
                  %v761 = vld [vmem:[%s487 + $0x440] sm:$0xf]
                  %762 = vst [vmem:[%s488 + $0x220] sm:$0xf] %v761
                  %v763 = vld [vmem:[%s487 + $0x448] sm:$0xf]
                  %764 = vst [vmem:[%s488 + $0x224] sm:$0xf] %v763
                  %v765 = vld [vmem:[%s487 + $0x450] sm:$0xf]
                  %766 = vst [vmem:[%s488 + $0x228] sm:$0xf] %v765
                  %v767 = vld [vmem:[%s487 + $0x458] sm:$0xf]
                  %768 = vst [vmem:[%s488 + $0x22c] sm:$0xf] %v767
                  %v769 = vld [vmem:[%s487 + $0x460] sm:$0xf]
                  %770 = vst [vmem:[%s488 + $0x230] sm:$0xf] %v769
                  %v771 = vld [vmem:[%s487 + $0x468] sm:$0xf]
                  %772 = vst [vmem:[%s488 + $0x234] sm:$0xf] %v771
                  %v773 = vld [vmem:[%s487 + $0x470] sm:$0xf]
                  %774 = vst [vmem:[%s488 + $0x238] sm:$0xf] %v773
                  %v775 = vld [vmem:[%s487 + $0x478] sm:$0xf]
                  %776 = vst [vmem:[%s488 + $0x23c] sm:$0xf] %v775
                $region59: #{encoder_forward.7} parent=46 // loop_footer
                  %s486 = sadd.s32 1, %s482
                $region60: #{encoder_forward.7} parent=46 // loop_footer_branch
                  %481 = sbr.rel target = $region56
                $region61: #{encoder_forward.7} parent=46 // loop_exit
                  _
              $region47: #{encoder_forward.7} parent=31 // pred_fallthru
                _
            $region32: #{encoder_forward.7} parent=27 // pred_fallthru
              _
            // Predicated region
            $region33: #{encoder_forward.7} parent=27 // pred_check
              _
            $region34: #{encoder_forward.7} parent=27 // pred_check_branch
              %172 = sbr.rel (0) target = $region36
            $region35: #{encoder_forward.7} parent=27 // pred_region
              loop: start=0, step=1, limit=1
              $region37: #{encoder_forward.7} parent=35 // loop_pre_header
                _
              $region38: #{encoder_forward.7} parent=35 // loop_header
                %s175 = sphi 0, %s179
                %p176 = scmp.ge.s32.totalorder %s175, 1
                %s180 = sphi %s166, %s166
                %s181 = sphi %s161, %s161
              $region39: #{encoder_forward.7} parent=35 // loop_header_branch
                %178 = sbr.rel (%p176) target = $region43
              $region40: #{encoder_forward.7} parent=35 // loop_body
                %v182 = vld [vmem:[%s180] sm:$0xf]
                %183 = vst [vmem:[%s181] sm:$0xf] %v182
                %v184 = vld [vmem:[%s180 + $0x8] sm:$0xf]
                %185 = vst [vmem:[%s181 + $0x4] sm:$0xf] %v184
                %v186 = vld [vmem:[%s180 + $0x10] sm:$0xf]
                %187 = vst [vmem:[%s181 + $0x8] sm:$0xf] %v186
                %v188 = vld [vmem:[%s180 + $0x18] sm:$0xf]
                %189 = vst [vmem:[%s181 + $0xc] sm:$0xf] %v188
                %v190 = vld [vmem:[%s180 + $0x20] sm:$0xf]
                %191 = vst [vmem:[%s181 + $0x10] sm:$0xf] %v190
                %v192 = vld [vmem:[%s180 + $0x28] sm:$0xf]
                %193 = vst [vmem:[%s181 + $0x14] sm:$0xf] %v192
                %v194 = vld [vmem:[%s180 + $0x30] sm:$0xf]
                %195 = vst [vmem:[%s181 + $0x18] sm:$0xf] %v194
                %v196 = vld [vmem:[%s180 + $0x38] sm:$0xf]
                %197 = vst [vmem:[%s181 + $0x1c] sm:$0xf] %v196
                %v198 = vld [vmem:[%s180 + $0x40] sm:$0xf]
                %199 = vst [vmem:[%s181 + $0x20] sm:$0xf] %v198
                %v200 = vld [vmem:[%s180 + $0x48] sm:$0xf]
                %201 = vst [vmem:[%s181 + $0x24] sm:$0xf] %v200
                %v202 = vld [vmem:[%s180 + $0x50] sm:$0xf]
                %203 = vst [vmem:[%s181 + $0x28] sm:$0xf] %v202
                %v204 = vld [vmem:[%s180 + $0x58] sm:$0xf]
                %205 = vst [vmem:[%s181 + $0x2c] sm:$0xf] %v204
                %v206 = vld [vmem:[%s180 + $0x60] sm:$0xf]
                %207 = vst [vmem:[%s181 + $0x30] sm:$0xf] %v206
                %v208 = vld [vmem:[%s180 + $0x68] sm:$0xf]
                %209 = vst [vmem:[%s181 + $0x34] sm:$0xf] %v208
                %v210 = vld [vmem:[%s180 + $0x70] sm:$0xf]
                %211 = vst [vmem:[%s181 + $0x38] sm:$0xf] %v210
                %v212 = vld [vmem:[%s180 + $0x78] sm:$0xf]
                %213 = vst [vmem:[%s181 + $0x3c] sm:$0xf] %v212
                %v214 = vld [vmem:[%s180 + $0x80] sm:$0xf]
                %215 = vst [vmem:[%s181 + $0x40] sm:$0xf] %v214
                %v216 = vld [vmem:[%s180 + $0x88] sm:$0xf]
                %217 = vst [vmem:[%s181 + $0x44] sm:$0xf] %v216
                %v218 = vld [vmem:[%s180 + $0x90] sm:$0xf]
                %219 = vst [vmem:[%s181 + $0x48] sm:$0xf] %v218
                %v220 = vld [vmem:[%s180 + $0x98] sm:$0xf]
                %221 = vst [vmem:[%s181 + $0x4c] sm:$0xf] %v220
                %v222 = vld [vmem:[%s180 + $0xa0] sm:$0xf]
                %223 = vst [vmem:[%s181 + $0x50] sm:$0xf] %v222
                %v224 = vld [vmem:[%s180 + $0xa8] sm:$0xf]
                %225 = vst [vmem:[%s181 + $0x54] sm:$0xf] %v224
                %v226 = vld [vmem:[%s180 + $0xb0] sm:$0xf]
                %227 = vst [vmem:[%s181 + $0x58] sm:$0xf] %v226
                %v228 = vld [vmem:[%s180 + $0xb8] sm:$0xf]
                %229 = vst [vmem:[%s181 + $0x5c] sm:$0xf] %v228
                %v230 = vld [vmem:[%s180 + $0xc0] sm:$0xf]
                %231 = vst [vmem:[%s181 + $0x60] sm:$0xf] %v230
                %v232 = vld [vmem:[%s180 + $0xc8] sm:$0xf]
                %233 = vst [vmem:[%s181 + $0x64] sm:$0xf] %v232
                %v234 = vld [vmem:[%s180 + $0xd0] sm:$0xf]
                %235 = vst [vmem:[%s181 + $0x68] sm:$0xf] %v234
                %v236 = vld [vmem:[%s180 + $0xd8] sm:$0xf]
                %237 = vst [vmem:[%s181 + $0x6c] sm:$0xf] %v236
                %v238 = vld [vmem:[%s180 + $0xe0] sm:$0xf]
                %239 = vst [vmem:[%s181 + $0x70] sm:$0xf] %v238
                %v240 = vld [vmem:[%s180 + $0xe8] sm:$0xf]
                %241 = vst [vmem:[%s181 + $0x74] sm:$0xf] %v240
                %v242 = vld [vmem:[%s180 + $0xf0] sm:$0xf]
                %243 = vst [vmem:[%s181 + $0x78] sm:$0xf] %v242
                %v244 = vld [vmem:[%s180 + $0xf8] sm:$0xf]
                %245 = vst [vmem:[%s181 + $0x7c] sm:$0xf] %v244
                %v246 = vld [vmem:[%s180 + $0x100] sm:$0xf]
                %247 = vst [vmem:[%s181 + $0x80] sm:$0xf] %v246
                %v248 = vld [vmem:[%s180 + $0x108] sm:$0xf]
                %249 = vst [vmem:[%s181 + $0x84] sm:$0xf] %v248
                %v250 = vld [vmem:[%s180 + $0x110] sm:$0xf]
                %251 = vst [vmem:[%s181 + $0x88] sm:$0xf] %v250
                %v252 = vld [vmem:[%s180 + $0x118] sm:$0xf]
                %253 = vst [vmem:[%s181 + $0x8c] sm:$0xf] %v252
                %v254 = vld [vmem:[%s180 + $0x120] sm:$0xf]
                %255 = vst [vmem:[%s181 + $0x90] sm:$0xf] %v254
                %v256 = vld [vmem:[%s180 + $0x128] sm:$0xf]
                %257 = vst [vmem:[%s181 + $0x94] sm:$0xf] %v256
                %v258 = vld [vmem:[%s180 + $0x130] sm:$0xf]
                %259 = vst [vmem:[%s181 + $0x98] sm:$0xf] %v258
                %v260 = vld [vmem:[%s180 + $0x138] sm:$0xf]
                %261 = vst [vmem:[%s181 + $0x9c] sm:$0xf] %v260
                %v262 = vld [vmem:[%s180 + $0x140] sm:$0xf]
                %263 = vst [vmem:[%s181 + $0xa0] sm:$0xf] %v262
                %v264 = vld [vmem:[%s180 + $0x148] sm:$0xf]
                %265 = vst [vmem:[%s181 + $0xa4] sm:$0xf] %v264
                %v266 = vld [vmem:[%s180 + $0x150] sm:$0xf]
                %267 = vst [vmem:[%s181 + $0xa8] sm:$0xf] %v266
                %v268 = vld [vmem:[%s180 + $0x158] sm:$0xf]
                %269 = vst [vmem:[%s181 + $0xac] sm:$0xf] %v268
                %v270 = vld [vmem:[%s180 + $0x160] sm:$0xf]
                %271 = vst [vmem:[%s181 + $0xb0] sm:$0xf] %v270
                %v272 = vld [vmem:[%s180 + $0x168] sm:$0xf]
                %273 = vst [vmem:[%s181 + $0xb4] sm:$0xf] %v272
                %v274 = vld [vmem:[%s180 + $0x170] sm:$0xf]
                %275 = vst [vmem:[%s181 + $0xb8] sm:$0xf] %v274
                %v276 = vld [vmem:[%s180 + $0x178] sm:$0xf]
                %277 = vst [vmem:[%s181 + $0xbc] sm:$0xf] %v276
                %v278 = vld [vmem:[%s180 + $0x180] sm:$0xf]
                %279 = vst [vmem:[%s181 + $0xc0] sm:$0xf] %v278
                %v280 = vld [vmem:[%s180 + $0x188] sm:$0xf]
                %281 = vst [vmem:[%s181 + $0xc4] sm:$0xf] %v280
                %v282 = vld [vmem:[%s180 + $0x190] sm:$0xf]
                %283 = vst [vmem:[%s181 + $0xc8] sm:$0xf] %v282
                %v284 = vld [vmem:[%s180 + $0x198] sm:$0xf]
                %285 = vst [vmem:[%s181 + $0xcc] sm:$0xf] %v284
                %v286 = vld [vmem:[%s180 + $0x1a0] sm:$0xf]
                %287 = vst [vmem:[%s181 + $0xd0] sm:$0xf] %v286
                %v288 = vld [vmem:[%s180 + $0x1a8] sm:$0xf]
                %289 = vst [vmem:[%s181 + $0xd4] sm:$0xf] %v288
                %v290 = vld [vmem:[%s180 + $0x1b0] sm:$0xf]
                %291 = vst [vmem:[%s181 + $0xd8] sm:$0xf] %v290
                %v292 = vld [vmem:[%s180 + $0x1b8] sm:$0xf]
                %293 = vst [vmem:[%s181 + $0xdc] sm:$0xf] %v292
                %v294 = vld [vmem:[%s180 + $0x1c0] sm:$0xf]
                %295 = vst [vmem:[%s181 + $0xe0] sm:$0xf] %v294
                %v296 = vld [vmem:[%s180 + $0x1c8] sm:$0xf]
                %297 = vst [vmem:[%s181 + $0xe4] sm:$0xf] %v296
                %v298 = vld [vmem:[%s180 + $0x1d0] sm:$0xf]
                %299 = vst [vmem:[%s181 + $0xe8] sm:$0xf] %v298
                %v300 = vld [vmem:[%s180 + $0x1d8] sm:$0xf]
                %301 = vst [vmem:[%s181 + $0xec] sm:$0xf] %v300
                %v302 = vld [vmem:[%s180 + $0x1e0] sm:$0xf]
                %303 = vst [vmem:[%s181 + $0xf0] sm:$0xf] %v302
                %v304 = vld [vmem:[%s180 + $0x1e8] sm:$0xf]
                %305 = vst [vmem:[%s181 + $0xf4] sm:$0xf] %v304
                %v306 = vld [vmem:[%s180 + $0x1f0] sm:$0xf]
                %307 = vst [vmem:[%s181 + $0xf8] sm:$0xf] %v306
                %v308 = vld [vmem:[%s180 + $0x1f8] sm:$0xf]
                %309 = vst [vmem:[%s181 + $0xfc] sm:$0xf] %v308
                %v310 = vld [vmem:[%s180 + $0x200] sm:$0xf]
                %311 = vst [vmem:[%s181 + $0x100] sm:$0xf] %v310
                %v312 = vld [vmem:[%s180 + $0x208] sm:$0xf]
                %313 = vst [vmem:[%s181 + $0x104] sm:$0xf] %v312
                %v314 = vld [vmem:[%s180 + $0x210] sm:$0xf]
                %315 = vst [vmem:[%s181 + $0x108] sm:$0xf] %v314
                %v316 = vld [vmem:[%s180 + $0x218] sm:$0xf]
                %317 = vst [vmem:[%s181 + $0x10c] sm:$0xf] %v316
                %v318 = vld [vmem:[%s180 + $0x220] sm:$0xf]
                %319 = vst [vmem:[%s181 + $0x110] sm:$0xf] %v318
                %v320 = vld [vmem:[%s180 + $0x228] sm:$0xf]
                %321 = vst [vmem:[%s181 + $0x114] sm:$0xf] %v320
                %v322 = vld [vmem:[%s180 + $0x230] sm:$0xf]
                %323 = vst [vmem:[%s181 + $0x118] sm:$0xf] %v322
                %v324 = vld [vmem:[%s180 + $0x238] sm:$0xf]
                %325 = vst [vmem:[%s181 + $0x11c] sm:$0xf] %v324
                %v326 = vld [vmem:[%s180 + $0x240] sm:$0xf]
                %327 = vst [vmem:[%s181 + $0x120] sm:$0xf] %v326
                %v328 = vld [vmem:[%s180 + $0x248] sm:$0xf]
                %329 = vst [vmem:[%s181 + $0x124] sm:$0xf] %v328
                %v330 = vld [vmem:[%s180 + $0x250] sm:$0xf]
                %331 = vst [vmem:[%s181 + $0x128] sm:$0xf] %v330
                %v332 = vld [vmem:[%s180 + $0x258] sm:$0xf]
                %333 = vst [vmem:[%s181 + $0x12c] sm:$0xf] %v332
                %v334 = vld [vmem:[%s180 + $0x260] sm:$0xf]
                %335 = vst [vmem:[%s181 + $0x130] sm:$0xf] %v334
                %v336 = vld [vmem:[%s180 + $0x268] sm:$0xf]
                %337 = vst [vmem:[%s181 + $0x134] sm:$0xf] %v336
                %v338 = vld [vmem:[%s180 + $0x270] sm:$0xf]
                %339 = vst [vmem:[%s181 + $0x138] sm:$0xf] %v338
                %v340 = vld [vmem:[%s180 + $0x278] sm:$0xf]
                %341 = vst [vmem:[%s181 + $0x13c] sm:$0xf] %v340
                %v342 = vld [vmem:[%s180 + $0x280] sm:$0xf]
                %343 = vst [vmem:[%s181 + $0x140] sm:$0xf] %v342
                %v344 = vld [vmem:[%s180 + $0x288] sm:$0xf]
                %345 = vst [vmem:[%s181 + $0x144] sm:$0xf] %v344
                %v346 = vld [vmem:[%s180 + $0x290] sm:$0xf]
                %347 = vst [vmem:[%s181 + $0x148] sm:$0xf] %v346
                %v348 = vld [vmem:[%s180 + $0x298] sm:$0xf]
                %349 = vst [vmem:[%s181 + $0x14c] sm:$0xf] %v348
                %v350 = vld [vmem:[%s180 + $0x2a0] sm:$0xf]
                %351 = vst [vmem:[%s181 + $0x150] sm:$0xf] %v350
                %v352 = vld [vmem:[%s180 + $0x2a8] sm:$0xf]
                %353 = vst [vmem:[%s181 + $0x154] sm:$0xf] %v352
                %v354 = vld [vmem:[%s180 + $0x2b0] sm:$0xf]
                %355 = vst [vmem:[%s181 + $0x158] sm:$0xf] %v354
                %v356 = vld [vmem:[%s180 + $0x2b8] sm:$0xf]
                %357 = vst [vmem:[%s181 + $0x15c] sm:$0xf] %v356
                %v358 = vld [vmem:[%s180 + $0x2c0] sm:$0xf]
                %359 = vst [vmem:[%s181 + $0x160] sm:$0xf] %v358
                %v360 = vld [vmem:[%s180 + $0x2c8] sm:$0xf]
                %361 = vst [vmem:[%s181 + $0x164] sm:$0xf] %v360
                %v362 = vld [vmem:[%s180 + $0x2d0] sm:$0xf]
                %363 = vst [vmem:[%s181 + $0x168] sm:$0xf] %v362
                %v364 = vld [vmem:[%s180 + $0x2d8] sm:$0xf]
                %365 = vst [vmem:[%s181 + $0x16c] sm:$0xf] %v364
                %v366 = vld [vmem:[%s180 + $0x2e0] sm:$0xf]
                %367 = vst [vmem:[%s181 + $0x170] sm:$0xf] %v366
                %v368 = vld [vmem:[%s180 + $0x2e8] sm:$0xf]
                %369 = vst [vmem:[%s181 + $0x174] sm:$0xf] %v368
                %v370 = vld [vmem:[%s180 + $0x2f0] sm:$0xf]
                %371 = vst [vmem:[%s181 + $0x178] sm:$0xf] %v370
                %v372 = vld [vmem:[%s180 + $0x2f8] sm:$0xf]
                %373 = vst [vmem:[%s181 + $0x17c] sm:$0xf] %v372
                %v374 = vld [vmem:[%s180 + $0x300] sm:$0xf]
                %375 = vst [vmem:[%s181 + $0x180] sm:$0xf] %v374
                %v376 = vld [vmem:[%s180 + $0x308] sm:$0xf]
                %377 = vst [vmem:[%s181 + $0x184] sm:$0xf] %v376
                %v378 = vld [vmem:[%s180 + $0x310] sm:$0xf]
                %379 = vst [vmem:[%s181 + $0x188] sm:$0xf] %v378
                %v380 = vld [vmem:[%s180 + $0x318] sm:$0xf]
                %381 = vst [vmem:[%s181 + $0x18c] sm:$0xf] %v380
                %v382 = vld [vmem:[%s180 + $0x320] sm:$0xf]
                %383 = vst [vmem:[%s181 + $0x190] sm:$0xf] %v382
                %v384 = vld [vmem:[%s180 + $0x328] sm:$0xf]
                %385 = vst [vmem:[%s181 + $0x194] sm:$0xf] %v384
                %v386 = vld [vmem:[%s180 + $0x330] sm:$0xf]
                %387 = vst [vmem:[%s181 + $0x198] sm:$0xf] %v386
                %v388 = vld [vmem:[%s180 + $0x338] sm:$0xf]
                %389 = vst [vmem:[%s181 + $0x19c] sm:$0xf] %v388
                %v390 = vld [vmem:[%s180 + $0x340] sm:$0xf]
                %391 = vst [vmem:[%s181 + $0x1a0] sm:$0xf] %v390
                %v392 = vld [vmem:[%s180 + $0x348] sm:$0xf]
                %393 = vst [vmem:[%s181 + $0x1a4] sm:$0xf] %v392
                %v394 = vld [vmem:[%s180 + $0x350] sm:$0xf]
                %395 = vst [vmem:[%s181 + $0x1a8] sm:$0xf] %v394
                %v396 = vld [vmem:[%s180 + $0x358] sm:$0xf]
                %397 = vst [vmem:[%s181 + $0x1ac] sm:$0xf] %v396
                %v398 = vld [vmem:[%s180 + $0x360] sm:$0xf]
                %399 = vst [vmem:[%s181 + $0x1b0] sm:$0xf] %v398
                %v400 = vld [vmem:[%s180 + $0x368] sm:$0xf]
                %401 = vst [vmem:[%s181 + $0x1b4] sm:$0xf] %v400
                %v402 = vld [vmem:[%s180 + $0x370] sm:$0xf]
                %403 = vst [vmem:[%s181 + $0x1b8] sm:$0xf] %v402
                %v404 = vld [vmem:[%s180 + $0x378] sm:$0xf]
                %405 = vst [vmem:[%s181 + $0x1bc] sm:$0xf] %v404
                %v406 = vld [vmem:[%s180 + $0x380] sm:$0xf]
                %407 = vst [vmem:[%s181 + $0x1c0] sm:$0xf] %v406
                %v408 = vld [vmem:[%s180 + $0x388] sm:$0xf]
                %409 = vst [vmem:[%s181 + $0x1c4] sm:$0xf] %v408
                %v410 = vld [vmem:[%s180 + $0x390] sm:$0xf]
                %411 = vst [vmem:[%s181 + $0x1c8] sm:$0xf] %v410
                %v412 = vld [vmem:[%s180 + $0x398] sm:$0xf]
                %413 = vst [vmem:[%s181 + $0x1cc] sm:$0xf] %v412
                %v414 = vld [vmem:[%s180 + $0x3a0] sm:$0xf]
                %415 = vst [vmem:[%s181 + $0x1d0] sm:$0xf] %v414
                %v416 = vld [vmem:[%s180 + $0x3a8] sm:$0xf]
                %417 = vst [vmem:[%s181 + $0x1d4] sm:$0xf] %v416
                %v418 = vld [vmem:[%s180 + $0x3b0] sm:$0xf]
                %419 = vst [vmem:[%s181 + $0x1d8] sm:$0xf] %v418
                %v420 = vld [vmem:[%s180 + $0x3b8] sm:$0xf]
                %421 = vst [vmem:[%s181 + $0x1dc] sm:$0xf] %v420
                %v422 = vld [vmem:[%s180 + $0x3c0] sm:$0xf]
                %423 = vst [vmem:[%s181 + $0x1e0] sm:$0xf] %v422
                %v424 = vld [vmem:[%s180 + $0x3c8] sm:$0xf]
                %425 = vst [vmem:[%s181 + $0x1e4] sm:$0xf] %v424
                %v426 = vld [vmem:[%s180 + $0x3d0] sm:$0xf]
                %427 = vst [vmem:[%s181 + $0x1e8] sm:$0xf] %v426
                %v428 = vld [vmem:[%s180 + $0x3d8] sm:$0xf]
                %429 = vst [vmem:[%s181 + $0x1ec] sm:$0xf] %v428
                %v430 = vld [vmem:[%s180 + $0x3e0] sm:$0xf]
                %431 = vst [vmem:[%s181 + $0x1f0] sm:$0xf] %v430
                %v432 = vld [vmem:[%s180 + $0x3e8] sm:$0xf]
                %433 = vst [vmem:[%s181 + $0x1f4] sm:$0xf] %v432
                %v434 = vld [vmem:[%s180 + $0x3f0] sm:$0xf]
                %435 = vst [vmem:[%s181 + $0x1f8] sm:$0xf] %v434
                %v436 = vld [vmem:[%s180 + $0x3f8] sm:$0xf]
                %437 = vst [vmem:[%s181 + $0x1fc] sm:$0xf] %v436
                %v438 = vld [vmem:[%s180 + $0x400] sm:$0xf]
                %439 = vst [vmem:[%s181 + $0x200] sm:$0xf] %v438
                %v440 = vld [vmem:[%s180 + $0x408] sm:$0xf]
                %441 = vst [vmem:[%s181 + $0x204] sm:$0xf] %v440
                %v442 = vld [vmem:[%s180 + $0x410] sm:$0xf]
                %443 = vst [vmem:[%s181 + $0x208] sm:$0xf] %v442
                %v444 = vld [vmem:[%s180 + $0x418] sm:$0xf]
                %445 = vst [vmem:[%s181 + $0x20c] sm:$0xf] %v444
                %v446 = vld [vmem:[%s180 + $0x420] sm:$0xf]
                %447 = vst [vmem:[%s181 + $0x210] sm:$0xf] %v446
                %v448 = vld [vmem:[%s180 + $0x428] sm:$0xf]
                %449 = vst [vmem:[%s181 + $0x214] sm:$0xf] %v448
                %v450 = vld [vmem:[%s180 + $0x430] sm:$0xf]
                %451 = vst [vmem:[%s181 + $0x218] sm:$0xf] %v450
                %v452 = vld [vmem:[%s180 + $0x438] sm:$0xf]
                %453 = vst [vmem:[%s181 + $0x21c] sm:$0xf] %v452
                %v454 = vld [vmem:[%s180 + $0x440] sm:$0xf]
                %455 = vst [vmem:[%s181 + $0x220] sm:$0xf] %v454
                %v456 = vld [vmem:[%s180 + $0x448] sm:$0xf]
                %457 = vst [vmem:[%s181 + $0x224] sm:$0xf] %v456
                %v458 = vld [vmem:[%s180 + $0x450] sm:$0xf]
                %459 = vst [vmem:[%s181 + $0x228] sm:$0xf] %v458
                %v460 = vld [vmem:[%s180 + $0x458] sm:$0xf]
                %461 = vst [vmem:[%s181 + $0x22c] sm:$0xf] %v460
                %v462 = vld [vmem:[%s180 + $0x460] sm:$0xf]
                %463 = vst [vmem:[%s181 + $0x230] sm:$0xf] %v462
                %v464 = vld [vmem:[%s180 + $0x468] sm:$0xf]
                %465 = vst [vmem:[%s181 + $0x234] sm:$0xf] %v464
                %v466 = vld [vmem:[%s180 + $0x470] sm:$0xf]
                %467 = vst [vmem:[%s181 + $0x238] sm:$0xf] %v466
                %v468 = vld [vmem:[%s180 + $0x478] sm:$0xf]
                %469 = vst [vmem:[%s181 + $0x23c] sm:$0xf] %v468
              $region41: #{encoder_forward.7} parent=35 // loop_footer
                %s179 = sadd.s32 1, %s175
              $region42: #{encoder_forward.7} parent=35 // loop_footer_branch
                %174 = sbr.rel target = $region38
              $region43: #{encoder_forward.7} parent=35 // loop_exit
                _
            $region36: #{encoder_forward.7} parent=27 // pred_fallthru
              _
          $region28: #{encoder_forward.7} parent=23 // pred_fallthru
            _
          %777 = vnop
        $region24: #{encoder_forward.7} parent=19 // pred_fallthru
          _
        // Predicated region
        $region62: #{encoder_forward.7} parent=19 // pred_check
          %p778 = pneg %p95
        $region63: #{encoder_forward.7} parent=19 // pred_check_branch
          %780 = sbr.rel (%p778) target = $region65
        $region64: #{encoder_forward.7} parent=19 // pred_region
          %p781 = scmp.lt.s32.totalorder %s16, 1
          %s782 = scalar_select %p781, %s16, 1
          %s783 = scalar_lea.vmem %s2, %s782
        $region65: #{encoder_forward.7} parent=19 // pred_fallthru
          _
      $region20: #{encoder_forward.7} parent=5 // pred_fallthru
        _
      %p784 = scmp.le.s32.totalorder 1, %s9
      %p785 = scmp.lt.s32.totalorder %s9, 3
      %p786 = pnand %p784, %p785
      %p787 = pneg %p786
      // Predicated region
      $region66: #{encoder_forward.7} parent=5 // pred_check
        _
      $region67: #{encoder_forward.7} parent=5 // pred_check_branch
        %789 = sbr.rel (%p786) target = $region69
      $region68: #{encoder_forward.7} parent=5 // pred_region
        %s790 = ssub.s32 %s9, 1
        %s791 = sand.u32 %s62, 1
        %s792 = sand.u32 %s62, 1
        %s793 = smul.addr %s792, 576
        %s794 = scalar_lea.vmem [#allocation3], %s793
        // Predicated region
        $region70: #{encoder_forward.7} parent=68 // pred_check
          %p795 = pneg %p75
        $region71: #{encoder_forward.7} parent=68 // pred_check_branch
          %797 = sbr.rel (%p795) target = $region73
        $region72: #{encoder_forward.7} parent=68 // pred_region
          _
        $region73: #{encoder_forward.7} parent=68 // pred_fallthru
          _
        %s798 = smul.u32 9, %s19
        %p799 = scmp.lt.s32.totalorder %s798, 8
        %s800 = scalar_select %p799, %s798, 8
        %s801 = smul.addr %s800, 4
        %s802 = scalar_lea.vmem %s0, %s801
        %p803 = pneg %p47
        %p804 = pneg %p44
        %s805 = sand.u32 %s62, 1
        %s806 = sand.u32 %s62, 1
        %s807 = smul.addr %s806, 576
        %s808 = scalar_lea.vmem [#allocation3], %s807
        %p809 = pneg %p75
        %p810 = pneg %p72
        %p811 = scmp.lt.s32.totalorder %s18, 1
        %s812 = scalar_select %p811, %s18, 1
        %s813 = scalar_lea.vmem %s2, %s812
        %p814 = pneg %p101
        %p815 = pneg %p98
        %p816 = pneg %p127
        %p817 = pneg %p124
        %s818 = sand.u32 %s114, 1
        %s819 = sand.u32 %s114, 1
        %s820 = smul.addr %s819, 16
        %s821 = scalar_lea.vmem [#allocation4], %s820
        %s822 = smul.u32 9, %s19
        %p823 = scmp.lt.s32.totalorder %s822, 8
        %s824 = scalar_select %p823, %s822, 8
        %s825 = smul.addr %s824, 4
        %s826 = scalar_lea.vmem %s0, %s825
        %s827 = smul.u32 9, %s19
        %s828 = smul.u32 144, %s19
        %p829 = scmp.lt.s32.totalorder %s18, 1
        %s830 = scalar_select %p829, %s18, 1
        %s831 = scalar_lea.vmem %s2, %s830
        %p833 = scmp.eq.s32.totalorder %s19, 0
        // Predicated region
        $region74: #{encoder_forward.7} parent=68 // pred_check
          %p834 = pneg %p833
        $region75: #{encoder_forward.7} parent=68 // pred_check_branch
          %836 = sbr.rel (%p834) target = $region77
        $region76: #{encoder_forward.7} parent=68 // pred_region
          %837 = vst [vmem:[#allocation2] sm:$0xff] 0.0
          %838 = vst [vmem:[#allocation2 + $0x8] sm:$0xff] 0.0
        $region77: #{encoder_forward.7} parent=68 // pred_fallthru
          _
        %v839 = vld [vmem:[#allocation2] sm:$0xff]
        %v840 = vld [vmem:[#allocation2 + $0x8] sm:$0xff]
        %v841 = vld [vmem:[%s826] sm:$0xff]
        %v842 = vld [vmem:[%s826 + $0x8] sm:$0xff]
        %v843 = vld [vmem:[%s826 + $0x10] sm:$0xff]
        %v844 = vld [vmem:[%s826 + $0x18] sm:$0xff]
        %v845 = vld [vmem:[%s826 + $0x20] sm:$0xf]
        %v846 = vld [vmem:[%s826 + $0x24] sm:$0xff]
        %v847 = vld [vmem:[%s826 + $0x2c] sm:$0xff]
        %v848 = vld [vmem:[%s826 + $0x34] sm:$0xff]
        %v849 = vld [vmem:[%s826 + $0x3c] sm:$0xff]
        %v850 = vld [vmem:[%s826 + $0x44] sm:$0xf]
        %v851 = vld [vmem:[%s794] sm:$0xf]
        %v852 = vld [vmem:[%s794 + $0x4] sm:$0xf]
        %v853 = vld [vmem:[%s794 + $0x8] sm:$0xf]
        %v854 = vld [vmem:[%s794 + $0xc] sm:$0xf]
        %v855 = vld [vmem:[%s794 + $0x10] sm:$0xf]
        %v856 = vld [vmem:[%s794 + $0x14] sm:$0xf]
        %v857 = vld [vmem:[%s794 + $0x18] sm:$0xf]
        %v858 = vld [vmem:[%s794 + $0x1c] sm:$0xf]
        %v859 = vld [vmem:[%s794 + $0x20] sm:$0xf]
        %v860 = vld [vmem:[%s794 + $0x24] sm:$0xf]
        %v861 = vld [vmem:[%s794 + $0x28] sm:$0xf]
        %v862 = vld [vmem:[%s794 + $0x2c] sm:$0xf]
        %v863 = vld [vmem:[%s794 + $0x30] sm:$0xf]
        %v864 = vld [vmem:[%s794 + $0x34] sm:$0xf]
        %v865 = vld [vmem:[%s794 + $0x38] sm:$0xf]
        %v866 = vld [vmem:[%s794 + $0x3c] sm:$0xf]
        %v867 = vld [vmem:[%s794 + $0x40] sm:$0xf]
        %v868 = vld [vmem:[%s794 + $0x44] sm:$0xf]
        %v869 = vld [vmem:[%s794 + $0x48] sm:$0xf]
        %v870 = vld [vmem:[%s794 + $0x4c] sm:$0xf]
        %v871 = vld [vmem:[%s794 + $0x50] sm:$0xf]
        %v872 = vld [vmem:[%s794 + $0x54] sm:$0xf]
        %v873 = vld [vmem:[%s794 + $0x58] sm:$0xf]
        %v874 = vld [vmem:[%s794 + $0x5c] sm:$0xf]
        %v875 = vld [vmem:[%s794 + $0x60] sm:$0xf]
        %v876 = vld [vmem:[%s794 + $0x64] sm:$0xf]
        %v877 = vld [vmem:[%s794 + $0x68] sm:$0xf]
        %v878 = vld [vmem:[%s794 + $0x6c] sm:$0xf]
        %v879 = vld [vmem:[%s794 + $0x70] sm:$0xf]
        %v880 = vld [vmem:[%s794 + $0x74] sm:$0xf]
        %v881 = vld [vmem:[%s794 + $0x78] sm:$0xf]
        %v882 = vld [vmem:[%s794 + $0x7c] sm:$0xf]
        %v883 = vld [vmem:[%s794 + $0x80] sm:$0xf]
        %v884 = vld [vmem:[%s794 + $0x84] sm:$0xf]
        %v885 = vld [vmem:[%s794 + $0x88] sm:$0xf]
        %v886 = vld [vmem:[%s794 + $0x8c] sm:$0xf]
        %v887 = vld [vmem:[%s794 + $0x90] sm:$0xf]
        %v888 = vld [vmem:[%s794 + $0x94] sm:$0xf]
        %v889 = vld [vmem:[%s794 + $0x98] sm:$0xf]
        %v890 = vld [vmem:[%s794 + $0x9c] sm:$0xf]
        %v891 = vld [vmem:[%s794 + $0xa0] sm:$0xf]
        %v892 = vld [vmem:[%s794 + $0xa4] sm:$0xf]
        %v893 = vld [vmem:[%s794 + $0xa8] sm:$0xf]
        %v894 = vld [vmem:[%s794 + $0xac] sm:$0xf]
        %v895 = vld [vmem:[%s794 + $0xb0] sm:$0xf]
        %v896 = vld [vmem:[%s794 + $0xb4] sm:$0xf]
        %v897 = vld [vmem:[%s794 + $0xb8] sm:$0xf]
        %v898 = vld [vmem:[%s794 + $0xbc] sm:$0xf]
        %v899 = vld [vmem:[%s794 + $0xc0] sm:$0xf]
        %v900 = vld [vmem:[%s794 + $0xc4] sm:$0xf]
        %v901 = vld [vmem:[%s794 + $0xc8] sm:$0xf]
        %v902 = vld [vmem:[%s794 + $0xcc] sm:$0xf]
        %v903 = vld [vmem:[%s794 + $0xd0] sm:$0xf]
        %v904 = vld [vmem:[%s794 + $0xd4] sm:$0xf]
        %v905 = vld [vmem:[%s794 + $0xd8] sm:$0xf]
        %v906 = vld [vmem:[%s794 + $0xdc] sm:$0xf]
        %v907 = vld [vmem:[%s794 + $0xe0] sm:$0xf]
        %v908 = vld [vmem:[%s794 + $0xe4] sm:$0xf]
        %v909 = vld [vmem:[%s794 + $0xe8] sm:$0xf]
        %v910 = vld [vmem:[%s794 + $0xec] sm:$0xf]
        %v911 = vld [vmem:[%s794 + $0xf0] sm:$0xf]
        %v912 = vld [vmem:[%s794 + $0xf4] sm:$0xf]
        %v913 = vld [vmem:[%s794 + $0xf8] sm:$0xf]
        %v914 = vld [vmem:[%s794 + $0xfc] sm:$0xf]
        %v915 = vld [vmem:[%s794 + $0x100] sm:$0xf]
        %v916 = vld [vmem:[%s794 + $0x104] sm:$0xf]
        %v917 = vld [vmem:[%s794 + $0x108] sm:$0xf]
        %v918 = vld [vmem:[%s794 + $0x10c] sm:$0xf]
        %v919 = vld [vmem:[%s794 + $0x110] sm:$0xf]
        %v920 = vld [vmem:[%s794 + $0x114] sm:$0xf]
        %v921 = vld [vmem:[%s794 + $0x118] sm:$0xf]
        %v922 = vld [vmem:[%s794 + $0x11c] sm:$0xf]
        %v923 = vld [vmem:[%s794 + $0x120] sm:$0xf]
        %v924 = vld [vmem:[%s794 + $0x124] sm:$0xf]
        %v925 = vld [vmem:[%s794 + $0x128] sm:$0xf]
        %v926 = vld [vmem:[%s794 + $0x12c] sm:$0xf]
        %v927 = vld [vmem:[%s794 + $0x130] sm:$0xf]
        %v928 = vld [vmem:[%s794 + $0x134] sm:$0xf]
        %v929 = vld [vmem:[%s794 + $0x138] sm:$0xf]
        %v930 = vld [vmem:[%s794 + $0x13c] sm:$0xf]
        %v931 = vld [vmem:[%s794 + $0x140] sm:$0xf]
        %v932 = vld [vmem:[%s794 + $0x144] sm:$0xf]
        %v933 = vld [vmem:[%s794 + $0x148] sm:$0xf]
        %v934 = vld [vmem:[%s794 + $0x14c] sm:$0xf]
        %v935 = vld [vmem:[%s794 + $0x150] sm:$0xf]
        %v936 = vld [vmem:[%s794 + $0x154] sm:$0xf]
        %v937 = vld [vmem:[%s794 + $0x158] sm:$0xf]
        %v938 = vld [vmem:[%s794 + $0x15c] sm:$0xf]
        %v939 = vld [vmem:[%s794 + $0x160] sm:$0xf]
        %v940 = vld [vmem:[%s794 + $0x164] sm:$0xf]
        %v941 = vld [vmem:[%s794 + $0x168] sm:$0xf]
        %v942 = vld [vmem:[%s794 + $0x16c] sm:$0xf]
        %v943 = vld [vmem:[%s794 + $0x170] sm:$0xf]
        %v944 = vld [vmem:[%s794 + $0x174] sm:$0xf]
        %v945 = vld [vmem:[%s794 + $0x178] sm:$0xf]
        %v946 = vld [vmem:[%s794 + $0x17c] sm:$0xf]
        %v947 = vld [vmem:[%s794 + $0x180] sm:$0xf]
        %v948 = vld [vmem:[%s794 + $0x184] sm:$0xf]
        %v949 = vld [vmem:[%s794 + $0x188] sm:$0xf]
        %v950 = vld [vmem:[%s794 + $0x18c] sm:$0xf]
        %v951 = vld [vmem:[%s794 + $0x190] sm:$0xf]
        %v952 = vld [vmem:[%s794 + $0x194] sm:$0xf]
        %v953 = vld [vmem:[%s794 + $0x198] sm:$0xf]
        %v954 = vld [vmem:[%s794 + $0x19c] sm:$0xf]
        %v955 = vld [vmem:[%s794 + $0x1a0] sm:$0xf]
        %v956 = vld [vmem:[%s794 + $0x1a4] sm:$0xf]
        %v957 = vld [vmem:[%s794 + $0x1a8] sm:$0xf]
        %v958 = vld [vmem:[%s794 + $0x1ac] sm:$0xf]
        %v959 = vld [vmem:[%s794 + $0x1b0] sm:$0xf]
        %v960 = vld [vmem:[%s794 + $0x1b4] sm:$0xf]
        %v961 = vld [vmem:[%s794 + $0x1b8] sm:$0xf]
        %v962 = vld [vmem:[%s794 + $0x1bc] sm:$0xf]
        %v963 = vld [vmem:[%s794 + $0x1c0] sm:$0xf]
        %v964 = vld [vmem:[%s794 + $0x1c4] sm:$0xf]
        %v965 = vld [vmem:[%s794 + $0x1c8] sm:$0xf]
        %v966 = vld [vmem:[%s794 + $0x1cc] sm:$0xf]
        %v967 = vld [vmem:[%s794 + $0x1d0] sm:$0xf]
        %v968 = vld [vmem:[%s794 + $0x1d4] sm:$0xf]
        %v969 = vld [vmem:[%s794 + $0x1d8] sm:$0xf]
        %v970 = vld [vmem:[%s794 + $0x1dc] sm:$0xf]
        %v971 = vld [vmem:[%s794 + $0x1e0] sm:$0xf]
        %v972 = vld [vmem:[%s794 + $0x1e4] sm:$0xf]
        %v973 = vld [vmem:[%s794 + $0x1e8] sm:$0xf]
        %v974 = vld [vmem:[%s794 + $0x1ec] sm:$0xf]
        %v975 = vld [vmem:[%s794 + $0x1f0] sm:$0xf]
        %v976 = vld [vmem:[%s794 + $0x1f4] sm:$0xf]
        %v977 = vld [vmem:[%s794 + $0x1f8] sm:$0xf]
        %v978 = vld [vmem:[%s794 + $0x1fc] sm:$0xf]
        %v979 = vld [vmem:[%s794 + $0x200] sm:$0xf]
        %v980 = vld [vmem:[%s794 + $0x204] sm:$0xf]
        %v981 = vld [vmem:[%s794 + $0x208] sm:$0xf]
        %v982 = vld [vmem:[%s794 + $0x20c] sm:$0xf]
        %v983 = vld [vmem:[%s794 + $0x210] sm:$0xf]
        %v984 = vld [vmem:[%s794 + $0x214] sm:$0xf]
        %v985 = vld [vmem:[%s794 + $0x218] sm:$0xf]
        %v986 = vld [vmem:[%s794 + $0x21c] sm:$0xf]
        %v987 = vld [vmem:[%s794 + $0x220] sm:$0xf]
        %v988 = vld [vmem:[%s794 + $0x224] sm:$0xf]
        %v989 = vld [vmem:[%s794 + $0x228] sm:$0xf]
        %v990 = vld [vmem:[%s794 + $0x22c] sm:$0xf]
        %v991 = vld [vmem:[%s794 + $0x230] sm:$0xf]
        %v992 = vld [vmem:[%s794 + $0x234] sm:$0xf]
        %v993 = vld [vmem:[%s794 + $0x238] sm:$0xf]
        %v994 = vld [vmem:[%s794 + $0x23c] sm:$0xf]
        %v1005 = vunpack.c.l.b16 %v841
        %v1006 = vunpack.c.h.b16 %v841
        %v1007 = vunpack.c.l.b16 %v842
        %v1008 = vunpack.c.h.b16 %v842
        %v1009 = vunpack.c.l.b16 %v843
        %v1010 = vunpack.c.h.b16 %v843
        %v1011 = vunpack.c.l.b16 %v844
        %v1012 = vunpack.c.h.b16 %v844
        %v1013 = vunpack.c.l.b16 %v845
        %v1014 = vunpack.c.l.b16 %v846
        %v1015 = vunpack.c.h.b16 %v846
        %v1016 = vunpack.c.l.b16 %v847
        %v1017 = vunpack.c.h.b16 %v847
        %v1018 = vunpack.c.l.b16 %v848
        %v1019 = vunpack.c.h.b16 %v848
        %v1020 = vunpack.c.l.b16 %v849
        %v1021 = vunpack.c.h.b16 %v849
        %v1022 = vunpack.c.l.b16 %v850
        %v1023 = vpack.c.b16 %v1014, %v1005
        %v1024 = vpack.c.b16 %v1015, %v1006
        %v1025 = vpack.c.b16 %v1016, %v1007
        %v1026 = vpack.c.b16 %v1017, %v1008
        %v1027 = vpack.c.b16 %v1018, %v1009
        %v1028 = vpack.c.b16 %v1019, %v1010
        %v1029 = vpack.c.b16 %v1020, %v1011
        %v1030 = vpack.c.b16 %v1021, %v1012
        %v1031 = vpack.c.b16 %v1022, %v1013
        %v1185 = vunpack.c.l.b16 %v851
        %v1186 = vunpack.c.l.b16 %v852
        %v1187 = vunpack.c.l.b16 %v853
        %v1188 = vunpack.c.l.b16 %v854
        %v1189 = vunpack.c.l.b16 %v855
        %v1190 = vunpack.c.l.b16 %v856
        %v1191 = vunpack.c.l.b16 %v857
        %v1192 = vunpack.c.l.b16 %v858
        %v1193 = vunpack.c.l.b16 %v859
        %v1194 = vunpack.c.l.b16 %v860
        %v1195 = vunpack.c.l.b16 %v861
        %v1196 = vunpack.c.l.b16 %v862
        %v1197 = vunpack.c.l.b16 %v863
        %v1198 = vunpack.c.l.b16 %v864
        %v1199 = vunpack.c.l.b16 %v865
        %v1200 = vunpack.c.l.b16 %v866
        %v1201 = vunpack.c.l.b16 %v867
        %v1202 = vunpack.c.l.b16 %v868
        %v1203 = vunpack.c.l.b16 %v869
        %v1204 = vunpack.c.l.b16 %v870
        %v1205 = vunpack.c.l.b16 %v871
        %v1206 = vunpack.c.l.b16 %v872
        %v1207 = vunpack.c.l.b16 %v873
        %v1208 = vunpack.c.l.b16 %v874
        %v1209 = vunpack.c.l.b16 %v875
        %v1210 = vunpack.c.l.b16 %v876
        %v1211 = vunpack.c.l.b16 %v877
        %v1212 = vunpack.c.l.b16 %v878
        %v1213 = vunpack.c.l.b16 %v879
        %v1214 = vunpack.c.l.b16 %v880
        %v1215 = vunpack.c.l.b16 %v881
        %v1216 = vunpack.c.l.b16 %v882
        %v1217 = vunpack.c.l.b16 %v883
        %v1218 = vunpack.c.l.b16 %v884
        %v1219 = vunpack.c.l.b16 %v885
        %v1220 = vunpack.c.l.b16 %v886
        %v1221 = vunpack.c.l.b16 %v887
        %v1222 = vunpack.c.l.b16 %v888
        %v1223 = vunpack.c.l.b16 %v889
        %v1224 = vunpack.c.l.b16 %v890
        %v1225 = vunpack.c.l.b16 %v891
        %v1226 = vunpack.c.l.b16 %v892
        %v1227 = vunpack.c.l.b16 %v893
        %v1228 = vunpack.c.l.b16 %v894
        %v1229 = vunpack.c.l.b16 %v895
        %v1230 = vunpack.c.l.b16 %v896
        %v1231 = vunpack.c.l.b16 %v897
        %v1232 = vunpack.c.l.b16 %v898
        %v1233 = vunpack.c.l.b16 %v899
        %v1234 = vunpack.c.l.b16 %v900
        %v1235 = vunpack.c.l.b16 %v901
        %v1236 = vunpack.c.l.b16 %v902
        %v1237 = vunpack.c.l.b16 %v903
        %v1238 = vunpack.c.l.b16 %v904
        %v1239 = vunpack.c.l.b16 %v905
        %v1240 = vunpack.c.l.b16 %v906
        %v1241 = vunpack.c.l.b16 %v907
        %v1242 = vunpack.c.l.b16 %v908
        %v1243 = vunpack.c.l.b16 %v909
        %v1244 = vunpack.c.l.b16 %v910
        %v1245 = vunpack.c.l.b16 %v911
        %v1246 = vunpack.c.l.b16 %v912
        %v1247 = vunpack.c.l.b16 %v913
        %v1248 = vunpack.c.l.b16 %v914
        %v1249 = vunpack.c.l.b16 %v915
        %v1250 = vunpack.c.l.b16 %v916
        %v1251 = vunpack.c.l.b16 %v917
        %v1252 = vunpack.c.l.b16 %v918
        %v1253 = vunpack.c.l.b16 %v919
        %v1254 = vunpack.c.l.b16 %v920
        %v1255 = vunpack.c.l.b16 %v921
        %v1256 = vunpack.c.l.b16 %v922
        %v1257 = vunpack.c.l.b16 %v923
        %v1258 = vunpack.c.l.b16 %v924
        %v1259 = vunpack.c.l.b16 %v925
        %v1260 = vunpack.c.l.b16 %v926
        %v1261 = vunpack.c.l.b16 %v927
        %v1262 = vunpack.c.l.b16 %v928
        %v1263 = vunpack.c.l.b16 %v929
        %v1264 = vunpack.c.l.b16 %v930
        %v1265 = vunpack.c.l.b16 %v931
        %v1266 = vunpack.c.l.b16 %v932
        %v1267 = vunpack.c.l.b16 %v933
        %v1268 = vunpack.c.l.b16 %v934
        %v1269 = vunpack.c.l.b16 %v935
        %v1270 = vunpack.c.l.b16 %v936
        %v1271 = vunpack.c.l.b16 %v937
        %v1272 = vunpack.c.l.b16 %v938
        %v1273 = vunpack.c.l.b16 %v939
        %v1274 = vunpack.c.l.b16 %v940
        %v1275 = vunpack.c.l.b16 %v941
        %v1276 = vunpack.c.l.b16 %v942
        %v1277 = vunpack.c.l.b16 %v943
        %v1278 = vunpack.c.l.b16 %v944
        %v1279 = vunpack.c.l.b16 %v945
        %v1280 = vunpack.c.l.b16 %v946
        %v1281 = vunpack.c.l.b16 %v947
        %v1282 = vunpack.c.l.b16 %v948
        %v1283 = vunpack.c.l.b16 %v949
        %v1284 = vunpack.c.l.b16 %v950
        %v1285 = vunpack.c.l.b16 %v951
        %v1286 = vunpack.c.l.b16 %v952
        %v1287 = vunpack.c.l.b16 %v953
        %v1288 = vunpack.c.l.b16 %v954
        %v1289 = vunpack.c.l.b16 %v955
        %v1290 = vunpack.c.l.b16 %v956
        %v1291 = vunpack.c.l.b16 %v957
        %v1292 = vunpack.c.l.b16 %v958
        %v1293 = vunpack.c.l.b16 %v959
        %v1294 = vunpack.c.l.b16 %v960
        %v1295 = vunpack.c.l.b16 %v961
        %v1296 = vunpack.c.l.b16 %v962
        %v1297 = vunpack.c.l.b16 %v963
        %v1298 = vunpack.c.l.b16 %v964
        %v1299 = vunpack.c.l.b16 %v965
        %v1300 = vunpack.c.l.b16 %v966
        %v1301 = vunpack.c.l.b16 %v967
        %v1302 = vunpack.c.l.b16 %v968
        %v1303 = vunpack.c.l.b16 %v969
        %v1304 = vunpack.c.l.b16 %v970
        %v1305 = vunpack.c.l.b16 %v971
        %v1306 = vunpack.c.l.b16 %v972
        %v1307 = vunpack.c.l.b16 %v973
        %v1308 = vunpack.c.l.b16 %v974
        %v1309 = vunpack.c.l.b16 %v975
        %v1310 = vunpack.c.l.b16 %v976
        %v1311 = vunpack.c.l.b16 %v977
        %v1312 = vunpack.c.l.b16 %v978
        %v1313 = vunpack.c.l.b16 %v979
        %v1314 = vunpack.c.l.b16 %v980
        %v1315 = vunpack.c.l.b16 %v981
        %v1316 = vunpack.c.l.b16 %v982
        %v1317 = vunpack.c.l.b16 %v983
        %v1318 = vunpack.c.l.b16 %v984
        %v1319 = vunpack.c.l.b16 %v985
        %v1320 = vunpack.c.l.b16 %v986
        %v1321 = vunpack.c.l.b16 %v987
        %v1322 = vunpack.c.l.b16 %v988
        %v1323 = vunpack.c.l.b16 %v989
        %v1324 = vunpack.c.l.b16 %v990
        %v1325 = vunpack.c.l.b16 %v991
        %v1326 = vunpack.c.l.b16 %v992
        %v1327 = vunpack.c.l.b16 %v993
        %v1328 = vunpack.c.l.b16 %v994
        %v1329 = vpack.c.b16 %v1186, %v1185
        %v1330 = vpack.c.b16 %v1188, %v1187
        %v1331 = vpack.c.b16 %v1190, %v1189
        %v1332 = vpack.c.b16 %v1192, %v1191
        %v1333 = vpack.c.b16 %v1194, %v1193
        %v1334 = vpack.c.b16 %v1196, %v1195
        %v1335 = vpack.c.b16 %v1198, %v1197
        %v1336 = vpack.c.b16 %v1200, %v1199
        %v1337 = vpack.c.b16 %v1202, %v1201
        %v1338 = vpack.c.b16 %v1204, %v1203
        %v1339 = vpack.c.b16 %v1206, %v1205
        %v1340 = vpack.c.b16 %v1208, %v1207
        %v1341 = vpack.c.b16 %v1210, %v1209
        %v1342 = vpack.c.b16 %v1212, %v1211
        %v1343 = vpack.c.b16 %v1214, %v1213
        %v1344 = vpack.c.b16 %v1216, %v1215
        %v1345 = vpack.c.b16 %v1218, %v1217
        %v1346 = vpack.c.b16 %v1220, %v1219
        %v1347 = vpack.c.b16 %v1222, %v1221
        %v1348 = vpack.c.b16 %v1224, %v1223
        %v1349 = vpack.c.b16 %v1226, %v1225
        %v1350 = vpack.c.b16 %v1228, %v1227
        %v1351 = vpack.c.b16 %v1230, %v1229
        %v1352 = vpack.c.b16 %v1232, %v1231
        %v1353 = vpack.c.b16 %v1234, %v1233
        %v1354 = vpack.c.b16 %v1236, %v1235
        %v1355 = vpack.c.b16 %v1238, %v1237
        %v1356 = vpack.c.b16 %v1240, %v1239
        %v1357 = vpack.c.b16 %v1242, %v1241
        %v1358 = vpack.c.b16 %v1244, %v1243
        %v1359 = vpack.c.b16 %v1246, %v1245
        %v1360 = vpack.c.b16 %v1248, %v1247
        %v1361 = vpack.c.b16 %v1250, %v1249
        %v1362 = vpack.c.b16 %v1252, %v1251
        %v1363 = vpack.c.b16 %v1254, %v1253
        %v1364 = vpack.c.b16 %v1256, %v1255
        %v1365 = vpack.c.b16 %v1258, %v1257
        %v1366 = vpack.c.b16 %v1260, %v1259
        %v1367 = vpack.c.b16 %v1262, %v1261
        %v1368 = vpack.c.b16 %v1264, %v1263
        %v1369 = vpack.c.b16 %v1266, %v1265
        %v1370 = vpack.c.b16 %v1268, %v1267
        %v1371 = vpack.c.b16 %v1270, %v1269
        %v1372 = vpack.c.b16 %v1272, %v1271
        %v1373 = vpack.c.b16 %v1274, %v1273
        %v1374 = vpack.c.b16 %v1276, %v1275
        %v1375 = vpack.c.b16 %v1278, %v1277
        %v1376 = vpack.c.b16 %v1280, %v1279
        %v1377 = vpack.c.b16 %v1282, %v1281
        %v1378 = vpack.c.b16 %v1284, %v1283
        %v1379 = vpack.c.b16 %v1286, %v1285
        %v1380 = vpack.c.b16 %v1288, %v1287
        %v1381 = vpack.c.b16 %v1290, %v1289
        %v1382 = vpack.c.b16 %v1292, %v1291
        %v1383 = vpack.c.b16 %v1294, %v1293
        %v1384 = vpack.c.b16 %v1296, %v1295
        %v1385 = vpack.c.b16 %v1298, %v1297
        %v1386 = vpack.c.b16 %v1300, %v1299
        %v1387 = vpack.c.b16 %v1302, %v1301
        %v1388 = vpack.c.b16 %v1304, %v1303
        %v1389 = vpack.c.b16 %v1306, %v1305
        %v1390 = vpack.c.b16 %v1308, %v1307
        %v1391 = vpack.c.b16 %v1310, %v1309
        %v1392 = vpack.c.b16 %v1312, %v1311
        %v1393 = vpack.c.b16 %v1314, %v1313
        %v1394 = vpack.c.b16 %v1316, %v1315
        %v1395 = vpack.c.b16 %v1318, %v1317
        %v1396 = vpack.c.b16 %v1320, %v1319
        %v1397 = vpack.c.b16 %v1322, %v1321
        %v1398 = vpack.c.b16 %v1324, %v1323
        %v1399 = vpack.c.b16 %v1326, %v1325
        %v1400 = vpack.c.b16 %v1328, %v1327
        %1473 = vmatprep.subr.bf16.mxu0 0
        %1474 = vmatpush1.bf16.msra.mxu0 %v1329
        %1475 = vmatprep.subr.bf16.mxu0 0
        %1476 = vmatpush1.bf16.msra.mxu0 %v1330
        %1477 = vmatprep.subr.bf16.mxu0 0
        %1478 = vmatpush1.bf16.msra.mxu0 %v1331
        %1479 = vmatprep.subr.bf16.mxu0 0
        %1480 = vmatpush1.bf16.msra.mxu0 %v1332
        %1481 = vmatprep.subr.bf16.mxu0 0
        %1482 = vmatpush1.bf16.msra.mxu0 %v1333
        %1483 = vmatprep.subr.bf16.mxu0 0
        %1484 = vmatpush1.bf16.msra.mxu0 %v1334
        %1485 = vmatprep.subr.bf16.mxu0 0
        %1486 = vmatpush1.bf16.msra.mxu0 %v1335
        %1487 = vmatprep.subr.bf16.mxu0 0
        %1488 = vmatpush1.bf16.msra.mxu0 %v1336
        %1489 = vmatprep.subr.bf16.mxu0 0
        %1490 = vmatpush1.bf16.msra.mxu0 %v1337
        %1491 = vmatprep.subr.bf16.mxu0 0
        %1492 = vmatpush1.bf16.msra.mxu0 %v1338
        %1493 = vmatprep.subr.bf16.mxu0 0
        %1494 = vmatpush1.bf16.msra.mxu0 %v1339
        %1495 = vmatprep.subr.bf16.mxu0 0
        %1496 = vmatpush1.bf16.msra.mxu0 %v1340
        %1497 = vmatprep.subr.bf16.mxu0 0
        %1498 = vmatpush1.bf16.msra.mxu0 %v1341
        %1499 = vmatprep.subr.bf16.mxu0 0
        %1500 = vmatpush1.bf16.msra.mxu0 %v1342
        %1501 = vmatprep.subr.bf16.mxu0 0
        %1502 = vmatpush1.bf16.msra.mxu0 %v1343
        %1503 = vmatprep.subr.bf16.mxu0 0
        %1504 = vmatpush1.bf16.msra.mxu0 %v1344
        %1505 = vmatprep.mubr.bf16.mxu0 %v1024
        %1506 = vmatmul.mubr.bf16.gmra.mrb[0].mxu0 %v1023
        %v1507 = vpop.f32.mrb[0].mxu0
        %v1508 = vadd.f32 0.0, %v1507
        %v1509 = vpop.f32.mrb[0].mxu0
        %v1510 = vpop.f32.mrb[0].mxu0
        %v1511 = vadd.f32 0.0, %v1510
        %v1512 = vpop.f32.mrb[0].mxu0
        %1513 = vdwg.mxu0
        %1514 = vmatprep.subr.bf16.mxu0 0
        %1515 = vmatpush1.bf16.msra.mxu0 %v1345
        %1516 = vmatprep.subr.bf16.mxu0 0
        %1517 = vmatpush1.bf16.msra.mxu0 %v1346
        %1518 = vmatprep.subr.bf16.mxu0 0
        %1519 = vmatpush1.bf16.msra.mxu0 %v1347
        %1520 = vmatprep.subr.bf16.mxu0 0
        %1521 = vmatpush1.bf16.msra.mxu0 %v1348
        %1522 = vmatprep.subr.bf16.mxu0 0
        %1523 = vmatpush1.bf16.msra.mxu0 %v1349
        %1524 = vmatprep.subr.bf16.mxu0 0
        %1525 = vmatpush1.bf16.msra.mxu0 %v1350
        %1526 = vmatprep.subr.bf16.mxu0 0
        %1527 = vmatpush1.bf16.msra.mxu0 %v1351
        %1528 = vmatprep.subr.bf16.mxu0 0
        %1529 = vmatpush1.bf16.msra.mxu0 %v1352
        %1530 = vmatprep.subr.bf16.mxu0 0
        %1531 = vmatpush1.bf16.msra.mxu0 %v1353
        %1532 = vmatprep.subr.bf16.mxu0 0
        %1533 = vmatpush1.bf16.msra.mxu0 %v1354
        %1534 = vmatprep.subr.bf16.mxu0 0
        %1535 = vmatpush1.bf16.msra.mxu0 %v1355
        %1536 = vmatprep.subr.bf16.mxu0 0
        %1537 = vmatpush1.bf16.msra.mxu0 %v1356
        %1538 = vmatprep.subr.bf16.mxu0 0
        %1539 = vmatpush1.bf16.msra.mxu0 %v1357
        %1540 = vmatprep.subr.bf16.mxu0 0
        %1541 = vmatpush1.bf16.msra.mxu0 %v1358
        %1542 = vmatprep.subr.bf16.mxu0 0
        %1543 = vmatpush1.bf16.msra.mxu0 %v1359
        %1544 = vmatprep.subr.bf16.mxu0 0
        %1545 = vmatpush1.bf16.msra.mxu0 %v1360
        %1546 = vmatprep.mubr.bf16.mxu0 %v1026
        %1547 = vmatmul.mubr.bf16.gmra.mrb[0].mxu0 %v1025
        %v1548 = vpop.f32.mrb[0].mxu0
        %v1549 = vadd.f32 %v1508, %v1548
        %v1550 = vpop.f32.mrb[0].mxu0
        %v1551 = vpop.f32.mrb[0].mxu0
        %v1552 = vadd.f32 %v1511, %v1551
        %v1553 = vpop.f32.mrb[0].mxu0
        %1554 = vdwg.mxu0
        %1555 = vmatprep.subr.bf16.mxu0 0
        %1556 = vmatpush1.bf16.msra.mxu0 %v1361
        %1557 = vmatprep.subr.bf16.mxu0 0
        %1558 = vmatpush1.bf16.msra.mxu0 %v1362
        %1559 = vmatprep.subr.bf16.mxu0 0
        %1560 = vmatpush1.bf16.msra.mxu0 %v1363
        %1561 = vmatprep.subr.bf16.mxu0 0
        %1562 = vmatpush1.bf16.msra.mxu0 %v1364
        %1563 = vmatprep.subr.bf16.mxu0 0
        %1564 = vmatpush1.bf16.msra.mxu0 %v1365
        %1565 = vmatprep.subr.bf16.mxu0 0
        %1566 = vmatpush1.bf16.msra.mxu0 %v1366
        %1567 = vmatprep.subr.bf16.mxu0 0
        %1568 = vmatpush1.bf16.msra.mxu0 %v1367
        %1569 = vmatprep.subr.bf16.mxu0 0
        %1570 = vmatpush1.bf16.msra.mxu0 %v1368
        %1571 = vmatprep.subr.bf16.mxu0 0
        %1572 = vmatpush1.bf16.msra.mxu0 %v1369
        %1573 = vmatprep.subr.bf16.mxu0 0
        %1574 = vmatpush1.bf16.msra.mxu0 %v1370
        %1575 = vmatprep.subr.bf16.mxu0 0
        %1576 = vmatpush1.bf16.msra.mxu0 %v1371
        %1577 = vmatprep.subr.bf16.mxu0 0
        %1578 = vmatpush1.bf16.msra.mxu0 %v1372
        %1579 = vmatprep.subr.bf16.mxu0 0
        %1580 = vmatpush1.bf16.msra.mxu0 %v1373
        %1581 = vmatprep.subr.bf16.mxu0 0
        %1582 = vmatpush1.bf16.msra.mxu0 %v1374
        %1583 = vmatprep.subr.bf16.mxu0 0
        %1584 = vmatpush1.bf16.msra.mxu0 %v1375
        %1585 = vmatprep.subr.bf16.mxu0 0
        %1586 = vmatpush1.bf16.msra.mxu0 %v1376
        %1587 = vmatprep.mubr.bf16.mxu0 %v1028
        %1588 = vmatmul.mubr.bf16.gmra.mrb[0].mxu0 %v1027
        %v1589 = vpop.f32.mrb[0].mxu0
        %v1590 = vadd.f32 %v1549, %v1589
        %v1591 = vpop.f32.mrb[0].mxu0
        %v1592 = vpop.f32.mrb[0].mxu0
        %v1593 = vadd.f32 %v1552, %v1592
        %v1594 = vpop.f32.mrb[0].mxu0
        %1595 = vdwg.mxu0
        %1596 = vmatprep.subr.bf16.mxu0 0
        %1597 = vmatpush1.bf16.msra.mxu0 %v1377
        %1598 = vmatprep.subr.bf16.mxu0 0
        %1599 = vmatpush1.bf16.msra.mxu0 %v1378
        %1600 = vmatprep.subr.bf16.mxu0 0
        %1601 = vmatpush1.bf16.msra.mxu0 %v1379
        %1602 = vmatprep.subr.bf16.mxu0 0
        %1603 = vmatpush1.bf16.msra.mxu0 %v1380
        %1604 = vmatprep.subr.bf16.mxu0 0
        %1605 = vmatpush1.bf16.msra.mxu0 %v1381
        %1606 = vmatprep.subr.bf16.mxu0 0
        %1607 = vmatpush1.bf16.msra.mxu0 %v1382
        %1608 = vmatprep.subr.bf16.mxu0 0
        %1609 = vmatpush1.bf16.msra.mxu0 %v1383
        %1610 = vmatprep.subr.bf16.mxu0 0
        %1611 = vmatpush1.bf16.msra.mxu0 %v1384
        %1612 = vmatprep.subr.bf16.mxu0 0
        %1613 = vmatpush1.bf16.msra.mxu0 %v1385
        %1614 = vmatprep.subr.bf16.mxu0 0
        %1615 = vmatpush1.bf16.msra.mxu0 %v1386
        %1616 = vmatprep.subr.bf16.mxu0 0
        %1617 = vmatpush1.bf16.msra.mxu0 %v1387
        %1618 = vmatprep.subr.bf16.mxu0 0
        %1619 = vmatpush1.bf16.msra.mxu0 %v1388
        %1620 = vmatprep.subr.bf16.mxu0 0
        %1621 = vmatpush1.bf16.msra.mxu0 %v1389
        %1622 = vmatprep.subr.bf16.mxu0 0
        %1623 = vmatpush1.bf16.msra.mxu0 %v1390
        %1624 = vmatprep.subr.bf16.mxu0 0
        %1625 = vmatpush1.bf16.msra.mxu0 %v1391
        %1626 = vmatprep.subr.bf16.mxu0 0
        %1627 = vmatpush1.bf16.msra.mxu0 %v1392
        %1628 = vmatprep.mubr.bf16.mxu0 %v1030
        %1629 = vmatmul.mubr.bf16.gmra.mrb[0].mxu0 %v1029
        %v1630 = vpop.f32.mrb[0].mxu0
        %v1631 = vadd.f32 %v1590, %v1630
        %v1632 = vpop.f32.mrb[0].mxu0
        %v1633 = vpop.f32.mrb[0].mxu0
        %v1634 = vadd.f32 %v1593, %v1633
        %v1635 = vpop.f32.mrb[0].mxu0
        %1636 = vdwg.mxu0
        %1637 = vmatprep.subr.bf16.mxu0 0
        %1638 = vmatpush1.bf16.msra.mxu0 %v1393
        %1639 = vmatprep.subr.bf16.mxu0 0
        %1640 = vmatpush1.bf16.msra.mxu0 %v1394
        %1641 = vmatprep.subr.bf16.mxu0 0
        %1642 = vmatpush1.bf16.msra.mxu0 %v1395
        %1643 = vmatprep.subr.bf16.mxu0 0
        %1644 = vmatpush1.bf16.msra.mxu0 %v1396
        %1645 = vmatprep.subr.bf16.mxu0 0
        %1646 = vmatpush1.bf16.msra.mxu0 %v1397
        %1647 = vmatprep.subr.bf16.mxu0 0
        %1648 = vmatpush1.bf16.msra.mxu0 %v1398
        %1649 = vmatprep.subr.bf16.mxu0 0
        %1650 = vmatpush1.bf16.msra.mxu0 %v1399
        %1651 = vmatprep.subr.bf16.mxu0 0
        %1652 = vmatpush1.bf16.msra.mxu0 %v1400
        %1653 = vmatprep.subr.bf16.mxu0 0
        %1654 = vmatpush1.bf16.msra.mxu0 0
        %1655 = vmatprep.subr.bf16.mxu0 0
        %1656 = vmatpush1.bf16.msra.mxu0 0
        %1657 = vmatprep.subr.bf16.mxu0 0
        %1658 = vmatpush1.bf16.msra.mxu0 0
        %1659 = vmatprep.subr.bf16.mxu0 0
        %1660 = vmatpush1.bf16.msra.mxu0 0
        %1661 = vmatprep.subr.bf16.mxu0 0
        %1662 = vmatpush1.bf16.msra.mxu0 0
        %1663 = vmatprep.subr.bf16.mxu0 0
        %1664 = vmatpush1.bf16.msra.mxu0 0
        %1665 = vmatprep.subr.bf16.mxu0 0
        %1666 = vmatpush1.bf16.msra.mxu0 0
        %1667 = vmatprep.subr.bf16.mxu0 0
        %1668 = vmatpush1.bf16.msra.mxu0 0
        %1669 = vmatprep.mubr.bf16.mxu0 0
        %1670 = vmatmul.mubr.bf16.gmra.mrb[0].mxu0 %v1031
        %v1671 = vpop.f32.mrb[0].mxu0
        %v1672 = vadd.f32 %v1631, %v1671
        %v1673 = vpop.f32.mrb[0].mxu0
        %v1674 = vpop.f32.mrb[0].mxu0
        %v1675 = vadd.f32 %v1634, %v1674
        %v1676 = vpop.f32.mrb[0].mxu0
        %1677 = vdwg.mxu0
        %v1678 = vadd.f32 %v839, %v1672
        %v1679 = vadd.f32 %v840, %v1675
        %1680 = vst [vmem:[#allocation2] sm:$0xff] %v1678
        %1681 = vst [vmem:[#allocation2 + $0x8] sm:$0xff] %v1679
        %p1682 = scmp.eq.s32.totalorder %s18, 0
        %p1683 = pnand %p833, %p1682
        %p1684 = pneg %p1683
        // Predicated region
        $region78: #{encoder_forward.7} parent=68 // pred_check
          _
        $region79: #{encoder_forward.7} parent=68 // pred_check_branch
          %1686 = sbr.rel (%p1683) target = $region81
        $region80: #{encoder_forward.7} parent=68 // pred_region
          %v1687 = vld [vmem:[#allocation2] sm:$0xff]
          %v1688 = vld [vmem:[#allocation2 + $0x8] sm:$0xff]
          %v1689 = vld [vmem:[%s831] sm:$0x1]
          %v1691 = vlaneseq
          %v1692 = vshrl.u32 %v1691, 7
          %v1693 = vsub.s32 0, %v1692
          %v1694 = vrot.slane %v1689, %v1693
          %v1696 = vadd.f32 %v1687, %v1694
          %v1697 = vadd.f32 %v1688, %v1694
          %1698 = vst [vmem:[%s821] sm:$0xff] %v1696
          %1699 = vst [vmem:[%s821 + $0x8] sm:$0xff] %v1697
        $region81: #{encoder_forward.7} parent=68 // pred_fallthru
          _
        %p1700 = scmp.eq.s32.totalorder %s18, 1
        %p1701 = pnand %p833, %p1700
        %p1702 = pneg %p1701
        // Predicated region
        $region82: #{encoder_forward.7} parent=68 // pred_check
          _
        $region83: #{encoder_forward.7} parent=68 // pred_check_branch
          %1704 = sbr.rel (%p1701) target = $region85
        $region84: #{encoder_forward.7} parent=68 // pred_region
          %v1705 = vld [vmem:[#allocation2] sm:$0xff]
          %v1706 = vld [vmem:[#allocation2 + $0x8] sm:$0xff]
          %v1707 = vld [vmem:[%s831] sm:$0x1]
          %v1709 = vlaneseq
          %v1710 = vshrl.u32 %v1709, 7
          %v1711 = vsub.s32 0, %v1710
          %v1712 = vrot.slane %v1707, %v1711
          %v1714 = vadd.f32 %v1705, %v1712
          %v1715 = vadd.f32 %v1706, %v1712
          %v1716 = vmul.f32 %v1714, 1.442695
          %v1717 = vpow.pop %v1716
          %v1718 = vmul.f32 %v1715, 1.442695
          %v1719 = vpow.pop %v1718
          %1720 = vst [vmem:[%s821] sm:$0xff] %v1717
          %1721 = vst [vmem:[%s821 + $0x8] sm:$0xff] %v1719
        $region85: #{encoder_forward.7} parent=68 // pred_fallthru
          _
        %s1722 = sand.u32 %s114, 1
        %s1723 = sand.u32 %s114, 1
        %s1724 = smul.addr %s1723, 16
        %s1725 = scalar_lea.vmem [#allocation4], %s1724
        // Predicated region
        $region86: #{encoder_forward.7} parent=68 // pred_check
          %p1726 = pneg %p124
        $region87: #{encoder_forward.7} parent=68 // pred_check_branch
          %1728 = sbr.rel (%p1726) target = $region89
        $region88: #{encoder_forward.7} parent=68 // pred_region
          %s1729 = smul.addr %s18, 8
          %s1730 = scalar_lea.vmem %s3, %s1729
          // Predicated region
          $region90: #{encoder_forward.7} parent=88 // pred_check
            _
          $region91: #{encoder_forward.7} parent=88 // pred_check_branch
            %1732 = sbr.rel (0) target = $region93
          $region92: #{encoder_forward.7} parent=88 // pred_region
            // Predicated region
            $region94: #{encoder_forward.7} parent=92 // pred_check
              _
            $region95: #{encoder_forward.7} parent=92 // pred_check_branch
              %1734 = sbr.rel (0) target = $region97
            $region96: #{encoder_forward.7} parent=92 // pred_region
              // Predicated region
              $region109: #{encoder_forward.7} parent=96 // pred_check
                _
              $region110: #{encoder_forward.7} parent=96 // pred_check_branch
                %1751 = sbr.rel (0) target = $region112
              $region111: #{encoder_forward.7} parent=96 // pred_region
                loop: start=0, step=1, limit=1
                $region113: #{encoder_forward.7} parent=111 // loop_pre_header
                  _
                $region114: #{encoder_forward.7} parent=111 // loop_header
                  %s1753 = sphi 0, %s1757
                  %p1754 = scmp.ge.s32.totalorder %s1753, 1
                  %s1758 = sphi %s1725, %s1725
                  %s1759 = sphi %s1730, %s1730
                $region115: #{encoder_forward.7} parent=111 // loop_header_branch
                  %1756 = sbr.rel (%p1754) target = $region119
                $region116: #{encoder_forward.7} parent=111 // loop_body
                  %v1760 = vld [vmem:[%s1758] sm:$0xff]
                  %1761 = vst [vmem:[%s1759] sm:$0xff] %v1760
                  %v1762 = vld [vmem:[%s1758 + $0x8] sm:$0xff]
                  %1763 = vst [vmem:[%s1759 + $0x10] sm:$0xff] %v1762
                $region117: #{encoder_forward.7} parent=111 // loop_footer
                  %s1757 = sadd.s32 1, %s1753
                $region118: #{encoder_forward.7} parent=111 // loop_footer_branch
                  %1752 = sbr.rel target = $region114
                $region119: #{encoder_forward.7} parent=111 // loop_exit
                  _
              $region112: #{encoder_forward.7} parent=96 // pred_fallthru
                _
              // Predicated region
              $region120: #{encoder_forward.7} parent=96 // pred_check
                _
              $region121: #{encoder_forward.7} parent=96 // pred_check_branch
                %1765 = sbr.rel target = $region123
              $region122: #{encoder_forward.7} parent=96 // pred_region
                _
              $region123: #{encoder_forward.7} parent=96 // pred_fallthru
                _
            $region97: #{encoder_forward.7} parent=92 // pred_fallthru
              _
            // Predicated region
            $region98: #{encoder_forward.7} parent=92 // pred_check
              _
            $region99: #{encoder_forward.7} parent=92 // pred_check_branch
              %1736 = sbr.rel target = $region101
            $region100: #{encoder_forward.7} parent=92 // pred_region
              loop: start=0, step=1, limit=1
              $region102: #{encoder_forward.7} parent=100 // loop_pre_header
                _
              $region103: #{encoder_forward.7} parent=100 // loop_header
                %s1739 = sphi 0, %s1743
                %p1740 = scmp.ge.s32.totalorder %s1739, 1
                %s1744 = sphi %s1725, %s1725
                %s1745 = sphi %s1730, %s1730
              $region104: #{encoder_forward.7} parent=100 // loop_header_branch
                %1742 = sbr.rel (%p1740) target = $region108
              $region105: #{encoder_forward.7} parent=100 // loop_body
                %v1746 = vld [vmem:[%s1744] sm:$0xff]
                %1747 = vst [vmem:[%s1745] sm:$0xff] %v1746
                %v1748 = vld [vmem:[%s1744 + $0x8] sm:$0xff]
                %1749 = vst [vmem:[%s1745 + $0x10] sm:$0xff] %v1748
              $region106: #{encoder_forward.7} parent=100 // loop_footer
                %s1743 = sadd.s32 1, %s1739
              $region107: #{encoder_forward.7} parent=100 // loop_footer_branch
                %1738 = sbr.rel target = $region103
              $region108: #{encoder_forward.7} parent=100 // loop_exit
                _
            $region101: #{encoder_forward.7} parent=92 // pred_fallthru
              _
          $region93: #{encoder_forward.7} parent=88 // pred_fallthru
            _
          %1766 = vnop
        $region89: #{encoder_forward.7} parent=68 // pred_fallthru
          _
      $region69: #{encoder_forward.7} parent=5 // pred_fallthru
        _
      %p1767 = scmp.le.s32.totalorder 2, %s9
      // Predicated region
      $region124: #{encoder_forward.7} parent=5 // pred_check
        %p1768 = pneg %p1767
      $region125: #{encoder_forward.7} parent=5 // pred_check_branch
        %1770 = sbr.rel (%p1768) target = $region127
      $region126: #{encoder_forward.7} parent=5 // pred_region
        %s1771 = ssub.s32 %s9, 2
        // Predicated region
        $region128: #{encoder_forward.7} parent=126 // pred_check
          %p1772 = pneg %p130
        $region129: #{encoder_forward.7} parent=126 // pred_check_branch
          %1774 = sbr.rel (%p1772) target = $region131
        $region130: #{encoder_forward.7} parent=126 // pred_region
          %s1775 = sand.u32 %s115, 1
          %s1776 = sand.u32 %s115, 1
          %s1777 = smul.addr %s1776, 16
          %s1778 = scalar_lea.vmem [#allocation4], %s1777
        $region131: #{encoder_forward.7} parent=126 // pred_fallthru
          _
      $region127: #{encoder_forward.7} parent=5 // pred_fallthru
        _
    $region6: #{encoder_forward.7} parent=1 // loop_footer
      %s13 = sadd.s32 1, %s9
    $region7: #{encoder_forward.7} parent=1 // loop_footer_branch
      %8 = sbr.rel target = $region3
    $region8: #{encoder_forward.7} parent=1 // loop_exit
      _

</llo_original>
